<compile_context>
chip_gen: v7x
topology: tpu7x:2x2x1
jax: 0.10.0
libtpu: 0.0.40
codegen_flags: <defaults>
</compile_context>

<pallas_src>
import functools

import numpy as np
import jax
import jax.numpy as jnp
from jax.experimental import pallas as pl
from jax.experimental.pallas import tpu as pltpu

BN_EPS = 1e-5
LANE = 128        # channel axes are zero-padded to a multiple of this
_HALO_OFF = 8     # image interior offset inside the VMEM halo scratch (sublane-aligned)


def _round_up(x, m):
    return (x + m - 1) // m * m


def _vmem_limit_bytes():
    """Generation-dependent scoped-VMEM limit (tight on v7x, generous on v5e/v6e)."""
    cap = 64 * 1024 * 1024
    try:
        info = pltpu.get_tpu_info()
        cap = int(getattr(info, "vmem_capacity_bytes", cap))
    except Exception:
        pass
    return int(min(cap * 3 // 4, 96 * 1024 * 1024))


_VMEM_LIMIT = _vmem_limit_bytes()


# ----------------------------------------------------------------------------
# Pass 1: 3x3 conv as a single big-K MXU matmul (in-VMEM im2col) + per-sample
# partial batch statistics + f32 conv output written once.
# ----------------------------------------------------------------------------
def _conv_stats_kernel(x_ref, w_ref, y_ref, sum_ref, ssq_ref, xpad_s, col_s,
                       *, H, W):
    Cp = x_ref.shape[-1]
    P = _HALO_OFF

    # Build the spatially zero-padded tile in VMEM.  Re-zeroed every grid step
    # so the kernel stays correct when the "parallel" grid axis is sharded
    # across TensorCores (each core owns its own scratch).  The interior is
    # stored at offset (P, P) with P = 8, keeping the store unmasked/aligned.
    xpad_s[...] = jnp.zeros_like(xpad_s)
    xpad_s[P:P + H, P:P + W, :] = x_ref[...]

    # In-VMEM im2col -> (H*W, 9*Cp).  Column stores are lane-aligned (Cp is a
    # multiple of 128); only the shifted halo reads are unaligned.
    tap = 0
    for dy in range(3):
        for dx in range(3):
            col_s[:, tap * Cp:(tap + 1) * Cp] = (
                xpad_s[P - 1 + dy:P - 1 + dy + H,
                       P - 1 + dx:P - 1 + dx + W, :].reshape(H * W, Cp))
            tap += 1

    # One big-K MXU matmul: (H*W, 9*Cp) @ (9*Cp, Coutp) -> f32.
    acc = jnp.dot(col_s[...], w_ref[...], preferred_element_type=jnp.float32)

    y_ref[...] = acc.reshape(H, W, y_ref.shape[-1])
    # Per-sample partial batch statistics (reduced in the wrapper).
    sum_ref[...] = jnp.sum(acc, axis=0, keepdims=True)
    ssq_ref[...] = jnp.sum(acc * acc, axis=0, keepdims=True)


# ----------------------------------------------------------------------------
# Pass 2: purely elementwise folded BN scale/offset [+ residual] [+ ReLU].
# ----------------------------------------------------------------------------
def _bn_act_kernel(y_ref, scale_ref, offset_ref, *rest, apply_relu, has_residual):
    if has_residual:
        r_ref, o_ref = rest
    else:
        (o_ref,) = rest
    scale = scale_ref[...].reshape(1, 1, -1)
    offset = offset_ref[...].reshape(1, 1, -1)
    y = y_ref[...] * scale + offset                    # folded BN, f32 math
    if has_residual:
        y = y + r_ref[...].astype(jnp.float32)
    if apply_relu:
        y = jnp.maximum(y, 0.0)
    o_ref[...] = y.astype(o_ref.dtype)


# ----------------------------------------------------------------------------
# JAX wrappers
# ----------------------------------------------------------------------------
def _prep_weight(w, cp, coutp):
    """PyTorch (Cout, Cin, 3, 3) f32 -> (9*Cp, Coutp) bf16, zero-padded channels.

    Row order is (dy, dx, cin) flattened, matching the im2col column order.
    """
    cout, cin = w.shape[0], w.shape[1]
    w_t = jnp.transpose(w, (2, 3, 1, 0))                  # (3, 3, Cin, Cout)
    w_t = jnp.pad(w_t, ((0, 0), (0, 0), (0, cp - cin), (0, coutp - cout)))
    return w_t.reshape(9 * cp, coutp).astype(jnp.bfloat16)


def conv_bn_act(x, params, residual=None, apply_relu=True):
    """One Conv2d(3x3, pad=1) + BatchNorm2d (train stats) [+ residual] [+ ReLU].

    x        : (N, H, W, Cp)  bf16, channels zero-padded to a multiple of 128.
    residual : optional (N, H, W, Coutp) bf16 (same padding convention).
    returns  : (N, H, W, Coutp) bf16.
    """
    N, H, W, Cp = x.shape
    w, b, gamma, beta = params        # conv bias b is cancelled by BN -> unused
    cout, cin = w.shape[0], w.shape[1]
    assert _round_up(cin, LANE) == Cp
    Coutp = _round_up(cout, LANE)

    wq = _prep_weight(w, Cp, Coutp)                       # (9*Cp, Coutp) bf16

    x_spec = pl.BlockSpec((None, H, W, Cp), lambda n: (n, 0, 0, 0))
    w_spec = pl.BlockSpec((9 * Cp, Coutp), lambda n: (0, 0))    # constant -> fetched once
    img_spec = pl.BlockSpec((None, H, W, Coutp), lambda n: (n, 0, 0, 0))
    stat_spec = pl.BlockSpec((None, 1, Coutp), lambda n: (n, 0, 0))
    vec_spec = pl.BlockSpec((1, Coutp), lambda n: (0, 0))

    conv_flops = 2 * N * H * W * 9 * Cp * Coutp

    # ---- pass 1: conv (single big-K matmul) + per-sample partial stats ------
    y_f32, psum, pssq = pl.pallas_call(
        functools.partial(_conv_stats_kernel, H=H, W=W),
        grid=(N,),
        in_specs=[x_spec, w_spec],
        out_specs=[img_spec, stat_spec, stat_spec],
        out_shape=[jax.ShapeDtypeStruct((N, H, W, Coutp), jnp.float32),
                   jax.ShapeDtypeStruct((N, 1, Coutp), jnp.float32),
                   jax.ShapeDtypeStruct((N, 1, Coutp), jnp.float32)],
        scratch_shapes=[
            pltpu.VMEM((H + 2 * _HALO_OFF, W + 2 * _HALO_OFF, Cp), jnp.bfloat16),
            pltpu.VMEM((H * W, 9 * Cp), jnp.bfloat16)],
        compiler_params=pltpu.CompilerParams(
            dimension_semantics=("parallel",),
            vmem_limit_bytes=_VMEM_LIMIT),
        cost_estimate=pl.CostEstimate(
            flops=int(conv_flops), transcendentals=0,
            bytes_accessed=int(x.size * 2 + wq.size * 2
                               + N * H * W * Coutp * 4 + 2 * N * Coutp * 4)),
    )(x, wq)

    # Fold BN (training-mode, biased variance) into a single scale/offset.
    # The conv bias is mathematically cancelled by the mean subtraction.
    # Padded channels have gamma=0 -> scale=0/offset=0, so padded lanes stay 0.
    m_total = jnp.float32(N * H * W)
    mean = jnp.sum(psum, axis=0) / m_total                # (1, Coutp)
    var = jnp.maximum(jnp.sum(pssq, axis=0) / m_total - mean * mean, 0.0)
    gamma_p = jnp.pad(gamma, (0, Coutp - cout)).reshape(1, Coutp)
    beta_p = jnp.pad(beta, (0, Coutp - cout)).reshape(1, Coutp)
    scale = (gamma_p * jax.lax.rsqrt(var + BN_EPS)).astype(jnp.float32)
    offset = (beta_p - mean * scale).astype(jnp.float32)

    # ---- pass 2: elementwise normalize [+ residual] [+ ReLU] -> bf16 --------
    args = [y_f32, scale, offset]
    in_specs = [img_spec, vec_spec, vec_spec]
    nbytes = N * H * W * Coutp * (4 + 2) + 2 * Coutp * 4
    if residual is not None:
        args.append(residual)
        in_specs.append(img_spec)
        nbytes += residual.size * 2

    out = pl.pallas_call(
        functools.partial(_bn_act_kernel, apply_relu=apply_relu,
                          has_residual=residual is not None),
        grid=(N,),
        in_specs=in_specs,
        out_specs=img_spec,
        out_shape=jax.ShapeDtypeStruct((N, H, W, Coutp), jnp.bfloat16),
        compiler_params=pltpu.CompilerParams(
            dimension_semantics=("parallel",),
            vmem_limit_bytes=_VMEM_LIMIT),
        cost_estimate=pl.CostEstimate(
            flops=int(3 * N * H * W * Coutp), transcendentals=0,
            bytes_accessed=int(nbytes)),
    )(*args)
    return out


def block_builder_forward(x_nchw, params, res=False):
    """Matches block_builder(n_layers, n_filters, res).forward(x) (training-mode BN)."""
    N, C, H, W = x_nchw.shape
    Cp = _round_up(C, LANE)
    x = jnp.transpose(x_nchw, (0, 2, 3, 1))               # NCHW -> NHWC, once per block
    x = jnp.pad(x, ((0, 0), (0, 0), (0, 0), (0, Cp - C))).astype(jnp.bfloat16)
    if not res:
        # Sequential of conv_block: Conv2d(3x3, pad=1) -> BatchNorm2d -> ReLU
        for layer in params:
            x = conv_bn_act(x, layer, apply_relu=True)
    else:
        # Sequential of Shortcut(n_filters, n_filters, zero_padding=False):
        #   out = relu( BN(Conv(conv_block(x))) + x )
        for (cb_params, conv2_params) in params:
            h = conv_bn_act(x, cb_params, apply_relu=True)
            x = conv_bn_act(h, conv2_params, residual=x, apply_relu=True)
    out = x[..., :C].astype(jnp.float32)                  # drop channel padding
    return jnp.transpose(out, (0, 3, 1, 2))               # NHWC -> NCHW


# ----------------------------------------------------------------------------
# Deterministic parameter init (synthetic; shapes from the module's __init__)
# ----------------------------------------------------------------------------
def init_conv_bn(key, cin, cout):
    k1, k2, k3, k4 = jax.random.split(key, 4)
    bound = 1.0 / np.sqrt(cin * 9)
    w = jax.random.uniform(k1, (cout, cin, 3, 3), jnp.float32, -bound, bound)
    b = jax.random.uniform(k2, (cout,), jnp.float32, -bound, bound)
    gamma = jax.random.uniform(k3, (cout,), jnp.float32, 0.5, 1.5)
    beta = jax.random.uniform(k4, (cout,), jnp.float32, -0.5, 0.5)
    return (w, b, gamma, beta)


def init_block_builder(key, n_layers, n_filters, res=False):
    keys = jax.random.split(key, n_layers)
    if not res:
        return [init_conv_bn(k, n_filters, n_filters) for k in keys]
    layers = []
    for k in keys:
        k1, k2 = jax.random.split(k)
        layers.append((init_conv_bn(k1, n_filters, n_filters),
                       init_conv_bn(k2, n_filters, n_filters)))
    return layers


# ----------------------------------------------------------------------------
# Pure-JAX reference, precision-matched to the kernel (bf16 conv operands and
# bf16 inter-layer activations, f32 BN math).
# ----------------------------------------------------------------------------
def _ref_conv_bn_act(x_nhwc, params, residual=None, apply_relu=True):
    w, b, gamma, beta = params
    xb = x_nhwc.astype(jnp.bfloat16).astype(jnp.float32)
    wb = w.astype(jnp.bfloat16).astype(jnp.float32)
    w_hwio = jnp.transpose(wb, (2, 3, 1, 0))
    y = jax.lax.conv_general_dilated(
        xb, w_hwio, window_strides=(1, 1), padding="SAME",
        dimension_numbers=("NHWC", "HWIO", "NHWC"),
        precision=jax.lax.Precision.HIGHEST) + b          # bias cancels through BN
    mean = jnp.mean(y, axis=(0, 1, 2), keepdims=True)
    var = jnp.mean((y - mean) ** 2, axis=(0, 1, 2), keepdims=True)
    y = (y - mean) * gamma * jax.lax.rsqrt(var + BN_EPS) + beta
    if residual is not None:
        y = y + residual
    if apply_relu:
        y = jnp.maximum(y, 0.0)
    return y.astype(jnp.bfloat16).astype(jnp.float32)     # kernel emits bf16


def _ref_block_builder(x_nchw, params, res=False):
    x = jnp.transpose(x_nchw, (0, 2, 3, 1))
    x = x.astype(jnp.bfloat16).astype(jnp.float32)        # kernel stores block input in bf16
    if not res:
        for layer in params:
            x = _ref_conv_bn_act(x, layer)
    else:
        for (cb_params, conv2_params) in params:
            h = _ref_conv_bn_act(x, cb_params, apply_relu=True)
            x = _ref_conv_bn_act(h, conv2_params, residual=x, apply_relu=True)
    return jnp.transpose(x, (0, 3, 1, 2))


# ----------------------------------------------------------------------------
if __name__ == "__main__":
    key = jax.random.PRNGKey(0)
    kx, kp1, kp2 = jax.random.split(key, 3)

    # Small shapes consistent with the module: batch=2, n_filters=4, spatial=16x16.
    N, C, H, W = 2, 4, 16, 16
    n_layers = 2
    x = jax.random.normal(kx, (N, C, H, W), jnp.float32)  # NCHW, as in PyTorch

    fwd = jax.jit(block_builder_forward, static_argnames=("res",))

    # res=False path: stack of conv_block(n_filters, n_filters)
    params_plain = init_block_builder(kp1, n_layers, C, res=False)
    out_plain = jax.block_until_ready(fwd(x, params_plain, res=False))
    ref_plain = _ref_block_builder(x, params_plain, res=False)
    np.testing.assert_allclose(np.asarray(out_plain), np.asarray(ref_plain),
                               rtol=5e-3, atol=5e-3)

    # res=True path: stack of Shortcut(n_filters, n_filters) (identity mapping)
    params_res = init_block_builder(kp2, n_layers, C, res=True)
    out_res = jax.block_until_ready(fwd(x, params_res, res=True))
    ref_res = _ref_block_builder(x, params_res, res=True)
    np.testing.assert_allclose(np.asarray(out_res), np.asarray(ref_res),
                               rtol=5e-3, atol=5e-3)

    assert out_plain.shape == (N, C, H, W) and out_res.shape == (N, C, H, W)
    print("KERNEL_OK")
</pallas_src>

<mosaic_0001>
module attributes {stable_mosaic.version = 11 : i64} {
  func.func @_conv_stats_kernel(%arg0: i32, %arg1: memref<1x16x16x128xbf16, #tpu.memory_space<vmem>>, %arg2: memref<1152x128xbf16, #tpu.memory_space<vmem>>, %arg3: memref<1x16x16x128xf32, #tpu.memory_space<vmem>>, %arg4: memref<1x1x128xf32, #tpu.memory_space<vmem>>, %arg5: memref<1x1x128xf32, #tpu.memory_space<vmem>>, %arg6: memref<32x32x128xbf16, #tpu.memory_space<vmem>>, %arg7: memref<256x1152xbf16, #tpu.memory_space<vmem>>) attributes {dimension_semantics = [#tpu.dimension_semantics<parallel>], iteration_bounds = array<i64: 2>, scalar_prefetch = 0 : i64, scratch_operands = 2 : i64, tpu.core_type = #tpu.core_type<tc>, window_params = [{transform_indices = @transform_0, window_bounds = array<i64: 1, 16, 16, 128>}, {pipeline_mode = #tpu.pipeline_mode<synchronous>, transform_indices = @transform_1, window_bounds = array<i64: 1152, 128>}, {transform_indices = @transform_2, window_bounds = array<i64: 1, 16, 16, 128>}, {transform_indices = @transform_3, window_bounds = array<i64: 1, 1, 128>}, {transform_indices = @transform_4, window_bounds = array<i64: 1, 1, 128>}]} {
    %cst = arith.constant 0.000000e+00 : bf16
    %0 = vector.broadcast %cst : bf16 to vector<32x32x128xbf16>
    %c0 = arith.constant 0 : index
    %c0_0 = arith.constant 0 : index
    %c0_1 = arith.constant 0 : index
    %1 = vector.load %arg6[%c0, %c0_0, %c0_1] : memref<32x32x128xbf16, #tpu.memory_space<vmem>>, vector<32x32x128xbf16>
    tpu.vector_store %arg6[%c0, %c0_0, %c0_1], %0 {strides = array<i32>} : memref<32x32x128xbf16, #tpu.memory_space<vmem>>, vector<32x32x128xbf16>,
    %c0_2 = arith.constant 0 : index
    %c0_3 = arith.constant 0 : index
    %c0_4 = arith.constant 0 : index
    %c0_5 = arith.constant 0 : index
    %2 = vector.load %arg1[%c0_2, %c0_3, %c0_4, %c0_5] : memref<1x16x16x128xbf16, #tpu.memory_space<vmem>>, vector<1x16x16x128xbf16>
    %3 = vector.shape_cast %2 : vector<1x16x16x128xbf16> to vector<16x16x128xbf16>
    %c8 = arith.constant 8 : index
    %c8_6 = arith.constant 8 : index
    %c0_7 = arith.constant 0 : index
    %4 = vector.load %arg6[%c8, %c8_6, %c0_7] : memref<32x32x128xbf16, #tpu.memory_space<vmem>>, vector<16x16x128xbf16>
    tpu.vector_store %arg6[%c8, %c8_6, %c0_7], %3 {strides = array<i32>} : memref<32x32x128xbf16, #tpu.memory_space<vmem>>, vector<16x16x128xbf16>,
    %c7 = arith.constant 7 : index
    %c7_8 = arith.constant 7 : index
    %c0_9 = arith.constant 0 : index
    %5 = vector.load %arg6[%c7, %c7_8, %c0_9] : memref<32x32x128xbf16, #tpu.memory_space<vmem>>, vector<16x16x128xbf16>
    %6 = vector.shape_cast %5 : vector<16x16x128xbf16> to vector<256x128xbf16>
    %c0_10 = arith.constant 0 : index
    %c0_11 = arith.constant 0 : index
    %7 = vector.load %arg7[%c0_10, %c0_11] : memref<256x1152xbf16, #tpu.memory_space<vmem>>, vector<256x128xbf16>
    tpu.vector_store %arg7[%c0_10, %c0_11], %6 {strides = array<i32>} : memref<256x1152xbf16, #tpu.memory_space<vmem>>, vector<256x128xbf16>,
    %c7_12 = arith.constant 7 : index
    %c8_13 = arith.constant 8 : index
    %c0_14 = arith.constant 0 : index
    %8 = vector.load %arg6[%c7_12, %c8_13, %c0_14] : memref<32x32x128xbf16, #tpu.memory_space<vmem>>, vector<16x16x128xbf16>
    %9 = vector.shape_cast %8 : vector<16x16x128xbf16> to vector<256x128xbf16>
    %c0_15 = arith.constant 0 : index
    %c128 = arith.constant 128 : index
    %10 = vector.load %arg7[%c0_15, %c128] : memref<256x1152xbf16, #tpu.memory_space<vmem>>, vector<256x128xbf16>
    tpu.vector_store %arg7[%c0_15, %c128], %9 {strides = array<i32>} : memref<256x1152xbf16, #tpu.memory_space<vmem>>, vector<256x128xbf16>,
    %c7_16 = arith.constant 7 : index
    %c9 = arith.constant 9 : index
    %c0_17 = arith.constant 0 : index
    %11 = vector.load %arg6[%c7_16, %c9, %c0_17] : memref<32x32x128xbf16, #tpu.memory_space<vmem>>, vector<16x16x128xbf16>
    %12 = vector.shape_cast %11 : vector<16x16x128xbf16> to vector<256x128xbf16>
    %c0_18 = arith.constant 0 : index
    %c256 = arith.constant 256 : index
    %13 = vector.load %arg7[%c0_18, %c256] : memref<256x1152xbf16, #tpu.memory_space<vmem>>, vector<256x128xbf16>
    tpu.vector_store %arg7[%c0_18, %c256], %12 {strides = array<i32>} : memref<256x1152xbf16, #tpu.memory_space<vmem>>, vector<256x128xbf16>,
    %c8_19 = arith.constant 8 : index
    %c7_20 = arith.constant 7 : index
    %c0_21 = arith.constant 0 : index
    %14 = vector.load %arg6[%c8_19, %c7_20, %c0_21] : memref<32x32x128xbf16, #tpu.memory_space<vmem>>, vector<16x16x128xbf16>
    %15 = vector.shape_cast %14 : vector<16x16x128xbf16> to vector<256x128xbf16>
    %c0_22 = arith.constant 0 : index
    %c384 = arith.constant 384 : index
    %16 = vector.load %arg7[%c0_22, %c384] : memref<256x1152xbf16, #tpu.memory_space<vmem>>, vector<256x128xbf16>
    tpu.vector_store %arg7[%c0_22, %c384], %15 {strides = array<i32>} : memref<256x1152xbf16, #tpu.memory_space<vmem>>, vector<256x128xbf16>,
    %c8_23 = arith.constant 8 : index
    %c8_24 = arith.constant 8 : index
    %c0_25 = arith.constant 0 : index
    %17 = vector.load %arg6[%c8_23, %c8_24, %c0_25] : memref<32x32x128xbf16, #tpu.memory_space<vmem>>, vector<16x16x128xbf16>
    %18 = vector.shape_cast %17 : vector<16x16x128xbf16> to vector<256x128xbf16>
    %c0_26 = arith.constant 0 : index
    %c512 = arith.constant 512 : index
    %19 = vector.load %arg7[%c0_26, %c512] : memref<256x1152xbf16, #tpu.memory_space<vmem>>, vector<256x128xbf16>
    tpu.vector_store %arg7[%c0_26, %c512], %18 {strides = array<i32>} : memref<256x1152xbf16, #tpu.memory_space<vmem>>, vector<256x128xbf16>,
    %c8_27 = arith.constant 8 : index
    %c9_28 = arith.constant 9 : index
    %c0_29 = arith.constant 0 : index
    %20 = vector.load %arg6[%c8_27, %c9_28, %c0_29] : memref<32x32x128xbf16, #tpu.memory_space<vmem>>, vector<16x16x128xbf16>
    %21 = vector.shape_cast %20 : vector<16x16x128xbf16> to vector<256x128xbf16>
    %c0_30 = arith.constant 0 : index
    %c640 = arith.constant 640 : index
    %22 = vector.load %arg7[%c0_30, %c640] : memref<256x1152xbf16, #tpu.memory_space<vmem>>, vector<256x128xbf16>
    tpu.vector_store %arg7[%c0_30, %c640], %21 {strides = array<i32>} : memref<256x1152xbf16, #tpu.memory_space<vmem>>, vector<256x128xbf16>,
    %c9_31 = arith.constant 9 : index
    %c7_32 = arith.constant 7 : index
    %c0_33 = arith.constant 0 : index
    %23 = vector.load %arg6[%c9_31, %c7_32, %c0_33] : memref<32x32x128xbf16, #tpu.memory_space<vmem>>, vector<16x16x128xbf16>
    %24 = vector.shape_cast %23 : vector<16x16x128xbf16> to vector<256x128xbf16>
    %c0_34 = arith.constant 0 : index
    %c768 = arith.constant 768 : index
    %25 = vector.load %arg7[%c0_34, %c768] : memref<256x1152xbf16, #tpu.memory_space<vmem>>, vector<256x128xbf16>
    tpu.vector_store %arg7[%c0_34, %c768], %24 {strides = array<i32>} : memref<256x1152xbf16, #tpu.memory_space<vmem>>, vector<256x128xbf16>,
    %c9_35 = arith.constant 9 : index
    %c8_36 = arith.constant 8 : index
    %c0_37 = arith.constant 0 : index
    %26 = vector.load %arg6[%c9_35, %c8_36, %c0_37] : memref<32x32x128xbf16, #tpu.memory_space<vmem>>, vector<16x16x128xbf16>
    %27 = vector.shape_cast %26 : vector<16x16x128xbf16> to vector<256x128xbf16>
    %c0_38 = arith.constant 0 : index
    %c896 = arith.constant 896 : index
    %28 = vector.load %arg7[%c0_38, %c896] : memref<256x1152xbf16, #tpu.memory_space<vmem>>, vector<256x128xbf16>
    tpu.vector_store %arg7[%c0_38, %c896], %27 {strides = array<i32>} : memref<256x1152xbf16, #tpu.memory_space<vmem>>, vector<256x128xbf16>,
    %c9_39 = arith.constant 9 : index
    %c9_40 = arith.constant 9 : index
    %c0_41 = arith.constant 0 : index
    %29 = vector.load %arg6[%c9_39, %c9_40, %c0_41] : memref<32x32x128xbf16, #tpu.memory_space<vmem>>, vector<16x16x128xbf16>
    %30 = vector.shape_cast %29 : vector<16x16x128xbf16> to vector<256x128xbf16>
    %c0_42 = arith.constant 0 : index
    %c1024 = arith.constant 1024 : index
    %31 = vector.load %arg7[%c0_42, %c1024] : memref<256x1152xbf16, #tpu.memory_space<vmem>>, vector<256x128xbf16>
    tpu.vector_store %arg7[%c0_42, %c1024], %30 {strides = array<i32>} : memref<256x1152xbf16, #tpu.memory_space<vmem>>, vector<256x128xbf16>,
    %c0_43 = arith.constant 0 : index
    %c0_44 = arith.constant 0 : index
    %32 = vector.load %arg7[%c0_43, %c0_44] : memref<256x1152xbf16, #tpu.memory_space<vmem>>, vector<256x1152xbf16>
    %c0_45 = arith.constant 0 : index
    %c0_46 = arith.constant 0 : index
    %33 = vector.load %arg2[%c0_45, %c0_46] : memref<1152x128xbf16, #tpu.memory_space<vmem>>, vector<1152x128xbf16>
    %cst_47 = arith.constant dense<0.000000e+00> : vector<256x128xf32>
    %34 = tpu.matmul %32, %33, %cst_47 {dimension_numbers = #tpu.dot_dimension_numbers<[1], [0], [0], [1], [0, 0, 1, 1], [], []>} : vector<256x1152xbf16>, vector<1152x128xbf16>, vector<256x128xf32> -> vector<256x128xf32>
    %35 = vector.shape_cast %34 : vector<256x128xf32> to vector<16x16x128xf32>
    %c0_48 = arith.constant 0 : index
    %c0_49 = arith.constant 0 : index
    %c0_50 = arith.constant 0 : index
    %c0_51 = arith.constant 0 : index
    %36 = vector.load %arg3[%c0_48, %c0_49, %c0_50, %c0_51] : memref<1x16x16x128xf32, #tpu.memory_space<vmem>>, vector<1x16x16x128xf32>
    %37 = vector.shape_cast %36 : vector<1x16x16x128xf32> to vector<16x16x128xf32>
    %38 = vector.shape_cast %35 : vector<16x16x128xf32> to vector<1x16x16x128xf32>
    tpu.vector_store %arg3[%c0_48, %c0_49, %c0_50, %c0_51], %38 {strides = array<i32>} : memref<1x16x16x128xf32, #tpu.memory_space<vmem>>, vector<1x16x16x128xf32>,
    %cst_52 = arith.constant dense<0.000000e+00> : vector<128xf32>
    %39 = vector.multi_reduction <add>, %34, %cst_52 [0] : vector<256x128xf32> to vector<128xf32>
    %40 = vector.shape_cast %39 : vector<128xf32> to vector<1x128xf32>
    %c0_53 = arith.constant 0 : index
    %c0_54 = arith.constant 0 : index
    %c0_55 = arith.constant 0 : index
    %41 = vector.load %arg4[%c0_53, %c0_54, %c0_55] : memref<1x1x128xf32, #tpu.memory_space<vmem>>, vector<1x1x128xf32>
    %42 = vector.shape_cast %41 : vector<1x1x128xf32> to vector<1x128xf32>
    %43 = vector.shape_cast %40 : vector<1x128xf32> to vector<1x1x128xf32>
    tpu.vector_store %arg4[%c0_53, %c0_54, %c0_55], %43 {strides = array<i32>} : memref<1x1x128xf32, #tpu.memory_space<vmem>>, vector<1x1x128xf32>,
    %44 = arith.mulf %34, %34 : vector<256x128xf32>
    %cst_56 = arith.constant dense<0.000000e+00> : vector<128xf32>
    %45 = vector.multi_reduction <add>, %44, %cst_56 [0] : vector<256x128xf32> to vector<128xf32>
    %46 = vector.shape_cast %45 : vector<128xf32> to vector<1x128xf32>
    %c0_57 = arith.constant 0 : index
    %c0_58 = arith.constant 0 : index
    %c0_59 = arith.constant 0 : index
    %47 = vector.load %arg5[%c0_57, %c0_58, %c0_59] : memref<1x1x128xf32, #tpu.memory_space<vmem>>, vector<1x1x128xf32>
    %48 = vector.shape_cast %47 : vector<1x1x128xf32> to vector<1x128xf32>
    %49 = vector.shape_cast %46 : vector<1x128xf32> to vector<1x1x128xf32>
    tpu.vector_store %arg5[%c0_57, %c0_58, %c0_59], %49 {strides = array<i32>} : memref<1x1x128xf32, #tpu.memory_space<vmem>>, vector<1x1x128xf32>,
    return
  }
  func.func @transform_0(%arg0: i32) -> (i32, i32, i32, i32) {
    %c0_i32 = arith.constant 0 : i32
    %c0_i32_0 = arith.constant 0 : i32
    %c0_i32_1 = arith.constant 0 : i32
    %c0_i32_2 = arith.constant 0 : i32
    return %arg0, %c0_i32, %c0_i32_0, %c0_i32_1 : i32, i32, i32, i32
  }
  func.func @transform_1(%arg0: i32) -> (i32, i32) {
    %c0_i32 = arith.constant 0 : i32
    %c0_i32_0 = arith.constant 0 : i32
    %c0_i32_1 = arith.constant 0 : i32
    return %c0_i32, %c0_i32_0 : i32, i32
  }
  func.func @transform_2(%arg0: i32) -> (i32, i32, i32, i32) {
    %c0_i32 = arith.constant 0 : i32
    %c0_i32_0 = arith.constant 0 : i32
    %c0_i32_1 = arith.constant 0 : i32
    %c0_i32_2 = arith.constant 0 : i32
    return %arg0, %c0_i32, %c0_i32_0, %c0_i32_1 : i32, i32, i32, i32
  }
  func.func @transform_3(%arg0: i32) -> (i32, i32, i32) {
    %c0_i32 = arith.constant 0 : i32
    %c0_i32_0 = arith.constant 0 : i32
    %c0_i32_1 = arith.constant 0 : i32
    return %arg0, %c0_i32, %c0_i32_0 : i32, i32, i32
  }
  func.func @transform_4(%arg0: i32) -> (i32, i32, i32) {
    %c0_i32 = arith.constant 0 : i32
    %c0_i32_0 = arith.constant 0 : i32
    %c0_i32_1 = arith.constant 0 : i32
    return %arg0, %c0_i32, %c0_i32_0 : i32, i32, i32
  }
}

module attributes {stable_mosaic.version = 11 : i64} {
  func.func @_bn_act_kernel(%arg0: i32, %arg1: memref<1x16x16x128xf32, #tpu.memory_space<vmem>>, %arg2: memref<1x128xf32, #tpu.memory_space<vmem>>, %arg3: memref<1x128xf32, #tpu.memory_space<vmem>>, %arg4: memref<1x16x16x128xbf16, #tpu.memory_space<vmem>>) attributes {dimension_semantics = [#tpu.dimension_semantics<parallel>], iteration_bounds = array<i64: 2>, scalar_prefetch = 0 : i64, scratch_operands = 0 : i64, tpu.core_type = #tpu.core_type<tc>, window_params = [{transform_indices = @transform_0, window_bounds = array<i64: 1, 16, 16, 128>}, {pipeline_mode = #tpu.pipeline_mode<synchronous>, transform_indices = @transform_1, window_bounds = array<i64: 1, 128>}, {pipeline_mode = #tpu.pipeline_mode<synchronous>, transform_indices = @transform_2, window_bounds = array<i64: 1, 128>}, {transform_indices = @transform_3, window_bounds = array<i64: 1, 16, 16, 128>}]} {
    %c0 = arith.constant 0 : index
    %c0_0 = arith.constant 0 : index
    %0 = vector.load %arg2[%c0, %c0_0] : memref<1x128xf32, #tpu.memory_space<vmem>>, vector<1x128xf32>
    %1 = vector.shape_cast %0 : vector<1x128xf32> to vector<1x1x128xf32>
    %c0_1 = arith.constant 0 : index
    %c0_2 = arith.constant 0 : index
    %2 = vector.load %arg3[%c0_1, %c0_2] : memref<1x128xf32, #tpu.memory_space<vmem>>, vector<1x128xf32>
    %3 = vector.shape_cast %2 : vector<1x128xf32> to vector<1x1x128xf32>
    %c0_3 = arith.constant 0 : index
    %c0_4 = arith.constant 0 : index
    %c0_5 = arith.constant 0 : index
    %c0_6 = arith.constant 0 : index
    %4 = vector.load %arg1[%c0_3, %c0_4, %c0_5, %c0_6] : memref<1x16x16x128xf32, #tpu.memory_space<vmem>>, vector<1x16x16x128xf32>
    %5 = vector.shape_cast %4 : vector<1x16x16x128xf32> to vector<16x16x128xf32>
    %6 = vector.broadcast %1 : vector<1x1x128xf32> to vector<16x16x128xf32>
    %7 = arith.mulf %5, %6 : vector<16x16x128xf32>
    %8 = vector.broadcast %3 : vector<1x1x128xf32> to vector<16x16x128xf32>
    %9 = arith.addf %7, %8 : vector<16x16x128xf32>
    %cst = arith.constant 0.000000e+00 : f32
    %10 = vector.broadcast %cst : f32 to vector<16x16x128xf32>
    %11 = arith.maximumf %9, %10 : vector<16x16x128xf32>
    %12 = arith.truncf %11 : vector<16x16x128xf32> to vector<16x16x128xbf16>
    %c0_7 = arith.constant 0 : index
    %c0_8 = arith.constant 0 : index
    %c0_9 = arith.constant 0 : index
    %c0_10 = arith.constant 0 : index
    %13 = vector.load %arg4[%c0_7, %c0_8, %c0_9, %c0_10] : memref<1x16x16x128xbf16, #tpu.memory_space<vmem>>, vector<1x16x16x128xbf16>
    %14 = vector.shape_cast %13 : vector<1x16x16x128xbf16> to vector<16x16x128xbf16>
    %15 = vector.shape_cast %12 : vector<16x16x128xbf16> to vector<1x16x16x128xbf16>
    tpu.vector_store %arg4[%c0_7, %c0_8, %c0_9, %c0_10], %15 {strides = array<i32>} : memref<1x16x16x128xbf16, #tpu.memory_space<vmem>>, vector<1x16x16x128xbf16>,
    return
  }
  func.func @transform_0(%arg0: i32) -> (i32, i32, i32, i32) {
    %c0_i32 = arith.constant 0 : i32
    %c0_i32_0 = arith.constant 0 : i32
    %c0_i32_1 = arith.constant 0 : i32
    %c0_i32_2 = arith.constant 0 : i32
    return %arg0, %c0_i32, %c0_i32_0, %c0_i32_1 : i32, i32, i32, i32
  }
  func.func @transform_1(%arg0: i32) -> (i32, i32) {
    %c0_i32 = arith.constant 0 : i32
    %c0_i32_0 = arith.constant 0 : i32
    %c0_i32_1 = arith.constant 0 : i32
    return %c0_i32, %c0_i32_0 : i32, i32
  }
  func.func @transform_2(%arg0: i32) -> (i32, i32) {
    %c0_i32 = arith.constant 0 : i32
    %c0_i32_0 = arith.constant 0 : i32
    %c0_i32_1 = arith.constant 0 : i32
    return %c0_i32, %c0_i32_0 : i32, i32
  }
  func.func @transform_3(%arg0: i32) -> (i32, i32, i32, i32) {
    %c0_i32 = arith.constant 0 : i32
    %c0_i32_0 = arith.constant 0 : i32
    %c0_i32_1 = arith.constant 0 : i32
    %c0_i32_2 = arith.constant 0 : i32
    return %arg0, %c0_i32, %c0_i32_0, %c0_i32_1 : i32, i32, i32, i32
  }
}

</mosaic_0001>

<llo_original>
// kernel: block_builder_forward.5
$region0: #{block_builder_forward.5}
  #allocation0 [shape = 'u32[]', space=smem, size = 0x4, offset = 0x4, fixed_abs, tag = 'smem constant byte address 0x4 - core index']
  #allocation1 [shape = 'u32[144,128]{1,0:T(1,128)}', space=vmem, size = 0x12000, scoped, tag = 'internal scratch']
  %s0 = inlined_call_operand.vmem [shape: f32[2,16,16,128], index: 0, kind: input, shape index: {}]
  %s1 = inlined_call_operand.vmem [shape: f32[1,128], index: 1, kind: input, shape index: {}]
  %s2 = inlined_call_operand.vmem [shape: f32[1,128], index: 2, kind: input, shape index: {}]
  %s3 = inlined_call_operand.vmem [shape: bf16[2,16,16,128], index: 3, kind: output, shape index: {}]
  %s4 = sld [smem:[#allocation0]]
  $region45: #{block_builder_forward.5} parent=0
    _
  %s6 = ssub.s32 1, %s4
  %s7 = scalar_select 0, %s6, %s4
  loop: start=0, step=1, limit=4
  $region2: #{block_builder_forward.5} parent=0 // loop_pre_header
    _
  $region3: #{block_builder_forward.5} parent=0 // loop_header
    %s9 = sphi 0, %s13
    %p10 = scmp.ge.s32.totalorder %s9, 4
    %s19 = sphi 0, %s21
    %s22 = sphi 0, %s19
    %s23 = sphi 0, %s22
    %s39 = sphi 0, %s23
    %s43 = sphi 0, %s43
    %s45 = sphi 0, %s43
    %s46 = sphi 0, %s45
    %s60 = sphi 0, %s46
    %s64 = sphi 0, %s64
    %s66 = sphi 0, %s64
    %s67 = sphi 0, %s66
    %s81 = sphi 0, %s67
    %s87 = sphi 0, %s89
    %s90 = sphi 0, %s87
    %s91 = sphi 0, %s90
    %s107 = sphi 0, %s91
  $region4: #{block_builder_forward.5} parent=0 // loop_header_branch
    %12 = sbr.rel (%p10) target = $region8
  $region5: #{block_builder_forward.5} parent=0 // loop_body
    %s14 = ssub.s32 %s9, 1
    %s15 = ssub.s32 %s9, 2
    %s16 = sadd.s32 %s9, 1
    %s17 = ssub.s32 %s9, %s16
    %p18 = scmp.eq.s32.totalorder %s17, 0
    %s20 = sadd.s32 %s19, 1
    %s21 = scalar_select %p18, %s19, %s20
    %p24 = pneg %p18
    %p25 = scmp.eq.s32.totalorder %s9, 1
    %p26 = por %p24, %p25
    %p27 = scmp.ne.s32.totalorder %s19, %s22
    %p28 = scmp.eq.s32.totalorder %s9, 0
    %p29 = por %p27, %p28
    %p30 = scmp.ne.s32.totalorder %s19, %s22
    %p31 = scmp.eq.s32.totalorder %s14, 1
    %p32 = por %p30, %p31
    %p33 = scmp.ne.s32.totalorder %s22, %s23
    %p34 = scmp.eq.s32.totalorder %s14, 0
    %p35 = por %p33, %p34
    %p36 = scmp.ne.s32.totalorder %s22, %s23
    %p37 = scmp.eq.s32.totalorder %s15, 1
    %p38 = por %p36, %p37
    %p40 = scmp.ne.s32.totalorder %s23, %s39
    %p41 = scmp.eq.s32.totalorder %s15, 0
    %p42 = por %p40, %p41
    %s44 = sadd.s32 %s43, 1
    %p47 = scmp.eq.s32.totalorder %s9, 1
    %p48 = scmp.ne.s32.totalorder %s43, %s45
    %p49 = scmp.eq.s32.totalorder %s9, 0
    %p50 = por %p48, %p49
    %p51 = scmp.ne.s32.totalorder %s43, %s45
    %p52 = scmp.eq.s32.totalorder %s14, 1
    %p53 = por %p51, %p52
    %p54 = scmp.ne.s32.totalorder %s45, %s46
    %p55 = scmp.eq.s32.totalorder %s14, 0
    %p56 = por %p54, %p55
    %p57 = scmp.ne.s32.totalorder %s45, %s46
    %p58 = scmp.eq.s32.totalorder %s15, 1
    %p59 = por %p57, %p58
    %p61 = scmp.ne.s32.totalorder %s46, %s60
    %p62 = scmp.eq.s32.totalorder %s15, 0
    %p63 = por %p61, %p62
    %s65 = sadd.s32 %s64, 1
    %p68 = scmp.eq.s32.totalorder %s9, 1
    %p69 = scmp.ne.s32.totalorder %s64, %s66
    %p70 = scmp.eq.s32.totalorder %s9, 0
    %p71 = por %p69, %p70
    %p72 = scmp.ne.s32.totalorder %s64, %s66
    %p73 = scmp.eq.s32.totalorder %s14, 1
    %p74 = por %p72, %p73
    %p75 = scmp.ne.s32.totalorder %s66, %s67
    %p76 = scmp.eq.s32.totalorder %s14, 0
    %p77 = por %p75, %p76
    %p78 = scmp.ne.s32.totalorder %s66, %s67
    %p79 = scmp.eq.s32.totalorder %s15, 1
    %p80 = por %p78, %p79
    %p82 = scmp.ne.s32.totalorder %s67, %s81
    %p83 = scmp.eq.s32.totalorder %s15, 0
    %p84 = por %p82, %p83
    %s85 = ssub.s32 %s9, %s16
    %p86 = scmp.eq.s32.totalorder %s85, 0
    %s88 = sadd.s32 %s87, 1
    %s89 = scalar_select %p86, %s87, %s88
    %p92 = pneg %p86
    %p93 = scmp.eq.s32.totalorder %s9, 1
    %p94 = por %p92, %p93
    %p95 = scmp.ne.s32.totalorder %s87, %s90
    %p96 = scmp.eq.s32.totalorder %s9, 0
    %p97 = por %p95, %p96
    %p98 = scmp.ne.s32.totalorder %s87, %s90
    %p99 = scmp.eq.s32.totalorder %s14, 1
    %p100 = por %p98, %p99
    %p101 = scmp.ne.s32.totalorder %s90, %s91
    %p102 = scmp.eq.s32.totalorder %s14, 0
    %p103 = por %p101, %p102
    %p104 = scmp.ne.s32.totalorder %s90, %s91
    %p105 = scmp.eq.s32.totalorder %s15, 1
    %p106 = por %p104, %p105
    %p108 = scmp.ne.s32.totalorder %s91, %s107
    %p109 = scmp.eq.s32.totalorder %s15, 0
    %p110 = por %p108, %p109
    %p111 = scmp.le.s32.totalorder 1, %s9
    %p112 = scmp.lt.s32.totalorder %s9, 3
    %p113 = pnand %p111, %p112
    %p114 = pneg %p113
    // Predicated region
    $region9: #{block_builder_forward.5} parent=5 // pred_check
      _
    $region10: #{block_builder_forward.5} parent=5 // pred_check_branch
      %116 = sbr.rel (%p113) target = $region12
    $region11: #{block_builder_forward.5} parent=5 // pred_region
      %s117 = ssub.s32 %s9, 1
      // Predicated region
      $region13: #{block_builder_forward.5} parent=11 // pred_check
        %p118 = pneg %p56
      $region14: #{block_builder_forward.5} parent=11 // pred_check_branch
        %120 = sbr.rel (%p118) target = $region16
      $region15: #{block_builder_forward.5} parent=11 // pred_region
        _
      $region16: #{block_builder_forward.5} parent=11 // pred_fallthru
        _
      // Predicated region
      $region17: #{block_builder_forward.5} parent=11 // pred_check
        %p121 = pneg %p77
      $region18: #{block_builder_forward.5} parent=11 // pred_check_branch
        %123 = sbr.rel (%p121) target = $region20
      $region19: #{block_builder_forward.5} parent=11 // pred_region
        _
      $region20: #{block_builder_forward.5} parent=11 // pred_fallthru
        _
    $region12: #{block_builder_forward.5} parent=5 // pred_fallthru
      _
    %p124 = scmp.lt.s32.totalorder %s9, 2
    // Predicated region
    $region21: #{block_builder_forward.5} parent=5 // pred_check
      %p125 = pneg %p124
    $region22: #{block_builder_forward.5} parent=5 // pred_check_branch
      %127 = sbr.rel (%p125) target = $region24
    $region23: #{block_builder_forward.5} parent=5 // pred_region
      // Predicated region
      $region25: #{block_builder_forward.5} parent=23 // pred_check
        %p128 = pneg %p29
      $region26: #{block_builder_forward.5} parent=23 // pred_check_branch
        %130 = sbr.rel (%p128) target = $region28
      $region27: #{block_builder_forward.5} parent=23 // pred_region
        %p131 = scmp.lt.s32.totalorder %s9, 1
        %s132 = scalar_select %p131, %s9, 1
        %s133 = smul.addr %s132, 32
        %s134 = smul.addr %s133, 8
        %s135 = scalar_lea.vmem %s0, %s134
      $region28: #{block_builder_forward.5} parent=23 // pred_fallthru
        _
    $region24: #{block_builder_forward.5} parent=5 // pred_fallthru
      _
    %p136 = scmp.le.s32.totalorder 1, %s9
    %p137 = scmp.lt.s32.totalorder %s9, 3
    %p138 = pnand %p136, %p137
    %p139 = pneg %p138
    // Predicated region
    $region29: #{block_builder_forward.5} parent=5 // pred_check
      _
    $region30: #{block_builder_forward.5} parent=5 // pred_check_branch
      %141 = sbr.rel (%p138) target = $region32
    $region31: #{block_builder_forward.5} parent=5 // pred_region
      %s142 = ssub.s32 %s9, 1
      %p143 = scmp.lt.s32.totalorder %s14, 1
      %s144 = scalar_select %p143, %s14, 1
      %s145 = smul.addr %s144, 32
      %s146 = smul.addr %s145, 8
      %s147 = scalar_lea.vmem %s0, %s146
      %p148 = pneg %p35
      %p149 = pneg %p32
      %p150 = pneg %p56
      %p151 = pneg %p53
      %p152 = pneg %p77
      %p153 = pneg %p74
      %p154 = pneg %p103
      %p155 = pneg %p100
      %p156 = scmp.lt.s32.totalorder %s14, 1
      %s157 = scalar_select %p156, %s14, 1
      %s158 = smul.addr %s157, 32
      %s159 = smul.addr %s158, 4
      %s160 = scalar_lea.vmem %s3, %s159
      %p161 = scmp.lt.s32.totalorder %s14, 1
      %s162 = scalar_select %p161, %s14, 1
      %s163 = smul.addr %s162, 32
      %s164 = smul.addr %s163, 8
      %s165 = scalar_lea.vmem %s0, %s164
      %p166 = scmp.lt.s32.totalorder %s14, 1
      %s167 = scalar_select %p166, %s14, 1
      %s168 = smul.addr %s167, 32
      %s169 = smul.addr %s168, 4
      %s170 = scalar_lea.vmem %s3, %s169
      %v171 = vld [vmem:[%s1] sm:$0x1]
      %v172 = vld [vmem:[%s2] sm:$0x1]
      %v173 = vld [vmem:[%s165] sm:$0xff]
      %v174 = vld [vmem:[%s165 + $0x8] sm:$0xff]
      %v175 = vld [vmem:[%s165 + $0x10] sm:$0xff]
      %v176 = vld [vmem:[%s165 + $0x18] sm:$0xff]
      %v177 = vld [vmem:[%s165 + $0x20] sm:$0xff]
      %v178 = vld [vmem:[%s165 + $0x28] sm:$0xff]
      %v179 = vld [vmem:[%s165 + $0x30] sm:$0xff]
      %v180 = vld [vmem:[%s165 + $0x38] sm:$0xff]
      %v181 = vld [vmem:[%s165 + $0x40] sm:$0xff]
      %v182 = vld [vmem:[%s165 + $0x48] sm:$0xff]
      %v183 = vld [vmem:[%s165 + $0x50] sm:$0xff]
      %v184 = vld [vmem:[%s165 + $0x58] sm:$0xff]
      %v185 = vld [vmem:[%s165 + $0x60] sm:$0xff]
      %v186 = vld [vmem:[%s165 + $0x68] sm:$0xff]
      %v187 = vld [vmem:[%s165 + $0x70] sm:$0xff]
      %v188 = vld [vmem:[%s165 + $0x78] sm:$0xff]
      %v189 = vld [vmem:[%s165 + $0x80] sm:$0xff]
      %v190 = vld [vmem:[%s165 + $0x88] sm:$0xff]
      %v191 = vld [vmem:[%s165 + $0x90] sm:$0xff]
      %v192 = vld [vmem:[%s165 + $0x98] sm:$0xff]
      %v193 = vld [vmem:[%s165 + $0xa0] sm:$0xff]
      %v194 = vld [vmem:[%s165 + $0xa8] sm:$0xff]
      %v195 = vld [vmem:[%s165 + $0xb0] sm:$0xff]
      %v196 = vld [vmem:[%s165 + $0xb8] sm:$0xff]
      %v197 = vld [vmem:[%s165 + $0xc0] sm:$0xff]
      %v198 = vld [vmem:[%s165 + $0xc8] sm:$0xff]
      %v199 = vld [vmem:[%s165 + $0xd0] sm:$0xff]
      %v200 = vld [vmem:[%s165 + $0xd8] sm:$0xff]
      %v201 = vld [vmem:[%s165 + $0xe0] sm:$0xff]
      %v202 = vld [vmem:[%s165 + $0xe8] sm:$0xff]
      %v203 = vld [vmem:[%s165 + $0xf0] sm:$0xff]
      %v204 = vld [vmem:[%s165 + $0xf8] sm:$0xff]
      %v206 = vlaneseq
      %v207 = vshrl.u32 %v206, 7
      %v208 = vsub.s32 0, %v207
      %v209 = vrot.slane %v171, %v208
      %v211 = vmul.f32 %v173, %v209
      %v212 = vmul.f32 %v174, %v209
      %v213 = vmul.f32 %v175, %v209
      %v214 = vmul.f32 %v176, %v209
      %v215 = vmul.f32 %v177, %v209
      %v216 = vmul.f32 %v178, %v209
      %v217 = vmul.f32 %v179, %v209
      %v218 = vmul.f32 %v180, %v209
      %v219 = vmul.f32 %v181, %v209
      %v220 = vmul.f32 %v182, %v209
      %v221 = vmul.f32 %v183, %v209
      %v222 = vmul.f32 %v184, %v209
      %v223 = vmul.f32 %v185, %v209
      %v224 = vmul.f32 %v186, %v209
      %v225 = vmul.f32 %v187, %v209
      %v226 = vmul.f32 %v188, %v209
      %v227 = vmul.f32 %v189, %v209
      %v228 = vmul.f32 %v190, %v209
      %v229 = vmul.f32 %v191, %v209
      %v230 = vmul.f32 %v192, %v209
      %v231 = vmul.f32 %v193, %v209
      %v232 = vmul.f32 %v194, %v209
      %v233 = vmul.f32 %v195, %v209
      %v234 = vmul.f32 %v196, %v209
      %v235 = vmul.f32 %v197, %v209
      %v236 = vmul.f32 %v198, %v209
      %v237 = vmul.f32 %v199, %v209
      %v238 = vmul.f32 %v200, %v209
      %v239 = vmul.f32 %v201, %v209
      %v240 = vmul.f32 %v202, %v209
      %v241 = vmul.f32 %v203, %v209
      %v242 = vmul.f32 %v204, %v209
      %v244 = vlaneseq
      %v245 = vshrl.u32 %v244, 7
      %v246 = vsub.s32 0, %v245
      %v247 = vrot.slane %v172, %v246
      %v249 = vadd.f32 %v211, %v247
      %v250 = vadd.f32 %v212, %v247
      %v251 = vadd.f32 %v213, %v247
      %v252 = vadd.f32 %v214, %v247
      %v253 = vadd.f32 %v215, %v247
      %v254 = vadd.f32 %v216, %v247
      %v255 = vadd.f32 %v217, %v247
      %v256 = vadd.f32 %v218, %v247
      %v257 = vadd.f32 %v219, %v247
      %v258 = vadd.f32 %v220, %v247
      %v259 = vadd.f32 %v221, %v247
      %v260 = vadd.f32 %v222, %v247
      %v261 = vadd.f32 %v223, %v247
      %v262 = vadd.f32 %v224, %v247
      %v263 = vadd.f32 %v225, %v247
      %v264 = vadd.f32 %v226, %v247
      %v265 = vadd.f32 %v227, %v247
      %v266 = vadd.f32 %v228, %v247
      %v267 = vadd.f32 %v229, %v247
      %v268 = vadd.f32 %v230, %v247
      %v269 = vadd.f32 %v231, %v247
      %v270 = vadd.f32 %v232, %v247
      %v271 = vadd.f32 %v233, %v247
      %v272 = vadd.f32 %v234, %v247
      %v273 = vadd.f32 %v235, %v247
      %v274 = vadd.f32 %v236, %v247
      %v275 = vadd.f32 %v237, %v247
      %v276 = vadd.f32 %v238, %v247
      %v277 = vadd.f32 %v239, %v247
      %v278 = vadd.f32 %v240, %v247
      %v279 = vadd.f32 %v241, %v247
      %v280 = vadd.f32 %v242, %v247
      %v281 = vmax.f32 %v249, 0.0
      %v282 = vmax.f32 %v250, 0.0
      %v283 = vmax.f32 %v251, 0.0
      %v284 = vmax.f32 %v252, 0.0
      %v285 = vmax.f32 %v253, 0.0
      %v286 = vmax.f32 %v254, 0.0
      %v287 = vmax.f32 %v255, 0.0
      %v288 = vmax.f32 %v256, 0.0
      %v289 = vmax.f32 %v257, 0.0
      %v290 = vmax.f32 %v258, 0.0
      %v291 = vmax.f32 %v259, 0.0
      %v292 = vmax.f32 %v260, 0.0
      %v293 = vmax.f32 %v261, 0.0
      %v294 = vmax.f32 %v262, 0.0
      %v295 = vmax.f32 %v263, 0.0
      %v296 = vmax.f32 %v264, 0.0
      %v297 = vmax.f32 %v265, 0.0
      %v298 = vmax.f32 %v266, 0.0
      %v299 = vmax.f32 %v267, 0.0
      %v300 = vmax.f32 %v268, 0.0
      %v301 = vmax.f32 %v269, 0.0
      %v302 = vmax.f32 %v270, 0.0
      %v303 = vmax.f32 %v271, 0.0
      %v304 = vmax.f32 %v272, 0.0
      %v305 = vmax.f32 %v273, 0.0
      %v306 = vmax.f32 %v274, 0.0
      %v307 = vmax.f32 %v275, 0.0
      %v308 = vmax.f32 %v276, 0.0
      %v309 = vmax.f32 %v277, 0.0
      %v310 = vmax.f32 %v278, 0.0
      %v311 = vmax.f32 %v279, 0.0
      %v312 = vmax.f32 %v280, 0.0
      %v313 = vpack.c.bf16 %v282, %v281
      %v314 = vpack.c.bf16 %v284, %v283
      %v315 = vpack.c.bf16 %v286, %v285
      %v316 = vpack.c.bf16 %v288, %v287
      %v317 = vpack.c.bf16 %v290, %v289
      %v318 = vpack.c.bf16 %v292, %v291
      %v319 = vpack.c.bf16 %v294, %v293
      %v320 = vpack.c.bf16 %v296, %v295
      %v321 = vpack.c.bf16 %v298, %v297
      %v322 = vpack.c.bf16 %v300, %v299
      %v323 = vpack.c.bf16 %v302, %v301
      %v324 = vpack.c.bf16 %v304, %v303
      %v325 = vpack.c.bf16 %v306, %v305
      %v326 = vpack.c.bf16 %v308, %v307
      %v327 = vpack.c.bf16 %v310, %v309
      %v328 = vpack.c.bf16 %v312, %v311
      %v345 = vunpack.c.l.b16 %v313
      %v346 = vunpack.c.h.b16 %v313
      %v347 = vunpack.c.l.b16 %v314
      %v348 = vunpack.c.h.b16 %v314
      %v349 = vunpack.c.l.b16 %v315
      %v350 = vunpack.c.h.b16 %v315
      %v351 = vunpack.c.l.b16 %v316
      %v352 = vunpack.c.h.b16 %v316
      %v353 = vunpack.c.l.b16 %v317
      %v354 = vunpack.c.h.b16 %v317
      %v355 = vunpack.c.l.b16 %v318
      %v356 = vunpack.c.h.b16 %v318
      %v357 = vunpack.c.l.b16 %v319
      %v358 = vunpack.c.h.b16 %v319
      %v359 = vunpack.c.l.b16 %v320
      %v360 = vunpack.c.h.b16 %v320
      %v361 = vunpack.c.l.b16 %v321
      %v362 = vunpack.c.h.b16 %v321
      %v363 = vunpack.c.l.b16 %v322
      %v364 = vunpack.c.h.b16 %v322
      %v365 = vunpack.c.l.b16 %v323
      %v366 = vunpack.c.h.b16 %v323
      %v367 = vunpack.c.l.b16 %v324
      %v368 = vunpack.c.h.b16 %v324
      %v369 = vunpack.c.l.b16 %v325
      %v370 = vunpack.c.h.b16 %v325
      %v371 = vunpack.c.l.b16 %v326
      %v372 = vunpack.c.h.b16 %v326
      %v373 = vunpack.c.l.b16 %v327
      %v374 = vunpack.c.h.b16 %v327
      %v375 = vunpack.c.l.b16 %v328
      %v376 = vunpack.c.h.b16 %v328
      %v377 = vpack.c.b16 %v345, %v345
      %v378 = vpack.c.b16 %v346, %v346
      %v379 = vpack.c.b16 %v347, %v347
      %v380 = vpack.c.b16 %v348, %v348
      %v381 = vpack.c.b16 %v349, %v349
      %v382 = vpack.c.b16 %v350, %v350
      %v383 = vpack.c.b16 %v351, %v351
      %v384 = vpack.c.b16 %v352, %v352
      %v385 = vpack.c.b16 %v353, %v353
      %v386 = vpack.c.b16 %v354, %v354
      %v387 = vpack.c.b16 %v355, %v355
      %v388 = vpack.c.b16 %v356, %v356
      %v389 = vpack.c.b16 %v357, %v357
      %v390 = vpack.c.b16 %v358, %v358
      %v391 = vpack.c.b16 %v359, %v359
      %v392 = vpack.c.b16 %v360, %v360
      %v393 = vpack.c.b16 %v361, %v361
      %v394 = vpack.c.b16 %v362, %v362
      %v395 = vpack.c.b16 %v363, %v363
      %v396 = vpack.c.b16 %v364, %v364
      %v397 = vpack.c.b16 %v365, %v365
      %v398 = vpack.c.b16 %v366, %v366
      %v399 = vpack.c.b16 %v367, %v367
      %v400 = vpack.c.b16 %v368, %v368
      %v401 = vpack.c.b16 %v369, %v369
      %v402 = vpack.c.b16 %v370, %v370
      %v403 = vpack.c.b16 %v371, %v371
      %v404 = vpack.c.b16 %v372, %v372
      %v405 = vpack.c.b16 %v373, %v373
      %v406 = vpack.c.b16 %v374, %v374
      %v407 = vpack.c.b16 %v375, %v375
      %v408 = vpack.c.b16 %v376, %v376
      %441 = vst [vmem:[%s170] sm:$0xf] %v377
      %442 = vst [vmem:[%s170 + $0x4] sm:$0xf] %v378
      %443 = vst [vmem:[%s170 + $0x8] sm:$0xf] %v379
      %444 = vst [vmem:[%s170 + $0xc] sm:$0xf] %v380
      %445 = vst [vmem:[%s170 + $0x10] sm:$0xf] %v381
      %446 = vst [vmem:[%s170 + $0x14] sm:$0xf] %v382
      %447 = vst [vmem:[%s170 + $0x18] sm:$0xf] %v383
      %448 = vst [vmem:[%s170 + $0x1c] sm:$0xf] %v384
      %449 = vst [vmem:[%s170 + $0x20] sm:$0xf] %v385
      %450 = vst [vmem:[%s170 + $0x24] sm:$0xf] %v386
      %451 = vst [vmem:[%s170 + $0x28] sm:$0xf] %v387
      %452 = vst [vmem:[%s170 + $0x2c] sm:$0xf] %v388
      %453 = vst [vmem:[%s170 + $0x30] sm:$0xf] %v389
      %454 = vst [vmem:[%s170 + $0x34] sm:$0xf] %v390
      %455 = vst [vmem:[%s170 + $0x38] sm:$0xf] %v391
      %456 = vst [vmem:[%s170 + $0x3c] sm:$0xf] %v392
      %457 = vst [vmem:[%s170 + $0x40] sm:$0xf] %v393
      %458 = vst [vmem:[%s170 + $0x44] sm:$0xf] %v394
      %459 = vst [vmem:[%s170 + $0x48] sm:$0xf] %v395
      %460 = vst [vmem:[%s170 + $0x4c] sm:$0xf] %v396
      %461 = vst [vmem:[%s170 + $0x50] sm:$0xf] %v397
      %462 = vst [vmem:[%s170 + $0x54] sm:$0xf] %v398
      %463 = vst [vmem:[%s170 + $0x58] sm:$0xf] %v399
      %464 = vst [vmem:[%s170 + $0x5c] sm:$0xf] %v400
      %465 = vst [vmem:[%s170 + $0x60] sm:$0xf] %v401
      %466 = vst [vmem:[%s170 + $0x64] sm:$0xf] %v402
      %467 = vst [vmem:[%s170 + $0x68] sm:$0xf] %v403
      %468 = vst [vmem:[%s170 + $0x6c] sm:$0xf] %v404
      %469 = vst [vmem:[%s170 + $0x70] sm:$0xf] %v405
      %470 = vst [vmem:[%s170 + $0x74] sm:$0xf] %v406
      %471 = vst [vmem:[%s170 + $0x78] sm:$0xf] %v407
      %472 = vst [vmem:[%s170 + $0x7c] sm:$0xf] %v408
      %p473 = scmp.lt.s32.totalorder %s14, 1
      %s474 = scalar_select %p473, %s14, 1
      %s475 = smul.addr %s474, 32
      %s476 = smul.addr %s475, 4
      %s477 = scalar_lea.vmem %s3, %s476
      // Predicated region
      $region33: #{block_builder_forward.5} parent=31 // pred_check
        %p478 = pneg %p100
      $region34: #{block_builder_forward.5} parent=31 // pred_check_branch
        %480 = sbr.rel (%p478) target = $region36
      $region35: #{block_builder_forward.5} parent=31 // pred_region
        _
      $region36: #{block_builder_forward.5} parent=31 // pred_fallthru
        _
    $region32: #{block_builder_forward.5} parent=5 // pred_fallthru
      _
    %p481 = scmp.le.s32.totalorder 2, %s9
    // Predicated region
    $region37: #{block_builder_forward.5} parent=5 // pred_check
      %p482 = pneg %p481
    $region38: #{block_builder_forward.5} parent=5 // pred_check_branch
      %484 = sbr.rel (%p482) target = $region40
    $region39: #{block_builder_forward.5} parent=5 // pred_region
      %s485 = ssub.s32 %s9, 2
      // Predicated region
      $region41: #{block_builder_forward.5} parent=39 // pred_check
        %p486 = pneg %p106
      $region42: #{block_builder_forward.5} parent=39 // pred_check_branch
        %488 = sbr.rel (%p486) target = $region44
      $region43: #{block_builder_forward.5} parent=39 // pred_region
        %p489 = scmp.lt.s32.totalorder %s15, 1
        %s490 = scalar_select %p489, %s15, 1
        %s491 = smul.addr %s490, 32
        %s492 = smul.addr %s491, 4
        %s493 = scalar_lea.vmem %s3, %s492
      $region44: #{block_builder_forward.5} parent=39 // pred_fallthru
        _
    $region40: #{block_builder_forward.5} parent=5 // pred_fallthru
      _
  $region6: #{block_builder_forward.5} parent=0 // loop_footer
    %s13 = sadd.s32 1, %s9
  $region7: #{block_builder_forward.5} parent=0 // loop_footer_branch
    %8 = sbr.rel target = $region3
  $region8: #{block_builder_forward.5} parent=0 // loop_exit
    _

// kernel: block_builder_forward.4
$region0: #{block_builder_forward.4}
  #allocation0 [shape = 'u32[]', space=smem, size = 0x4, offset = 0x4, fixed_abs, tag = 'smem constant byte address 0x4 - core index']
  #allocation1 [shape = 'u32[144,128]{1,0:T(1,128)}', space=vmem, size = 0x12000, scoped, tag = 'internal scratch']
  #allocation2 [shape = 'bf16[32,32,128]{2,1,0:T(16,128)(2,1)}', space=vmem, size = 0x40000, scoped, tag = 'scratch operand']
  #allocation3 [shape = 'bf16[256,1152]{1,0:T(16,128)(2,1)}', space=vmem, size = 0x90000, scoped, tag = 'scratch operand']
  %s0 = inlined_call_operand.vmem [shape: bf16[2,16,16,128], index: 0, kind: input, shape index: {}]
  %s1 = inlined_call_operand.vmem [shape: bf16[1152,128], index: 1, kind: input, shape index: {}]
  %s2 = inlined_call_operand.vmem [shape: f32[2,16,16,128], index: 2, kind: output, shape index: {0}]
  %s3 = inlined_call_operand.vmem [shape: f32[2,1,128], index: 3, kind: output, shape index: {1}]
  %s4 = inlined_call_operand.vmem [shape: f32[2,1,128], index: 4, kind: output, shape index: {2}]
  %5 = xla_tuple %s2, %s3, %s4
  %s6 = sld [smem:[#allocation0]]
  $region57: #{block_builder_forward.4} parent=0
    _
  %s8 = ssub.s32 1, %s6
  %s9 = scalar_select 0, %s8, %s6
  loop: start=0, step=1, limit=4
  $region2: #{block_builder_forward.4} parent=0 // loop_pre_header
    _
  $region3: #{block_builder_forward.4} parent=0 // loop_header
    %s11 = sphi 0, %s15
    %p12 = scmp.ge.s32.totalorder %s11, 4
    %s21 = sphi 0, %s23
    %s24 = sphi 0, %s21
    %s25 = sphi 0, %s24
    %s41 = sphi 0, %s25
    %s45 = sphi 0, %s45
    %s47 = sphi 0, %s45
    %s48 = sphi 0, %s47
    %s62 = sphi 0, %s48
    %s68 = sphi 0, %s70
    %s71 = sphi 0, %s68
    %s72 = sphi 0, %s71
    %s88 = sphi 0, %s72
    %s94 = sphi 0, %s96
    %s97 = sphi 0, %s94
    %s98 = sphi 0, %s97
    %s114 = sphi 0, %s98
    %s120 = sphi 0, %s122
    %s123 = sphi 0, %s120
    %s124 = sphi 0, %s123
    %s140 = sphi 0, %s124
  $region4: #{block_builder_forward.4} parent=0 // loop_header_branch
    %14 = sbr.rel (%p12) target = $region8
  $region5: #{block_builder_forward.4} parent=0 // loop_body
    %s16 = ssub.s32 %s11, 1
    %s17 = ssub.s32 %s11, 2
    %s18 = sadd.s32 %s11, 1
    %s19 = ssub.s32 %s11, %s18
    %p20 = scmp.eq.s32.totalorder %s19, 0
    %s22 = sadd.s32 %s21, 1
    %s23 = scalar_select %p20, %s21, %s22
    %p26 = pneg %p20
    %p27 = scmp.eq.s32.totalorder %s11, 1
    %p28 = por %p26, %p27
    %p29 = scmp.ne.s32.totalorder %s21, %s24
    %p30 = scmp.eq.s32.totalorder %s11, 0
    %p31 = por %p29, %p30
    %p32 = scmp.ne.s32.totalorder %s21, %s24
    %p33 = scmp.eq.s32.totalorder %s16, 1
    %p34 = por %p32, %p33
    %p35 = scmp.ne.s32.totalorder %s24, %s25
    %p36 = scmp.eq.s32.totalorder %s16, 0
    %p37 = por %p35, %p36
    %p38 = scmp.ne.s32.totalorder %s24, %s25
    %p39 = scmp.eq.s32.totalorder %s17, 1
    %p40 = por %p38, %p39
    %p42 = scmp.ne.s32.totalorder %s25, %s41
    %p43 = scmp.eq.s32.totalorder %s17, 0
    %p44 = por %p42, %p43
    %s46 = sadd.s32 %s45, 1
    %p49 = scmp.eq.s32.totalorder %s11, 1
    %p50 = scmp.ne.s32.totalorder %s45, %s47
    %p51 = scmp.eq.s32.totalorder %s11, 0
    %p52 = por %p50, %p51
    %p53 = scmp.ne.s32.totalorder %s45, %s47
    %p54 = scmp.eq.s32.totalorder %s16, 1
    %p55 = por %p53, %p54
    %p56 = scmp.ne.s32.totalorder %s47, %s48
    %p57 = scmp.eq.s32.totalorder %s16, 0
    %p58 = por %p56, %p57
    %p59 = scmp.ne.s32.totalorder %s47, %s48
    %p60 = scmp.eq.s32.totalorder %s17, 1
    %p61 = por %p59, %p60
    %p63 = scmp.ne.s32.totalorder %s48, %s62
    %p64 = scmp.eq.s32.totalorder %s17, 0
    %p65 = por %p63, %p64
    %s66 = ssub.s32 %s11, %s18
    %p67 = scmp.eq.s32.totalorder %s66, 0
    %s69 = sadd.s32 %s68, 1
    %s70 = scalar_select %p67, %s68, %s69
    %p73 = pneg %p67
    %p74 = scmp.eq.s32.totalorder %s11, 1
    %p75 = por %p73, %p74
    %p76 = scmp.ne.s32.totalorder %s68, %s71
    %p77 = scmp.eq.s32.totalorder %s11, 0
    %p78 = por %p76, %p77
    %p79 = scmp.ne.s32.totalorder %s68, %s71
    %p80 = scmp.eq.s32.totalorder %s16, 1
    %p81 = por %p79, %p80
    %p82 = scmp.ne.s32.totalorder %s71, %s72
    %p83 = scmp.eq.s32.totalorder %s16, 0
    %p84 = por %p82, %p83
    %p85 = scmp.ne.s32.totalorder %s71, %s72
    %p86 = scmp.eq.s32.totalorder %s17, 1
    %p87 = por %p85, %p86
    %p89 = scmp.ne.s32.totalorder %s72, %s88
    %p90 = scmp.eq.s32.totalorder %s17, 0
    %p91 = por %p89, %p90
    %s92 = ssub.s32 %s11, %s18
    %p93 = scmp.eq.s32.totalorder %s92, 0
    %s95 = sadd.s32 %s94, 1
    %s96 = scalar_select %p93, %s94, %s95
    %p99 = pneg %p93
    %p100 = scmp.eq.s32.totalorder %s11, 1
    %p101 = por %p99, %p100
    %p102 = scmp.ne.s32.totalorder %s94, %s97
    %p103 = scmp.eq.s32.totalorder %s11, 0
    %p104 = por %p102, %p103
    %p105 = scmp.ne.s32.totalorder %s94, %s97
    %p106 = scmp.eq.s32.totalorder %s16, 1
    %p107 = por %p105, %p106
    %p108 = scmp.ne.s32.totalorder %s97, %s98
    %p109 = scmp.eq.s32.totalorder %s16, 0
    %p110 = por %p108, %p109
    %p111 = scmp.ne.s32.totalorder %s97, %s98
    %p112 = scmp.eq.s32.totalorder %s17, 1
    %p113 = por %p111, %p112
    %p115 = scmp.ne.s32.totalorder %s98, %s114
    %p116 = scmp.eq.s32.totalorder %s17, 0
    %p117 = por %p115, %p116
    %s118 = ssub.s32 %s11, %s18
    %p119 = scmp.eq.s32.totalorder %s118, 0
    %s121 = sadd.s32 %s120, 1
    %s122 = scalar_select %p119, %s120, %s121
    %p125 = pneg %p119
    %p126 = scmp.eq.s32.totalorder %s11, 1
    %p127 = por %p125, %p126
    %p128 = scmp.ne.s32.totalorder %s120, %s123
    %p129 = scmp.eq.s32.totalorder %s11, 0
    %p130 = por %p128, %p129
    %p131 = scmp.ne.s32.totalorder %s120, %s123
    %p132 = scmp.eq.s32.totalorder %s16, 1
    %p133 = por %p131, %p132
    %p134 = scmp.ne.s32.totalorder %s123, %s124
    %p135 = scmp.eq.s32.totalorder %s16, 0
    %p136 = por %p134, %p135
    %p137 = scmp.ne.s32.totalorder %s123, %s124
    %p138 = scmp.eq.s32.totalorder %s17, 1
    %p139 = por %p137, %p138
    %p141 = scmp.ne.s32.totalorder %s124, %s140
    %p142 = scmp.eq.s32.totalorder %s17, 0
    %p143 = por %p141, %p142
    %p144 = scmp.le.s32.totalorder 1, %s11
    %p145 = scmp.lt.s32.totalorder %s11, 3
    %p146 = pnand %p144, %p145
    %p147 = pneg %p146
    // Predicated region
    $region9: #{block_builder_forward.4} parent=5 // pred_check
      _
    $region10: #{block_builder_forward.4} parent=5 // pred_check_branch
      %149 = sbr.rel (%p146) target = $region12
    $region11: #{block_builder_forward.4} parent=5 // pred_region
      %s150 = ssub.s32 %s11, 1
      // Predicated region
      $region13: #{block_builder_forward.4} parent=11 // pred_check
        %p151 = pneg %p58
      $region14: #{block_builder_forward.4} parent=11 // pred_check_branch
        %153 = sbr.rel (%p151) target = $region16
      $region15: #{block_builder_forward.4} parent=11 // pred_region
        _
      $region16: #{block_builder_forward.4} parent=11 // pred_fallthru
        _
    $region12: #{block_builder_forward.4} parent=5 // pred_fallthru
      _
    %p154 = scmp.lt.s32.totalorder %s11, 2
    // Predicated region
    $region17: #{block_builder_forward.4} parent=5 // pred_check
      %p155 = pneg %p154
    $region18: #{block_builder_forward.4} parent=5 // pred_check_branch
      %157 = sbr.rel (%p155) target = $region20
    $region19: #{block_builder_forward.4} parent=5 // pred_region
      // Predicated region
      $region21: #{block_builder_forward.4} parent=19 // pred_check
        %p158 = pneg %p31
      $region22: #{block_builder_forward.4} parent=19 // pred_check_branch
        %160 = sbr.rel (%p158) target = $region24
      $region23: #{block_builder_forward.4} parent=19 // pred_region
        %p161 = scmp.lt.s32.totalorder %s11, 1
        %s162 = scalar_select %p161, %s11, 1
        %s163 = smul.addr %s162, 32
        %s164 = smul.addr %s163, 4
        %s165 = scalar_lea.vmem %s0, %s164
      $region24: #{block_builder_forward.4} parent=19 // pred_fallthru
        _
    $region20: #{block_builder_forward.4} parent=5 // pred_fallthru
      _
    %p166 = scmp.le.s32.totalorder 1, %s11
    %p167 = scmp.lt.s32.totalorder %s11, 3
    %p168 = pnand %p166, %p167
    %p169 = pneg %p168
    // Predicated region
    $region25: #{block_builder_forward.4} parent=5 // pred_check
      _
    $region26: #{block_builder_forward.4} parent=5 // pred_check_branch
      %171 = sbr.rel (%p168) target = $region28
    $region27: #{block_builder_forward.4} parent=5 // pred_region
      %s172 = ssub.s32 %s11, 1
      %p173 = scmp.lt.s32.totalorder %s16, 1
      %s174 = scalar_select %p173, %s16, 1
      %s175 = smul.addr %s174, 32
      %s176 = smul.addr %s175, 4
      %s177 = scalar_lea.vmem %s0, %s176
      %p178 = pneg %p37
      %p179 = pneg %p34
      %p180 = pneg %p58
      %p181 = pneg %p55
      %p182 = pneg %p84
      %p183 = pneg %p81
      %p184 = scmp.lt.s32.totalorder %s16, 1
      %s185 = scalar_select %p184, %s16, 1
      %s186 = smul.addr %s185, 32
      %s187 = smul.addr %s186, 8
      %s188 = scalar_lea.vmem %s2, %s187
      %p189 = pneg %p110
      %p190 = pneg %p107
      %p191 = scmp.lt.s32.totalorder %s16, 1
      %s192 = scalar_select %p191, %s16, 1
      %s193 = scalar_lea.vmem %s3, %s192
      %p194 = pneg %p136
      %p195 = pneg %p133
      %p196 = scmp.lt.s32.totalorder %s16, 1
      %s197 = scalar_select %p196, %s16, 1
      %s198 = scalar_lea.vmem %s4, %s197
      %p199 = scmp.lt.s32.totalorder %s16, 1
      %s200 = scalar_select %p199, %s16, 1
      %s201 = smul.addr %s200, 32
      %s202 = smul.addr %s201, 4
      %s203 = scalar_lea.vmem %s0, %s202
      %p204 = scmp.lt.s32.totalorder %s16, 1
      %s205 = scalar_select %p204, %s16, 1
      %s206 = smul.addr %s205, 32
      %s207 = smul.addr %s206, 8
      %s208 = scalar_lea.vmem %s2, %s207
      %p209 = scmp.lt.s32.totalorder %s16, 1
      %s210 = scalar_select %p209, %s16, 1
      %s211 = scalar_lea.vmem %s3, %s210
      %p212 = scmp.lt.s32.totalorder %s16, 1
      %s213 = scalar_select %p212, %s16, 1
      %s214 = scalar_lea.vmem %s4, %s213
      %216 = vst [vmem:[#allocation2] sm:$0xff] 0
      %217 = vst [vmem:[#allocation2 + $0x8] sm:$0xff] 0
      %218 = vst [vmem:[#allocation2 + $0x10] sm:$0xff] 0
      %219 = vst [vmem:[#allocation2 + $0x18] sm:$0xff] 0
      %220 = vst [vmem:[#allocation2 + $0x20] sm:$0xff] 0
      %221 = vst [vmem:[#allocation2 + $0x28] sm:$0xff] 0
      %222 = vst [vmem:[#allocation2 + $0x30] sm:$0xff] 0
      %223 = vst [vmem:[#allocation2 + $0x38] sm:$0xff] 0
      %224 = vst [vmem:[#allocation2 + $0x40] sm:$0xff] 0
      %225 = vst [vmem:[#allocation2 + $0x48] sm:$0xff] 0
      %226 = vst [vmem:[#allocation2 + $0x50] sm:$0xff] 0
      %227 = vst [vmem:[#allocation2 + $0x58] sm:$0xff] 0
      %228 = vst [vmem:[#allocation2 + $0x60] sm:$0xff] 0
      %229 = vst [vmem:[#allocation2 + $0x68] sm:$0xff] 0
      %230 = vst [vmem:[#allocation2 + $0x70] sm:$0xff] 0
      %231 = vst [vmem:[#allocation2 + $0x78] sm:$0xff] 0
      %232 = vst [vmem:[#allocation2 + $0x80] sm:$0xff] 0
      %233 = vst [vmem:[#allocation2 + $0x88] sm:$0xff] 0
      %234 = vst [vmem:[#allocation2 + $0x90] sm:$0xff] 0
      %235 = vst [vmem:[#allocation2 + $0x98] sm:$0xff] 0
      %236 = vst [vmem:[#allocation2 + $0xa0] sm:$0xff] 0
      %237 = vst [vmem:[#allocation2 + $0xa8] sm:$0xff] 0
      %238 = vst [vmem:[#allocation2 + $0xb0] sm:$0xff] 0
      %239 = vst [vmem:[#allocation2 + $0xb8] sm:$0xff] 0
      %240 = vst [vmem:[#allocation2 + $0xc0] sm:$0xff] 0
      %241 = vst [vmem:[#allocation2 + $0xc8] sm:$0xff] 0
      %242 = vst [vmem:[#allocation2 + $0xd0] sm:$0xff] 0
      %243 = vst [vmem:[#allocation2 + $0xd8] sm:$0xff] 0
      %244 = vst [vmem:[#allocation2 + $0xe0] sm:$0xff] 0
      %245 = vst [vmem:[#allocation2 + $0xe8] sm:$0xff] 0
      %246 = vst [vmem:[#allocation2 + $0xf0] sm:$0xff] 0
      %247 = vst [vmem:[#allocation2 + $0xf8] sm:$0xff] 0
      %248 = vst [vmem:[#allocation2 + $0x100] sm:$0xff] 0
      %249 = vst [vmem:[#allocation2 + $0x108] sm:$0xff] 0
      %250 = vst [vmem:[#allocation2 + $0x110] sm:$0xff] 0
      %251 = vst [vmem:[#allocation2 + $0x118] sm:$0xff] 0
      %252 = vst [vmem:[#allocation2 + $0x120] sm:$0xff] 0
      %253 = vst [vmem:[#allocation2 + $0x128] sm:$0xff] 0
      %254 = vst [vmem:[#allocation2 + $0x130] sm:$0xff] 0
      %255 = vst [vmem:[#allocation2 + $0x138] sm:$0xff] 0
      %256 = vst [vmem:[#allocation2 + $0x140] sm:$0xff] 0
      %257 = vst [vmem:[#allocation2 + $0x148] sm:$0xff] 0
      %258 = vst [vmem:[#allocation2 + $0x150] sm:$0xff] 0
      %259 = vst [vmem:[#allocation2 + $0x158] sm:$0xff] 0
      %260 = vst [vmem:[#allocation2 + $0x160] sm:$0xff] 0
      %261 = vst [vmem:[#allocation2 + $0x168] sm:$0xff] 0
      %262 = vst [vmem:[#allocation2 + $0x170] sm:$0xff] 0
      %263 = vst [vmem:[#allocation2 + $0x178] sm:$0xff] 0
      %264 = vst [vmem:[#allocation2 + $0x180] sm:$0xff] 0
      %265 = vst [vmem:[#allocation2 + $0x188] sm:$0xff] 0
      %266 = vst [vmem:[#allocation2 + $0x190] sm:$0xff] 0
      %267 = vst [vmem:[#allocation2 + $0x198] sm:$0xff] 0
      %268 = vst [vmem:[#allocation2 + $0x1a0] sm:$0xff] 0
      %269 = vst [vmem:[#allocation2 + $0x1a8] sm:$0xff] 0
      %270 = vst [vmem:[#allocation2 + $0x1b0] sm:$0xff] 0
      %271 = vst [vmem:[#allocation2 + $0x1b8] sm:$0xff] 0
      %272 = vst [vmem:[#allocation2 + $0x1c0] sm:$0xff] 0
      %273 = vst [vmem:[#allocation2 + $0x1c8] sm:$0xff] 0
      %274 = vst [vmem:[#allocation2 + $0x1d0] sm:$0xff] 0
      %275 = vst [vmem:[#allocation2 + $0x1d8] sm:$0xff] 0
      %276 = vst [vmem:[#allocation2 + $0x1e0] sm:$0xff] 0
      %277 = vst [vmem:[#allocation2 + $0x1e8] sm:$0xff] 0
      %278 = vst [vmem:[#allocation2 + $0x1f0] sm:$0xff] 0
      %279 = vst [vmem:[#allocation2 + $0x1f8] sm:$0xff] 0
      %v280 = vld [vmem:[%s203] sm:$0xf]
      %v281 = vld [vmem:[%s203 + $0x4] sm:$0xf]
      %v282 = vld [vmem:[%s203 + $0x8] sm:$0xf]
      %v283 = vld [vmem:[%s203 + $0xc] sm:$0xf]
      %v284 = vld [vmem:[%s203 + $0x10] sm:$0xf]
      %v285 = vld [vmem:[%s203 + $0x14] sm:$0xf]
      %v286 = vld [vmem:[%s203 + $0x18] sm:$0xf]
      %v287 = vld [vmem:[%s203 + $0x1c] sm:$0xf]
      %v288 = vld [vmem:[%s203 + $0x20] sm:$0xf]
      %v289 = vld [vmem:[%s203 + $0x24] sm:$0xf]
      %v290 = vld [vmem:[%s203 + $0x28] sm:$0xf]
      %v291 = vld [vmem:[%s203 + $0x2c] sm:$0xf]
      %v292 = vld [vmem:[%s203 + $0x30] sm:$0xf]
      %v293 = vld [vmem:[%s203 + $0x34] sm:$0xf]
      %v294 = vld [vmem:[%s203 + $0x38] sm:$0xf]
      %v295 = vld [vmem:[%s203 + $0x3c] sm:$0xf]
      %v296 = vld [vmem:[%s203 + $0x40] sm:$0xf]
      %v297 = vld [vmem:[%s203 + $0x44] sm:$0xf]
      %v298 = vld [vmem:[%s203 + $0x48] sm:$0xf]
      %v299 = vld [vmem:[%s203 + $0x4c] sm:$0xf]
      %v300 = vld [vmem:[%s203 + $0x50] sm:$0xf]
      %v301 = vld [vmem:[%s203 + $0x54] sm:$0xf]
      %v302 = vld [vmem:[%s203 + $0x58] sm:$0xf]
      %v303 = vld [vmem:[%s203 + $0x5c] sm:$0xf]
      %v304 = vld [vmem:[%s203 + $0x60] sm:$0xf]
      %v305 = vld [vmem:[%s203 + $0x64] sm:$0xf]
      %v306 = vld [vmem:[%s203 + $0x68] sm:$0xf]
      %v307 = vld [vmem:[%s203 + $0x6c] sm:$0xf]
      %v308 = vld [vmem:[%s203 + $0x70] sm:$0xf]
      %v309 = vld [vmem:[%s203 + $0x74] sm:$0xf]
      %v310 = vld [vmem:[%s203 + $0x78] sm:$0xf]
      %v311 = vld [vmem:[%s203 + $0x7c] sm:$0xf]
      %v344 = vunpack.c.l.b16 %v280
      %v345 = vunpack.c.l.b16 %v281
      %v346 = vunpack.c.l.b16 %v282
      %v347 = vunpack.c.l.b16 %v283
      %v348 = vunpack.c.l.b16 %v284
      %v349 = vunpack.c.l.b16 %v285
      %v350 = vunpack.c.l.b16 %v286
      %v351 = vunpack.c.l.b16 %v287
      %v352 = vunpack.c.l.b16 %v288
      %v353 = vunpack.c.l.b16 %v289
      %v354 = vunpack.c.l.b16 %v290
      %v355 = vunpack.c.l.b16 %v291
      %v356 = vunpack.c.l.b16 %v292
      %v357 = vunpack.c.l.b16 %v293
      %v358 = vunpack.c.l.b16 %v294
      %v359 = vunpack.c.l.b16 %v295
      %v360 = vunpack.c.l.b16 %v296
      %v361 = vunpack.c.l.b16 %v297
      %v362 = vunpack.c.l.b16 %v298
      %v363 = vunpack.c.l.b16 %v299
      %v364 = vunpack.c.l.b16 %v300
      %v365 = vunpack.c.l.b16 %v301
      %v366 = vunpack.c.l.b16 %v302
      %v367 = vunpack.c.l.b16 %v303
      %v368 = vunpack.c.l.b16 %v304
      %v369 = vunpack.c.l.b16 %v305
      %v370 = vunpack.c.l.b16 %v306
      %v371 = vunpack.c.l.b16 %v307
      %v372 = vunpack.c.l.b16 %v308
      %v373 = vunpack.c.l.b16 %v309
      %v374 = vunpack.c.l.b16 %v310
      %v375 = vunpack.c.l.b16 %v311
      %v376 = vpack.c.b16 %v344, %v344
      %v377 = vpack.c.b16 %v345, %v345
      %v378 = vpack.c.b16 %v346, %v346
      %v379 = vpack.c.b16 %v347, %v347
      %v380 = vpack.c.b16 %v348, %v348
      %v381 = vpack.c.b16 %v349, %v349
      %v382 = vpack.c.b16 %v350, %v350
      %v383 = vpack.c.b16 %v351, %v351
      %v384 = vpack.c.b16 %v352, %v352
      %v385 = vpack.c.b16 %v353, %v353
      %v386 = vpack.c.b16 %v354, %v354
      %v387 = vpack.c.b16 %v355, %v355
      %v388 = vpack.c.b16 %v356, %v356
      %v389 = vpack.c.b16 %v357, %v357
      %v390 = vpack.c.b16 %v358, %v358
      %v391 = vpack.c.b16 %v359, %v359
      %v392 = vpack.c.b16 %v360, %v360
      %v393 = vpack.c.b16 %v361, %v361
      %v394 = vpack.c.b16 %v362, %v362
      %v395 = vpack.c.b16 %v363, %v363
      %v396 = vpack.c.b16 %v364, %v364
      %v397 = vpack.c.b16 %v365, %v365
      %v398 = vpack.c.b16 %v366, %v366
      %v399 = vpack.c.b16 %v367, %v367
      %v400 = vpack.c.b16 %v368, %v368
      %v401 = vpack.c.b16 %v369, %v369
      %v402 = vpack.c.b16 %v370, %v370
      %v403 = vpack.c.b16 %v371, %v371
      %v404 = vpack.c.b16 %v372, %v372
      %v405 = vpack.c.b16 %v373, %v373
      %v406 = vpack.c.b16 %v374, %v374
      %v407 = vpack.c.b16 %v375, %v375
      %s440 = scalar_lea.vmem [#allocation2], 128
      %441 = vst [vmem:[%s440] sm:$0xf0] %v376
      %442 = vst [vmem:[%s440 + $0x8] sm:$0xf] %v377
      %443 = vst [vmem:[%s440 + $0x10] sm:$0xf0] %v378
      %444 = vst [vmem:[%s440 + $0x18] sm:$0xf] %v379
      %445 = vst [vmem:[%s440 + $0x20] sm:$0xf0] %v380
      %446 = vst [vmem:[%s440 + $0x28] sm:$0xf] %v381
      %447 = vst [vmem:[%s440 + $0x30] sm:$0xf0] %v382
      %448 = vst [vmem:[%s440 + $0x38] sm:$0xf] %v383
      %449 = vst [vmem:[%s440 + $0x40] sm:$0xf0] %v384
      %450 = vst [vmem:[%s440 + $0x48] sm:$0xf] %v385
      %451 = vst [vmem:[%s440 + $0x50] sm:$0xf0] %v386
      %452 = vst [vmem:[%s440 + $0x58] sm:$0xf] %v387
      %453 = vst [vmem:[%s440 + $0x60] sm:$0xf0] %v388
      %454 = vst [vmem:[%s440 + $0x68] sm:$0xf] %v389
      %455 = vst [vmem:[%s440 + $0x70] sm:$0xf0] %v390
      %456 = vst [vmem:[%s440 + $0x78] sm:$0xf] %v391
      %457 = vst [vmem:[%s440 + $0x80] sm:$0xf0] %v392
      %458 = vst [vmem:[%s440 + $0x88] sm:$0xf] %v393
      %459 = vst [vmem:[%s440 + $0x90] sm:$0xf0] %v394
      %460 = vst [vmem:[%s440 + $0x98] sm:$0xf] %v395
      %461 = vst [vmem:[%s440 + $0xa0] sm:$0xf0] %v396
      %462 = vst [vmem:[%s440 + $0xa8] sm:$0xf] %v397
      %463 = vst [vmem:[%s440 + $0xb0] sm:$0xf0] %v398
      %464 = vst [vmem:[%s440 + $0xb8] sm:$0xf] %v399
      %465 = vst [vmem:[%s440 + $0xc0] sm:$0xf0] %v400
      %466 = vst [vmem:[%s440 + $0xc8] sm:$0xf] %v401
      %467 = vst [vmem:[%s440 + $0xd0] sm:$0xf0] %v402
      %468 = vst [vmem:[%s440 + $0xd8] sm:$0xf] %v403
      %469 = vst [vmem:[%s440 + $0xe0] sm:$0xf0] %v404
      %470 = vst [vmem:[%s440 + $0xe8] sm:$0xf] %v405
      %471 = vst [vmem:[%s440 + $0xf0] sm:$0xf0] %v406
      %472 = vst [vmem:[%s440 + $0xf8] sm:$0xf] %v407
      %s473 = scalar_lea.vmem [#allocation2], 112
      %v474 = vld [vmem:[%s473] sm:$0xf8]
      %v475 = vld [vmem:[%s473 + $0x8] sm:$0xf]
      %v476 = vld [vmem:[%s473 + $0x10] sm:$0xf8]
      %v477 = vld [vmem:[%s473 + $0x18] sm:$0xf]
      %v478 = vld [vmem:[%s473 + $0x20] sm:$0xf8]
      %v479 = vld [vmem:[%s473 + $0x28] sm:$0xf]
      %v480 = vld [vmem:[%s473 + $0x30] sm:$0xf8]
      %v481 = vld [vmem:[%s473 + $0x38] sm:$0xf]
      %v482 = vld [vmem:[%s473 + $0x40] sm:$0xf8]
      %v483 = vld [vmem:[%s473 + $0x48] sm:$0xf]
      %v484 = vld [vmem:[%s473 + $0x50] sm:$0xf8]
      %v485 = vld [vmem:[%s473 + $0x58] sm:$0xf]
      %v486 = vld [vmem:[%s473 + $0x60] sm:$0xf8]
      %v487 = vld [vmem:[%s473 + $0x68] sm:$0xf]
      %v488 = vld [vmem:[%s473 + $0x70] sm:$0xf8]
      %v489 = vld [vmem:[%s473 + $0x78] sm:$0xf]
      %v490 = vld [vmem:[%s473 + $0x80] sm:$0xf8]
      %v491 = vld [vmem:[%s473 + $0x88] sm:$0xf]
      %v492 = vld [vmem:[%s473 + $0x90] sm:$0xf8]
      %v493 = vld [vmem:[%s473 + $0x98] sm:$0xf]
      %v494 = vld [vmem:[%s473 + $0xa0] sm:$0xf8]
      %v495 = vld [vmem:[%s473 + $0xa8] sm:$0xf]
      %v496 = vld [vmem:[%s473 + $0xb0] sm:$0xf8]
      %v497 = vld [vmem:[%s473 + $0xb8] sm:$0xf]
      %v498 = vld [vmem:[%s473 + $0xc0] sm:$0xf8]
      %v499 = vld [vmem:[%s473 + $0xc8] sm:$0xf]
      %v500 = vld [vmem:[%s473 + $0xd0] sm:$0xf8]
      %v501 = vld [vmem:[%s473 + $0xd8] sm:$0xf]
      %v502 = vld [vmem:[%s473 + $0xe0] sm:$0xf8]
      %v503 = vld [vmem:[%s473 + $0xe8] sm:$0xf]
      %v504 = vld [vmem:[%s473 + $0xf0] sm:$0xf8]
      %v505 = vld [vmem:[%s473 + $0xf8] sm:$0xf]
      %vm506 = vsmask.f32 4352
      %v508 = vshrl.u32 %v474, 16
      %v510 = vrot.slane %v508, 3
      %v511 = vshll.u32 %v474, 16
      %v513 = vrot.slane %v511, 4
      %v514 = vor.u32 %v510, %v513
      %v516 = vshrl.u32 %v475, 16
      %v518 = vrot.slane %v516, 3
      %v519 = vshll.u32 %v475, 16
      %v521 = vrot.slane %v519, 4
      %v522 = vor.u32 %v518, %v521
      %v523 = vsel %vm506, %v514, %v522
      %v525 = vshrl.u32 %v476, 16
      %v527 = vrot.slane %v525, 3
      %v528 = vshll.u32 %v476, 16
      %v530 = vrot.slane %v528, 4
      %v531 = vor.u32 %v527, %v530
      %v533 = vshrl.u32 %v477, 16
      %v535 = vrot.slane %v533, 3
      %v536 = vshll.u32 %v477, 16
      %v538 = vrot.slane %v536, 4
      %v539 = vor.u32 %v535, %v538
      %v540 = vsel %vm506, %v531, %v539
      %v542 = vshrl.u32 %v478, 16
      %v544 = vrot.slane %v542, 3
      %v545 = vshll.u32 %v478, 16
      %v547 = vrot.slane %v545, 4
      %v548 = vor.u32 %v544, %v547
      %v550 = vshrl.u32 %v479, 16
      %v552 = vrot.slane %v550, 3
      %v553 = vshll.u32 %v479, 16
      %v555 = vrot.slane %v553, 4
      %v556 = vor.u32 %v552, %v555
      %v557 = vsel %vm506, %v548, %v556
      %v559 = vshrl.u32 %v480, 16
      %v561 = vrot.slane %v559, 3
      %v562 = vshll.u32 %v480, 16
      %v564 = vrot.slane %v562, 4
      %v565 = vor.u32 %v561, %v564
      %v567 = vshrl.u32 %v481, 16
      %v569 = vrot.slane %v567, 3
      %v570 = vshll.u32 %v481, 16
      %v572 = vrot.slane %v570, 4
      %v573 = vor.u32 %v569, %v572
      %v574 = vsel %vm506, %v565, %v573
      %v576 = vshrl.u32 %v482, 16
      %v578 = vrot.slane %v576, 3
      %v579 = vshll.u32 %v482, 16
      %v581 = vrot.slane %v579, 4
      %v582 = vor.u32 %v578, %v581
      %v584 = vshrl.u32 %v483, 16
      %v586 = vrot.slane %v584, 3
      %v587 = vshll.u32 %v483, 16
      %v589 = vrot.slane %v587, 4
      %v590 = vor.u32 %v586, %v589
      %v591 = vsel %vm506, %v582, %v590
      %v593 = vshrl.u32 %v484, 16
      %v595 = vrot.slane %v593, 3
      %v596 = vshll.u32 %v484, 16
      %v598 = vrot.slane %v596, 4
      %v599 = vor.u32 %v595, %v598
      %v601 = vshrl.u32 %v485, 16
      %v603 = vrot.slane %v601, 3
      %v604 = vshll.u32 %v485, 16
      %v606 = vrot.slane %v604, 4
      %v607 = vor.u32 %v603, %v606
      %v608 = vsel %vm506, %v599, %v607
      %v610 = vshrl.u32 %v486, 16
      %v612 = vrot.slane %v610, 3
      %v613 = vshll.u32 %v486, 16
      %v615 = vrot.slane %v613, 4
      %v616 = vor.u32 %v612, %v615
      %v618 = vshrl.u32 %v487, 16
      %v620 = vrot.slane %v618, 3
      %v621 = vshll.u32 %v487, 16
      %v623 = vrot.slane %v621, 4
      %v624 = vor.u32 %v620, %v623
      %v625 = vsel %vm506, %v616, %v624
      %v627 = vshrl.u32 %v488, 16
      %v629 = vrot.slane %v627, 3
      %v630 = vshll.u32 %v488, 16
      %v632 = vrot.slane %v630, 4
      %v633 = vor.u32 %v629, %v632
      %v635 = vshrl.u32 %v489, 16
      %v637 = vrot.slane %v635, 3
      %v638 = vshll.u32 %v489, 16
      %v640 = vrot.slane %v638, 4
      %v641 = vor.u32 %v637, %v640
      %v642 = vsel %vm506, %v633, %v641
      %v644 = vshrl.u32 %v490, 16
      %v646 = vrot.slane %v644, 3
      %v647 = vshll.u32 %v490, 16
      %v649 = vrot.slane %v647, 4
      %v650 = vor.u32 %v646, %v649
      %v652 = vshrl.u32 %v491, 16
      %v654 = vrot.slane %v652, 3
      %v655 = vshll.u32 %v491, 16
      %v657 = vrot.slane %v655, 4
      %v658 = vor.u32 %v654, %v657
      %v659 = vsel %vm506, %v650, %v658
      %v661 = vshrl.u32 %v492, 16
      %v663 = vrot.slane %v661, 3
      %v664 = vshll.u32 %v492, 16
      %v666 = vrot.slane %v664, 4
      %v667 = vor.u32 %v663, %v666
      %v669 = vshrl.u32 %v493, 16
      %v671 = vrot.slane %v669, 3
      %v672 = vshll.u32 %v493, 16
      %v674 = vrot.slane %v672, 4
      %v675 = vor.u32 %v671, %v674
      %v676 = vsel %vm506, %v667, %v675
      %v678 = vshrl.u32 %v494, 16
      %v680 = vrot.slane %v678, 3
      %v681 = vshll.u32 %v494, 16
      %v683 = vrot.slane %v681, 4
      %v684 = vor.u32 %v680, %v683
      %v686 = vshrl.u32 %v495, 16
      %v688 = vrot.slane %v686, 3
      %v689 = vshll.u32 %v495, 16
      %v691 = vrot.slane %v689, 4
      %v692 = vor.u32 %v688, %v691
      %v693 = vsel %vm506, %v684, %v692
      %v695 = vshrl.u32 %v496, 16
      %v697 = vrot.slane %v695, 3
      %v698 = vshll.u32 %v496, 16
      %v700 = vrot.slane %v698, 4
      %v701 = vor.u32 %v697, %v700
      %v703 = vshrl.u32 %v497, 16
      %v705 = vrot.slane %v703, 3
      %v706 = vshll.u32 %v497, 16
      %v708 = vrot.slane %v706, 4
      %v709 = vor.u32 %v705, %v708
      %v710 = vsel %vm506, %v701, %v709
      %v712 = vshrl.u32 %v498, 16
      %v714 = vrot.slane %v712, 3
      %v715 = vshll.u32 %v498, 16
      %v717 = vrot.slane %v715, 4
      %v718 = vor.u32 %v714, %v717
      %v720 = vshrl.u32 %v499, 16
      %v722 = vrot.slane %v720, 3
      %v723 = vshll.u32 %v499, 16
      %v725 = vrot.slane %v723, 4
      %v726 = vor.u32 %v722, %v725
      %v727 = vsel %vm506, %v718, %v726
      %v729 = vshrl.u32 %v500, 16
      %v731 = vrot.slane %v729, 3
      %v732 = vshll.u32 %v500, 16
      %v734 = vrot.slane %v732, 4
      %v735 = vor.u32 %v731, %v734
      %v737 = vshrl.u32 %v501, 16
      %v739 = vrot.slane %v737, 3
      %v740 = vshll.u32 %v501, 16
      %v742 = vrot.slane %v740, 4
      %v743 = vor.u32 %v739, %v742
      %v744 = vsel %vm506, %v735, %v743
      %v746 = vshrl.u32 %v502, 16
      %v748 = vrot.slane %v746, 3
      %v749 = vshll.u32 %v502, 16
      %v751 = vrot.slane %v749, 4
      %v752 = vor.u32 %v748, %v751
      %v754 = vshrl.u32 %v503, 16
      %v756 = vrot.slane %v754, 3
      %v757 = vshll.u32 %v503, 16
      %v759 = vrot.slane %v757, 4
      %v760 = vor.u32 %v756, %v759
      %v761 = vsel %vm506, %v752, %v760
      %v763 = vshrl.u32 %v504, 16
      %v765 = vrot.slane %v763, 3
      %v766 = vshll.u32 %v504, 16
      %v768 = vrot.slane %v766, 4
      %v769 = vor.u32 %v765, %v768
      %v771 = vshrl.u32 %v505, 16
      %v773 = vrot.slane %v771, 3
      %v774 = vshll.u32 %v505, 16
      %v776 = vrot.slane %v774, 4
      %v777 = vor.u32 %v773, %v776
      %v778 = vsel %vm506, %v769, %v777
      %795 = vst [vmem:[#allocation3] sm:$0xff] %v523
      %796 = vst [vmem:[#allocation3 + $0x48] sm:$0xff] %v540
      %797 = vst [vmem:[#allocation3 + $0x90] sm:$0xff] %v557
      %798 = vst [vmem:[#allocation3 + $0xd8] sm:$0xff] %v574
      %799 = vst [vmem:[#allocation3 + $0x120] sm:$0xff] %v591
      %800 = vst [vmem:[#allocation3 + $0x168] sm:$0xff] %v608
      %801 = vst [vmem:[#allocation3 + $0x1b0] sm:$0xff] %v625
      %802 = vst [vmem:[#allocation3 + $0x1f8] sm:$0xff] %v642
      %803 = vst [vmem:[#allocation3 + $0x240] sm:$0xff] %v659
      %804 = vst [vmem:[#allocation3 + $0x288] sm:$0xff] %v676
      %805 = vst [vmem:[#allocation3 + $0x2d0] sm:$0xff] %v693
      %806 = vst [vmem:[#allocation3 + $0x318] sm:$0xff] %v710
      %807 = vst [vmem:[#allocation3 + $0x360] sm:$0xff] %v727
      %808 = vst [vmem:[#allocation3 + $0x3a8] sm:$0xff] %v744
      %809 = vst [vmem:[#allocation3 + $0x3f0] sm:$0xff] %v761
      %810 = vst [vmem:[#allocation3 + $0x438] sm:$0xff] %v778
      %v811 = vld [vmem:[%s473] sm:$0xf0]
      %v812 = vld [vmem:[%s473 + $0x8] sm:$0xf]
      %v813 = vld [vmem:[%s473 + $0x10] sm:$0xf0]
      %v814 = vld [vmem:[%s473 + $0x18] sm:$0xf]
      %v815 = vld [vmem:[%s473 + $0x20] sm:$0xf0]
      %v816 = vld [vmem:[%s473 + $0x28] sm:$0xf]
      %v817 = vld [vmem:[%s473 + $0x30] sm:$0xf0]
      %v818 = vld [vmem:[%s473 + $0x38] sm:$0xf]
      %v819 = vld [vmem:[%s473 + $0x40] sm:$0xf0]
      %v820 = vld [vmem:[%s473 + $0x48] sm:$0xf]
      %v821 = vld [vmem:[%s473 + $0x50] sm:$0xf0]
      %v822 = vld [vmem:[%s473 + $0x58] sm:$0xf]
      %v823 = vld [vmem:[%s473 + $0x60] sm:$0xf0]
      %v824 = vld [vmem:[%s473 + $0x68] sm:$0xf]
      %v825 = vld [vmem:[%s473 + $0x70] sm:$0xf0]
      %v826 = vld [vmem:[%s473 + $0x78] sm:$0xf]
      %v827 = vld [vmem:[%s473 + $0x80] sm:$0xf0]
      %v828 = vld [vmem:[%s473 + $0x88] sm:$0xf]
      %v829 = vld [vmem:[%s473 + $0x90] sm:$0xf0]
      %v830 = vld [vmem:[%s473 + $0x98] sm:$0xf]
      %v831 = vld [vmem:[%s473 + $0xa0] sm:$0xf0]
      %v832 = vld [vmem:[%s473 + $0xa8] sm:$0xf]
      %v833 = vld [vmem:[%s473 + $0xb0] sm:$0xf0]
      %v834 = vld [vmem:[%s473 + $0xb8] sm:$0xf]
      %v835 = vld [vmem:[%s473 + $0xc0] sm:$0xf0]
      %v836 = vld [vmem:[%s473 + $0xc8] sm:$0xf]
      %v837 = vld [vmem:[%s473 + $0xd0] sm:$0xf0]
      %v838 = vld [vmem:[%s473 + $0xd8] sm:$0xf]
      %v839 = vld [vmem:[%s473 + $0xe0] sm:$0xf0]
      %v840 = vld [vmem:[%s473 + $0xe8] sm:$0xf]
      %v841 = vld [vmem:[%s473 + $0xf0] sm:$0xf0]
      %v842 = vld [vmem:[%s473 + $0xf8] sm:$0xf]
      %vm875 = vcmask 1043456
      %v876 = vrot.slane %v811, 4
      %v877 = vrot.slane %v812, 4
      %v878 = vsel %vm875, %v876, %v877
      %v879 = vrot.slane %v813, 4
      %v880 = vrot.slane %v814, 4
      %v881 = vsel %vm875, %v879, %v880
      %v882 = vrot.slane %v815, 4
      %v883 = vrot.slane %v816, 4
      %v884 = vsel %vm875, %v882, %v883
      %v885 = vrot.slane %v817, 4
      %v886 = vrot.slane %v818, 4
      %v887 = vsel %vm875, %v885, %v886
      %v888 = vrot.slane %v819, 4
      %v889 = vrot.slane %v820, 4
      %v890 = vsel %vm875, %v888, %v889
      %v891 = vrot.slane %v821, 4
      %v892 = vrot.slane %v822, 4
      %v893 = vsel %vm875, %v891, %v892
      %v894 = vrot.slane %v823, 4
      %v895 = vrot.slane %v824, 4
      %v896 = vsel %vm875, %v894, %v895
      %v897 = vrot.slane %v825, 4
      %v898 = vrot.slane %v826, 4
      %v899 = vsel %vm875, %v897, %v898
      %v900 = vrot.slane %v827, 4
      %v901 = vrot.slane %v828, 4
      %v902 = vsel %vm875, %v900, %v901
      %v903 = vrot.slane %v829, 4
      %v904 = vrot.slane %v830, 4
      %v905 = vsel %vm875, %v903, %v904
      %v906 = vrot.slane %v831, 4
      %v907 = vrot.slane %v832, 4
      %v908 = vsel %vm875, %v906, %v907
      %v909 = vrot.slane %v833, 4
      %v910 = vrot.slane %v834, 4
      %v911 = vsel %vm875, %v909, %v910
      %v912 = vrot.slane %v835, 4
      %v913 = vrot.slane %v836, 4
      %v914 = vsel %vm875, %v912, %v913
      %v915 = vrot.slane %v837, 4
      %v916 = vrot.slane %v838, 4
      %v917 = vsel %vm875, %v915, %v916
      %v918 = vrot.slane %v839, 4
      %v919 = vrot.slane %v840, 4
      %v920 = vsel %vm875, %v918, %v919
      %v921 = vrot.slane %v841, 4
      %v922 = vrot.slane %v842, 4
      %v923 = vsel %vm875, %v921, %v922
      %940 = vst [vmem:[#allocation3 + $0x8] sm:$0xff] %v878
      %941 = vst [vmem:[#allocation3 + $0x50] sm:$0xff] %v881
      %942 = vst [vmem:[#allocation3 + $0x98] sm:$0xff] %v884
      %943 = vst [vmem:[#allocation3 + $0xe0] sm:$0xff] %v887
      %944 = vst [vmem:[#allocation3 + $0x128] sm:$0xff] %v890
      %945 = vst [vmem:[#allocation3 + $0x170] sm:$0xff] %v893
      %946 = vst [vmem:[#allocation3 + $0x1b8] sm:$0xff] %v896
      %947 = vst [vmem:[#allocation3 + $0x200] sm:$0xff] %v899
      %948 = vst [vmem:[#allocation3 + $0x248] sm:$0xff] %v902
      %949 = vst [vmem:[#allocation3 + $0x290] sm:$0xff] %v905
      %950 = vst [vmem:[#allocation3 + $0x2d8] sm:$0xff] %v908
      %951 = vst [vmem:[#allocation3 + $0x320] sm:$0xff] %v911
      %952 = vst [vmem:[#allocation3 + $0x368] sm:$0xff] %v914
      %953 = vst [vmem:[#allocation3 + $0x3b0] sm:$0xff] %v917
      %954 = vst [vmem:[#allocation3 + $0x3f8] sm:$0xff] %v920
      %955 = vst [vmem:[#allocation3 + $0x440] sm:$0xff] %v923
      %v956 = vld [vmem:[%s473] sm:$0xf0]
      %v957 = vld [vmem:[%s473 + $0x8] sm:$0x1f]
      %v958 = vld [vmem:[%s473 + $0x10] sm:$0xf0]
      %v959 = vld [vmem:[%s473 + $0x18] sm:$0x1f]
      %v960 = vld [vmem:[%s473 + $0x20] sm:$0xf0]
      %v961 = vld [vmem:[%s473 + $0x28] sm:$0x1f]
      %v962 = vld [vmem:[%s473 + $0x30] sm:$0xf0]
      %v963 = vld [vmem:[%s473 + $0x38] sm:$0x1f]
      %v964 = vld [vmem:[%s473 + $0x40] sm:$0xf0]
      %v965 = vld [vmem:[%s473 + $0x48] sm:$0x1f]
      %v966 = vld [vmem:[%s473 + $0x50] sm:$0xf0]
      %v967 = vld [vmem:[%s473 + $0x58] sm:$0x1f]
      %v968 = vld [vmem:[%s473 + $0x60] sm:$0xf0]
      %v969 = vld [vmem:[%s473 + $0x68] sm:$0x1f]
      %v970 = vld [vmem:[%s473 + $0x70] sm:$0xf0]
      %v971 = vld [vmem:[%s473 + $0x78] sm:$0x1f]
      %v972 = vld [vmem:[%s473 + $0x80] sm:$0xf0]
      %v973 = vld [vmem:[%s473 + $0x88] sm:$0x1f]
      %v974 = vld [vmem:[%s473 + $0x90] sm:$0xf0]
      %v975 = vld [vmem:[%s473 + $0x98] sm:$0x1f]
      %v976 = vld [vmem:[%s473 + $0xa0] sm:$0xf0]
      %v977 = vld [vmem:[%s473 + $0xa8] sm:$0x1f]
      %v978 = vld [vmem:[%s473 + $0xb0] sm:$0xf0]
      %v979 = vld [vmem:[%s473 + $0xb8] sm:$0x1f]
      %v980 = vld [vmem:[%s473 + $0xc0] sm:$0xf0]
      %v981 = vld [vmem:[%s473 + $0xc8] sm:$0x1f]
      %v982 = vld [vmem:[%s473 + $0xd0] sm:$0xf0]
      %v983 = vld [vmem:[%s473 + $0xd8] sm:$0x1f]
      %v984 = vld [vmem:[%s473 + $0xe0] sm:$0xf0]
      %v985 = vld [vmem:[%s473 + $0xe8] sm:$0x1f]
      %v986 = vld [vmem:[%s473 + $0xf0] sm:$0xf0]
      %v987 = vld [vmem:[%s473 + $0xf8] sm:$0x1f]
      %vm988 = vsmask.f32 3328
      %v990 = vshrl.u32 %v956, 16
      %v992 = vrot.slane %v990, 4
      %v993 = vshll.u32 %v956, 16
      %v995 = vrot.slane %v993, 5
      %v996 = vor.u32 %v992, %v995
      %v998 = vshrl.u32 %v957, 16
      %v1000 = vrot.slane %v998, 4
      %v1001 = vshll.u32 %v957, 16
      %v1003 = vrot.slane %v1001, 5
      %v1004 = vor.u32 %v1000, %v1003
      %v1005 = vsel %vm988, %v996, %v1004
      %v1007 = vshrl.u32 %v958, 16
      %v1009 = vrot.slane %v1007, 4
      %v1010 = vshll.u32 %v958, 16
      %v1012 = vrot.slane %v1010, 5
      %v1013 = vor.u32 %v1009, %v1012
      %v1015 = vshrl.u32 %v959, 16
      %v1017 = vrot.slane %v1015, 4
      %v1018 = vshll.u32 %v959, 16
      %v1020 = vrot.slane %v1018, 5
      %v1021 = vor.u32 %v1017, %v1020
      %v1022 = vsel %vm988, %v1013, %v1021
      %v1024 = vshrl.u32 %v960, 16
      %v1026 = vrot.slane %v1024, 4
      %v1027 = vshll.u32 %v960, 16
      %v1029 = vrot.slane %v1027, 5
      %v1030 = vor.u32 %v1026, %v1029
      %v1032 = vshrl.u32 %v961, 16
      %v1034 = vrot.slane %v1032, 4
      %v1035 = vshll.u32 %v961, 16
      %v1037 = vrot.slane %v1035, 5
      %v1038 = vor.u32 %v1034, %v1037
      %v1039 = vsel %vm988, %v1030, %v1038
      %v1041 = vshrl.u32 %v962, 16
      %v1043 = vrot.slane %v1041, 4
      %v1044 = vshll.u32 %v962, 16
      %v1046 = vrot.slane %v1044, 5
      %v1047 = vor.u32 %v1043, %v1046
      %v1049 = vshrl.u32 %v963, 16
      %v1051 = vrot.slane %v1049, 4
      %v1052 = vshll.u32 %v963, 16
      %v1054 = vrot.slane %v1052, 5
      %v1055 = vor.u32 %v1051, %v1054
      %v1056 = vsel %vm988, %v1047, %v1055
      %v1058 = vshrl.u32 %v964, 16
      %v1060 = vrot.slane %v1058, 4
      %v1061 = vshll.u32 %v964, 16
      %v1063 = vrot.slane %v1061, 5
      %v1064 = vor.u32 %v1060, %v1063
      %v1066 = vshrl.u32 %v965, 16
      %v1068 = vrot.slane %v1066, 4
      %v1069 = vshll.u32 %v965, 16
      %v1071 = vrot.slane %v1069, 5
      %v1072 = vor.u32 %v1068, %v1071
      %v1073 = vsel %vm988, %v1064, %v1072
      %v1075 = vshrl.u32 %v966, 16
      %v1077 = vrot.slane %v1075, 4
      %v1078 = vshll.u32 %v966, 16
      %v1080 = vrot.slane %v1078, 5
      %v1081 = vor.u32 %v1077, %v1080
      %v1083 = vshrl.u32 %v967, 16
      %v1085 = vrot.slane %v1083, 4
      %v1086 = vshll.u32 %v967, 16
      %v1088 = vrot.slane %v1086, 5
      %v1089 = vor.u32 %v1085, %v1088
      %v1090 = vsel %vm988, %v1081, %v1089
      %v1092 = vshrl.u32 %v968, 16
      %v1094 = vrot.slane %v1092, 4
      %v1095 = vshll.u32 %v968, 16
      %v1097 = vrot.slane %v1095, 5
      %v1098 = vor.u32 %v1094, %v1097
      %v1100 = vshrl.u32 %v969, 16
      %v1102 = vrot.slane %v1100, 4
      %v1103 = vshll.u32 %v969, 16
      %v1105 = vrot.slane %v1103, 5
      %v1106 = vor.u32 %v1102, %v1105
      %v1107 = vsel %vm988, %v1098, %v1106
      %v1109 = vshrl.u32 %v970, 16
      %v1111 = vrot.slane %v1109, 4
      %v1112 = vshll.u32 %v970, 16
      %v1114 = vrot.slane %v1112, 5
      %v1115 = vor.u32 %v1111, %v1114
      %v1117 = vshrl.u32 %v971, 16
      %v1119 = vrot.slane %v1117, 4
      %v1120 = vshll.u32 %v971, 16
      %v1122 = vrot.slane %v1120, 5
      %v1123 = vor.u32 %v1119, %v1122
      %v1124 = vsel %vm988, %v1115, %v1123
      %v1126 = vshrl.u32 %v972, 16
      %v1128 = vrot.slane %v1126, 4
      %v1129 = vshll.u32 %v972, 16
      %v1131 = vrot.slane %v1129, 5
      %v1132 = vor.u32 %v1128, %v1131
      %v1134 = vshrl.u32 %v973, 16
      %v1136 = vrot.slane %v1134, 4
      %v1137 = vshll.u32 %v973, 16
      %v1139 = vrot.slane %v1137, 5
      %v1140 = vor.u32 %v1136, %v1139
      %v1141 = vsel %vm988, %v1132, %v1140
      %v1143 = vshrl.u32 %v974, 16
      %v1145 = vrot.slane %v1143, 4
      %v1146 = vshll.u32 %v974, 16
      %v1148 = vrot.slane %v1146, 5
      %v1149 = vor.u32 %v1145, %v1148
      %v1151 = vshrl.u32 %v975, 16
      %v1153 = vrot.slane %v1151, 4
      %v1154 = vshll.u32 %v975, 16
      %v1156 = vrot.slane %v1154, 5
      %v1157 = vor.u32 %v1153, %v1156
      %v1158 = vsel %vm988, %v1149, %v1157
      %v1160 = vshrl.u32 %v976, 16
      %v1162 = vrot.slane %v1160, 4
      %v1163 = vshll.u32 %v976, 16
      %v1165 = vrot.slane %v1163, 5
      %v1166 = vor.u32 %v1162, %v1165
      %v1168 = vshrl.u32 %v977, 16
      %v1170 = vrot.slane %v1168, 4
      %v1171 = vshll.u32 %v977, 16
      %v1173 = vrot.slane %v1171, 5
      %v1174 = vor.u32 %v1170, %v1173
      %v1175 = vsel %vm988, %v1166, %v1174
      %v1177 = vshrl.u32 %v978, 16
      %v1179 = vrot.slane %v1177, 4
      %v1180 = vshll.u32 %v978, 16
      %v1182 = vrot.slane %v1180, 5
      %v1183 = vor.u32 %v1179, %v1182
      %v1185 = vshrl.u32 %v979, 16
      %v1187 = vrot.slane %v1185, 4
      %v1188 = vshll.u32 %v979, 16
      %v1190 = vrot.slane %v1188, 5
      %v1191 = vor.u32 %v1187, %v1190
      %v1192 = vsel %vm988, %v1183, %v1191
      %v1194 = vshrl.u32 %v980, 16
      %v1196 = vrot.slane %v1194, 4
      %v1197 = vshll.u32 %v980, 16
      %v1199 = vrot.slane %v1197, 5
      %v1200 = vor.u32 %v1196, %v1199
      %v1202 = vshrl.u32 %v981, 16
      %v1204 = vrot.slane %v1202, 4
      %v1205 = vshll.u32 %v981, 16
      %v1207 = vrot.slane %v1205, 5
      %v1208 = vor.u32 %v1204, %v1207
      %v1209 = vsel %vm988, %v1200, %v1208
      %v1211 = vshrl.u32 %v982, 16
      %v1213 = vrot.slane %v1211, 4
      %v1214 = vshll.u32 %v982, 16
      %v1216 = vrot.slane %v1214, 5
      %v1217 = vor.u32 %v1213, %v1216
      %v1219 = vshrl.u32 %v983, 16
      %v1221 = vrot.slane %v1219, 4
      %v1222 = vshll.u32 %v983, 16
      %v1224 = vrot.slane %v1222, 5
      %v1225 = vor.u32 %v1221, %v1224
      %v1226 = vsel %vm988, %v1217, %v1225
      %v1228 = vshrl.u32 %v984, 16
      %v1230 = vrot.slane %v1228, 4
      %v1231 = vshll.u32 %v984, 16
      %v1233 = vrot.slane %v1231, 5
      %v1234 = vor.u32 %v1230, %v1233
      %v1236 = vshrl.u32 %v985, 16
      %v1238 = vrot.slane %v1236, 4
      %v1239 = vshll.u32 %v985, 16
      %v1241 = vrot.slane %v1239, 5
      %v1242 = vor.u32 %v1238, %v1241
      %v1243 = vsel %vm988, %v1234, %v1242
      %v1245 = vshrl.u32 %v986, 16
      %v1247 = vrot.slane %v1245, 4
      %v1248 = vshll.u32 %v986, 16
      %v1250 = vrot.slane %v1248, 5
      %v1251 = vor.u32 %v1247, %v1250
      %v1253 = vshrl.u32 %v987, 16
      %v1255 = vrot.slane %v1253, 4
      %v1256 = vshll.u32 %v987, 16
      %v1258 = vrot.slane %v1256, 5
      %v1259 = vor.u32 %v1255, %v1258
      %v1260 = vsel %vm988, %v1251, %v1259
      %1277 = vst [vmem:[#allocation3 + $0x10] sm:$0xff] %v1005
      %1278 = vst [vmem:[#allocation3 + $0x58] sm:$0xff] %v1022
      %1279 = vst [vmem:[#allocation3 + $0xa0] sm:$0xff] %v1039
      %1280 = vst [vmem:[#allocation3 + $0xe8] sm:$0xff] %v1056
      %1281 = vst [vmem:[#allocation3 + $0x130] sm:$0xff] %v1073
      %1282 = vst [vmem:[#allocation3 + $0x178] sm:$0xff] %v1090
      %1283 = vst [vmem:[#allocation3 + $0x1c0] sm:$0xff] %v1107
      %1284 = vst [vmem:[#allocation3 + $0x208] sm:$0xff] %v1124
      %1285 = vst [vmem:[#allocation3 + $0x250] sm:$0xff] %v1141
      %1286 = vst [vmem:[#allocation3 + $0x298] sm:$0xff] %v1158
      %1287 = vst [vmem:[#allocation3 + $0x2e0] sm:$0xff] %v1175
      %1288 = vst [vmem:[#allocation3 + $0x328] sm:$0xff] %v1192
      %1289 = vst [vmem:[#allocation3 + $0x370] sm:$0xff] %v1209
      %1290 = vst [vmem:[#allocation3 + $0x3b8] sm:$0xff] %v1226
      %1291 = vst [vmem:[#allocation3 + $0x400] sm:$0xff] %v1243
      %1292 = vst [vmem:[#allocation3 + $0x448] sm:$0xff] %v1260
      %v1293 = vld [vmem:[%s440] sm:$0xf8]
      %v1294 = vld [vmem:[%s440 + $0x8] sm:$0xf]
      %v1295 = vld [vmem:[%s440 + $0x10] sm:$0xf8]
      %v1296 = vld [vmem:[%s440 + $0x18] sm:$0xf]
      %v1297 = vld [vmem:[%s440 + $0x20] sm:$0xf8]
      %v1298 = vld [vmem:[%s440 + $0x28] sm:$0xf]
      %v1299 = vld [vmem:[%s440 + $0x30] sm:$0xf8]
      %v1300 = vld [vmem:[%s440 + $0x38] sm:$0xf]
      %v1301 = vld [vmem:[%s440 + $0x40] sm:$0xf8]
      %v1302 = vld [vmem:[%s440 + $0x48] sm:$0xf]
      %v1303 = vld [vmem:[%s440 + $0x50] sm:$0xf8]
      %v1304 = vld [vmem:[%s440 + $0x58] sm:$0xf]
      %v1305 = vld [vmem:[%s440 + $0x60] sm:$0xf8]
      %v1306 = vld [vmem:[%s440 + $0x68] sm:$0xf]
      %v1307 = vld [vmem:[%s440 + $0x70] sm:$0xf8]
      %v1308 = vld [vmem:[%s440 + $0x78] sm:$0xf]
      %v1309 = vld [vmem:[%s440 + $0x80] sm:$0xf8]
      %v1310 = vld [vmem:[%s440 + $0x88] sm:$0xf]
      %v1311 = vld [vmem:[%s440 + $0x90] sm:$0xf8]
      %v1312 = vld [vmem:[%s440 + $0x98] sm:$0xf]
      %v1313 = vld [vmem:[%s440 + $0xa0] sm:$0xf8]
      %v1314 = vld [vmem:[%s440 + $0xa8] sm:$0xf]
      %v1315 = vld [vmem:[%s440 + $0xb0] sm:$0xf8]
      %v1316 = vld [vmem:[%s440 + $0xb8] sm:$0xf]
      %v1317 = vld [vmem:[%s440 + $0xc0] sm:$0xf8]
      %v1318 = vld [vmem:[%s440 + $0xc8] sm:$0xf]
      %v1319 = vld [vmem:[%s440 + $0xd0] sm:$0xf8]
      %v1320 = vld [vmem:[%s440 + $0xd8] sm:$0xf]
      %v1321 = vld [vmem:[%s440 + $0xe0] sm:$0xf8]
      %v1322 = vld [vmem:[%s440 + $0xe8] sm:$0xf]
      %v1323 = vld [vmem:[%s440 + $0xf0] sm:$0xf8]
      %v1324 = vld [vmem:[%s440 + $0xf8] sm:$0xf]
      %v1326 = vshrl.u32 %v1293, 16
      %v1328 = vrot.slane %v1326, 3
      %v1329 = vshll.u32 %v1293, 16
      %v1331 = vrot.slane %v1329, 4
      %v1332 = vor.u32 %v1328, %v1331
      %v1334 = vshrl.u32 %v1294, 16
      %v1336 = vrot.slane %v1334, 3
      %v1337 = vshll.u32 %v1294, 16
      %v1339 = vrot.slane %v1337, 4
      %v1340 = vor.u32 %v1336, %v1339
      %v1341 = vsel %vm506, %v1332, %v1340
      %v1343 = vshrl.u32 %v1295, 16
      %v1345 = vrot.slane %v1343, 3
      %v1346 = vshll.u32 %v1295, 16
      %v1348 = vrot.slane %v1346, 4
      %v1349 = vor.u32 %v1345, %v1348
      %v1351 = vshrl.u32 %v1296, 16
      %v1353 = vrot.slane %v1351, 3
      %v1354 = vshll.u32 %v1296, 16
      %v1356 = vrot.slane %v1354, 4
      %v1357 = vor.u32 %v1353, %v1356
      %v1358 = vsel %vm506, %v1349, %v1357
      %v1360 = vshrl.u32 %v1297, 16
      %v1362 = vrot.slane %v1360, 3
      %v1363 = vshll.u32 %v1297, 16
      %v1365 = vrot.slane %v1363, 4
      %v1366 = vor.u32 %v1362, %v1365
      %v1368 = vshrl.u32 %v1298, 16
      %v1370 = vrot.slane %v1368, 3
      %v1371 = vshll.u32 %v1298, 16
      %v1373 = vrot.slane %v1371, 4
      %v1374 = vor.u32 %v1370, %v1373
      %v1375 = vsel %vm506, %v1366, %v1374
      %v1377 = vshrl.u32 %v1299, 16
      %v1379 = vrot.slane %v1377, 3
      %v1380 = vshll.u32 %v1299, 16
      %v1382 = vrot.slane %v1380, 4
      %v1383 = vor.u32 %v1379, %v1382
      %v1385 = vshrl.u32 %v1300, 16
      %v1387 = vrot.slane %v1385, 3
      %v1388 = vshll.u32 %v1300, 16
      %v1390 = vrot.slane %v1388, 4
      %v1391 = vor.u32 %v1387, %v1390
      %v1392 = vsel %vm506, %v1383, %v1391
      %v1394 = vshrl.u32 %v1301, 16
      %v1396 = vrot.slane %v1394, 3
      %v1397 = vshll.u32 %v1301, 16
      %v1399 = vrot.slane %v1397, 4
      %v1400 = vor.u32 %v1396, %v1399
      %v1402 = vshrl.u32 %v1302, 16
      %v1404 = vrot.slane %v1402, 3
      %v1405 = vshll.u32 %v1302, 16
      %v1407 = vrot.slane %v1405, 4
      %v1408 = vor.u32 %v1404, %v1407
      %v1409 = vsel %vm506, %v1400, %v1408
      %v1411 = vshrl.u32 %v1303, 16
      %v1413 = vrot.slane %v1411, 3
      %v1414 = vshll.u32 %v1303, 16
      %v1416 = vrot.slane %v1414, 4
      %v1417 = vor.u32 %v1413, %v1416
      %v1419 = vshrl.u32 %v1304, 16
      %v1421 = vrot.slane %v1419, 3
      %v1422 = vshll.u32 %v1304, 16
      %v1424 = vrot.slane %v1422, 4
      %v1425 = vor.u32 %v1421, %v1424
      %v1426 = vsel %vm506, %v1417, %v1425
      %v1428 = vshrl.u32 %v1305, 16
      %v1430 = vrot.slane %v1428, 3
      %v1431 = vshll.u32 %v1305, 16
      %v1433 = vrot.slane %v1431, 4
      %v1434 = vor.u32 %v1430, %v1433
      %v1436 = vshrl.u32 %v1306, 16
      %v1438 = vrot.slane %v1436, 3
      %v1439 = vshll.u32 %v1306, 16
      %v1441 = vrot.slane %v1439, 4
      %v1442 = vor.u32 %v1438, %v1441
      %v1443 = vsel %vm506, %v1434, %v1442
      %v1445 = vshrl.u32 %v1307, 16
      %v1447 = vrot.slane %v1445, 3
      %v1448 = vshll.u32 %v1307, 16
      %v1450 = vrot.slane %v1448, 4
      %v1451 = vor.u32 %v1447, %v1450
      %v1453 = vshrl.u32 %v1308, 16
      %v1455 = vrot.slane %v1453, 3
      %v1456 = vshll.u32 %v1308, 16
      %v1458 = vrot.slane %v1456, 4
      %v1459 = vor.u32 %v1455, %v1458
      %v1460 = vsel %vm506, %v1451, %v1459
      %v1462 = vshrl.u32 %v1309, 16
      %v1464 = vrot.slane %v1462, 3
      %v1465 = vshll.u32 %v1309, 16
      %v1467 = vrot.slane %v1465, 4
      %v1468 = vor.u32 %v1464, %v1467
      %v1470 = vshrl.u32 %v1310, 16
      %v1472 = vrot.slane %v1470, 3
      %v1473 = vshll.u32 %v1310, 16
      %v1475 = vrot.slane %v1473, 4
      %v1476 = vor.u32 %v1472, %v1475
      %v1477 = vsel %vm506, %v1468, %v1476
      %v1479 = vshrl.u32 %v1311, 16
      %v1481 = vrot.slane %v1479, 3
      %v1482 = vshll.u32 %v1311, 16
      %v1484 = vrot.slane %v1482, 4
      %v1485 = vor.u32 %v1481, %v1484
      %v1487 = vshrl.u32 %v1312, 16
      %v1489 = vrot.slane %v1487, 3
      %v1490 = vshll.u32 %v1312, 16
      %v1492 = vrot.slane %v1490, 4
      %v1493 = vor.u32 %v1489, %v1492
      %v1494 = vsel %vm506, %v1485, %v1493
      %v1496 = vshrl.u32 %v1313, 16
      %v1498 = vrot.slane %v1496, 3
      %v1499 = vshll.u32 %v1313, 16
      %v1501 = vrot.slane %v1499, 4
      %v1502 = vor.u32 %v1498, %v1501
      %v1504 = vshrl.u32 %v1314, 16
      %v1506 = vrot.slane %v1504, 3
      %v1507 = vshll.u32 %v1314, 16
      %v1509 = vrot.slane %v1507, 4
      %v1510 = vor.u32 %v1506, %v1509
      %v1511 = vsel %vm506, %v1502, %v1510
      %v1513 = vshrl.u32 %v1315, 16
      %v1515 = vrot.slane %v1513, 3
      %v1516 = vshll.u32 %v1315, 16
      %v1518 = vrot.slane %v1516, 4
      %v1519 = vor.u32 %v1515, %v1518
      %v1521 = vshrl.u32 %v1316, 16
      %v1523 = vrot.slane %v1521, 3
      %v1524 = vshll.u32 %v1316, 16
      %v1526 = vrot.slane %v1524, 4
      %v1527 = vor.u32 %v1523, %v1526
      %v1528 = vsel %vm506, %v1519, %v1527
      %v1530 = vshrl.u32 %v1317, 16
      %v1532 = vrot.slane %v1530, 3
      %v1533 = vshll.u32 %v1317, 16
      %v1535 = vrot.slane %v1533, 4
      %v1536 = vor.u32 %v1532, %v1535
      %v1538 = vshrl.u32 %v1318, 16
      %v1540 = vrot.slane %v1538, 3
      %v1541 = vshll.u32 %v1318, 16
      %v1543 = vrot.slane %v1541, 4
      %v1544 = vor.u32 %v1540, %v1543
      %v1545 = vsel %vm506, %v1536, %v1544
      %v1547 = vshrl.u32 %v1319, 16
      %v1549 = vrot.slane %v1547, 3
      %v1550 = vshll.u32 %v1319, 16
      %v1552 = vrot.slane %v1550, 4
      %v1553 = vor.u32 %v1549, %v1552
      %v1555 = vshrl.u32 %v1320, 16
      %v1557 = vrot.slane %v1555, 3
      %v1558 = vshll.u32 %v1320, 16
      %v1560 = vrot.slane %v1558, 4
      %v1561 = vor.u32 %v1557, %v1560
      %v1562 = vsel %vm506, %v1553, %v1561
      %v1564 = vshrl.u32 %v1321, 16
      %v1566 = vrot.slane %v1564, 3
      %v1567 = vshll.u32 %v1321, 16
      %v1569 = vrot.slane %v1567, 4
      %v1570 = vor.u32 %v1566, %v1569
      %v1572 = vshrl.u32 %v1322, 16
      %v1574 = vrot.slane %v1572, 3
      %v1575 = vshll.u32 %v1322, 16
      %v1577 = vrot.slane %v1575, 4
      %v1578 = vor.u32 %v1574, %v1577
      %v1579 = vsel %vm506, %v1570, %v1578
      %v1581 = vshrl.u32 %v1323, 16
      %v1583 = vrot.slane %v1581, 3
      %v1584 = vshll.u32 %v1323, 16
      %v1586 = vrot.slane %v1584, 4
      %v1587 = vor.u32 %v1583, %v1586
      %v1589 = vshrl.u32 %v1324, 16
      %v1591 = vrot.slane %v1589, 3
      %v1592 = vshll.u32 %v1324, 16
      %v1594 = vrot.slane %v1592, 4
      %v1595 = vor.u32 %v1591, %v1594
      %v1596 = vsel %vm506, %v1587, %v1595
      %1613 = vst [vmem:[#allocation3 + $0x18] sm:$0xff] %v1341
      %1614 = vst [vmem:[#allocation3 + $0x60] sm:$0xff] %v1358
      %1615 = vst [vmem:[#allocation3 + $0xa8] sm:$0xff] %v1375
      %1616 = vst [vmem:[#allocation3 + $0xf0] sm:$0xff] %v1392
      %1617 = vst [vmem:[#allocation3 + $0x138] sm:$0xff] %v1409
      %1618 = vst [vmem:[#allocation3 + $0x180] sm:$0xff] %v1426
      %1619 = vst [vmem:[#allocation3 + $0x1c8] sm:$0xff] %v1443
      %1620 = vst [vmem:[#allocation3 + $0x210] sm:$0xff] %v1460
      %1621 = vst [vmem:[#allocation3 + $0x258] sm:$0xff] %v1477
      %1622 = vst [vmem:[#allocation3 + $0x2a0] sm:$0xff] %v1494
      %1623 = vst [vmem:[#allocation3 + $0x2e8] sm:$0xff] %v1511
      %1624 = vst [vmem:[#allocation3 + $0x330] sm:$0xff] %v1528
      %1625 = vst [vmem:[#allocation3 + $0x378] sm:$0xff] %v1545
      %1626 = vst [vmem:[#allocation3 + $0x3c0] sm:$0xff] %v1562
      %1627 = vst [vmem:[#allocation3 + $0x408] sm:$0xff] %v1579
      %1628 = vst [vmem:[#allocation3 + $0x450] sm:$0xff] %v1596
      %v1629 = vld [vmem:[%s440] sm:$0xf0]
      %v1630 = vld [vmem:[%s440 + $0x8] sm:$0xf]
      %v1631 = vld [vmem:[%s440 + $0x10] sm:$0xf0]
      %v1632 = vld [vmem:[%s440 + $0x18] sm:$0xf]
      %v1633 = vld [vmem:[%s440 + $0x20] sm:$0xf0]
      %v1634 = vld [vmem:[%s440 + $0x28] sm:$0xf]
      %v1635 = vld [vmem:[%s440 + $0x30] sm:$0xf0]
      %v1636 = vld [vmem:[%s440 + $0x38] sm:$0xf]
      %v1637 = vld [vmem:[%s440 + $0x40] sm:$0xf0]
      %v1638 = vld [vmem:[%s440 + $0x48] sm:$0xf]
      %v1639 = vld [vmem:[%s440 + $0x50] sm:$0xf0]
      %v1640 = vld [vmem:[%s440 + $0x58] sm:$0xf]
      %v1641 = vld [vmem:[%s440 + $0x60] sm:$0xf0]
      %v1642 = vld [vmem:[%s440 + $0x68] sm:$0xf]
      %v1643 = vld [vmem:[%s440 + $0x70] sm:$0xf0]
      %v1644 = vld [vmem:[%s440 + $0x78] sm:$0xf]
      %v1645 = vld [vmem:[%s440 + $0x80] sm:$0xf0]
      %v1646 = vld [vmem:[%s440 + $0x88] sm:$0xf]
      %v1647 = vld [vmem:[%s440 + $0x90] sm:$0xf0]
      %v1648 = vld [vmem:[%s440 + $0x98] sm:$0xf]
      %v1649 = vld [vmem:[%s440 + $0xa0] sm:$0xf0]
      %v1650 = vld [vmem:[%s440 + $0xa8] sm:$0xf]
      %v1651 = vld [vmem:[%s440 + $0xb0] sm:$0xf0]
      %v1652 = vld [vmem:[%s440 + $0xb8] sm:$0xf]
      %v1653 = vld [vmem:[%s440 + $0xc0] sm:$0xf0]
      %v1654 = vld [vmem:[%s440 + $0xc8] sm:$0xf]
      %v1655 = vld [vmem:[%s440 + $0xd0] sm:$0xf0]
      %v1656 = vld [vmem:[%s440 + $0xd8] sm:$0xf]
      %v1657 = vld [vmem:[%s440 + $0xe0] sm:$0xf0]
      %v1658 = vld [vmem:[%s440 + $0xe8] sm:$0xf]
      %v1659 = vld [vmem:[%s440 + $0xf0] sm:$0xf0]
      %v1660 = vld [vmem:[%s440 + $0xf8] sm:$0xf]
      %v1693 = vrot.slane %v1629, 4
      %v1694 = vrot.slane %v1630, 4
      %v1695 = vsel %vm875, %v1693, %v1694
      %v1696 = vrot.slane %v1631, 4
      %v1697 = vrot.slane %v1632, 4
      %v1698 = vsel %vm875, %v1696, %v1697
      %v1699 = vrot.slane %v1633, 4
      %v1700 = vrot.slane %v1634, 4
      %v1701 = vsel %vm875, %v1699, %v1700
      %v1702 = vrot.slane %v1635, 4
      %v1703 = vrot.slane %v1636, 4
      %v1704 = vsel %vm875, %v1702, %v1703
      %v1705 = vrot.slane %v1637, 4
      %v1706 = vrot.slane %v1638, 4
      %v1707 = vsel %vm875, %v1705, %v1706
      %v1708 = vrot.slane %v1639, 4
      %v1709 = vrot.slane %v1640, 4
      %v1710 = vsel %vm875, %v1708, %v1709
      %v1711 = vrot.slane %v1641, 4
      %v1712 = vrot.slane %v1642, 4
      %v1713 = vsel %vm875, %v1711, %v1712
      %v1714 = vrot.slane %v1643, 4
      %v1715 = vrot.slane %v1644, 4
      %v1716 = vsel %vm875, %v1714, %v1715
      %v1717 = vrot.slane %v1645, 4
      %v1718 = vrot.slane %v1646, 4
      %v1719 = vsel %vm875, %v1717, %v1718
      %v1720 = vrot.slane %v1647, 4
      %v1721 = vrot.slane %v1648, 4
      %v1722 = vsel %vm875, %v1720, %v1721
      %v1723 = vrot.slane %v1649, 4
      %v1724 = vrot.slane %v1650, 4
      %v1725 = vsel %vm875, %v1723, %v1724
      %v1726 = vrot.slane %v1651, 4
      %v1727 = vrot.slane %v1652, 4
      %v1728 = vsel %vm875, %v1726, %v1727
      %v1729 = vrot.slane %v1653, 4
      %v1730 = vrot.slane %v1654, 4
      %v1731 = vsel %vm875, %v1729, %v1730
      %v1732 = vrot.slane %v1655, 4
      %v1733 = vrot.slane %v1656, 4
      %v1734 = vsel %vm875, %v1732, %v1733
      %v1735 = vrot.slane %v1657, 4
      %v1736 = vrot.slane %v1658, 4
      %v1737 = vsel %vm875, %v1735, %v1736
      %v1738 = vrot.slane %v1659, 4
      %v1739 = vrot.slane %v1660, 4
      %v1740 = vsel %vm875, %v1738, %v1739
      %1757 = vst [vmem:[#allocation3 + $0x20] sm:$0xff] %v1695
      %1758 = vst [vmem:[#allocation3 + $0x68] sm:$0xff] %v1698
      %1759 = vst [vmem:[#allocation3 + $0xb0] sm:$0xff] %v1701
      %1760 = vst [vmem:[#allocation3 + $0xf8] sm:$0xff] %v1704
      %1761 = vst [vmem:[#allocation3 + $0x140] sm:$0xff] %v1707
      %1762 = vst [vmem:[#allocation3 + $0x188] sm:$0xff] %v1710
      %1763 = vst [vmem:[#allocation3 + $0x1d0] sm:$0xff] %v1713
      %1764 = vst [vmem:[#allocation3 + $0x218] sm:$0xff] %v1716
      %1765 = vst [vmem:[#allocation3 + $0x260] sm:$0xff] %v1719
      %1766 = vst [vmem:[#allocation3 + $0x2a8] sm:$0xff] %v1722
      %1767 = vst [vmem:[#allocation3 + $0x2f0] sm:$0xff] %v1725
      %1768 = vst [vmem:[#allocation3 + $0x338] sm:$0xff] %v1728
      %1769 = vst [vmem:[#allocation3 + $0x380] sm:$0xff] %v1731
      %1770 = vst [vmem:[#allocation3 + $0x3c8] sm:$0xff] %v1734
      %1771 = vst [vmem:[#allocation3 + $0x410] sm:$0xff] %v1737
      %1772 = vst [vmem:[#allocation3 + $0x458] sm:$0xff] %v1740
      %v1773 = vld [vmem:[%s440] sm:$0xf0]
      %v1774 = vld [vmem:[%s440 + $0x8] sm:$0x1f]
      %v1775 = vld [vmem:[%s440 + $0x10] sm:$0xf0]
      %v1776 = vld [vmem:[%s440 + $0x18] sm:$0x1f]
      %v1777 = vld [vmem:[%s440 + $0x20] sm:$0xf0]
      %v1778 = vld [vmem:[%s440 + $0x28] sm:$0x1f]
      %v1779 = vld [vmem:[%s440 + $0x30] sm:$0xf0]
      %v1780 = vld [vmem:[%s440 + $0x38] sm:$0x1f]
      %v1781 = vld [vmem:[%s440 + $0x40] sm:$0xf0]
      %v1782 = vld [vmem:[%s440 + $0x48] sm:$0x1f]
      %v1783 = vld [vmem:[%s440 + $0x50] sm:$0xf0]
      %v1784 = vld [vmem:[%s440 + $0x58] sm:$0x1f]
      %v1785 = vld [vmem:[%s440 + $0x60] sm:$0xf0]
      %v1786 = vld [vmem:[%s440 + $0x68] sm:$0x1f]
      %v1787 = vld [vmem:[%s440 + $0x70] sm:$0xf0]
      %v1788 = vld [vmem:[%s440 + $0x78] sm:$0x1f]
      %v1789 = vld [vmem:[%s440 + $0x80] sm:$0xf0]
      %v1790 = vld [vmem:[%s440 + $0x88] sm:$0x1f]
      %v1791 = vld [vmem:[%s440 + $0x90] sm:$0xf0]
      %v1792 = vld [vmem:[%s440 + $0x98] sm:$0x1f]
      %v1793 = vld [vmem:[%s440 + $0xa0] sm:$0xf0]
      %v1794 = vld [vmem:[%s440 + $0xa8] sm:$0x1f]
      %v1795 = vld [vmem:[%s440 + $0xb0] sm:$0xf0]
      %v1796 = vld [vmem:[%s440 + $0xb8] sm:$0x1f]
      %v1797 = vld [vmem:[%s440 + $0xc0] sm:$0xf0]
      %v1798 = vld [vmem:[%s440 + $0xc8] sm:$0x1f]
      %v1799 = vld [vmem:[%s440 + $0xd0] sm:$0xf0]
      %v1800 = vld [vmem:[%s440 + $0xd8] sm:$0x1f]
      %v1801 = vld [vmem:[%s440 + $0xe0] sm:$0xf0]
      %v1802 = vld [vmem:[%s440 + $0xe8] sm:$0x1f]
      %v1803 = vld [vmem:[%s440 + $0xf0] sm:$0xf0]
      %v1804 = vld [vmem:[%s440 + $0xf8] sm:$0x1f]
      %v1806 = vshrl.u32 %v1773, 16
      %v1808 = vrot.slane %v1806, 4
      %v1809 = vshll.u32 %v1773, 16
      %v1811 = vrot.slane %v1809, 5
      %v1812 = vor.u32 %v1808, %v1811
      %v1814 = vshrl.u32 %v1774, 16
      %v1816 = vrot.slane %v1814, 4
      %v1817 = vshll.u32 %v1774, 16
      %v1819 = vrot.slane %v1817, 5
      %v1820 = vor.u32 %v1816, %v1819
      %v1821 = vsel %vm988, %v1812, %v1820
      %v1823 = vshrl.u32 %v1775, 16
      %v1825 = vrot.slane %v1823, 4
      %v1826 = vshll.u32 %v1775, 16
      %v1828 = vrot.slane %v1826, 5
      %v1829 = vor.u32 %v1825, %v1828
      %v1831 = vshrl.u32 %v1776, 16
      %v1833 = vrot.slane %v1831, 4
      %v1834 = vshll.u32 %v1776, 16
      %v1836 = vrot.slane %v1834, 5
      %v1837 = vor.u32 %v1833, %v1836
      %v1838 = vsel %vm988, %v1829, %v1837
      %v1840 = vshrl.u32 %v1777, 16
      %v1842 = vrot.slane %v1840, 4
      %v1843 = vshll.u32 %v1777, 16
      %v1845 = vrot.slane %v1843, 5
      %v1846 = vor.u32 %v1842, %v1845
      %v1848 = vshrl.u32 %v1778, 16
      %v1850 = vrot.slane %v1848, 4
      %v1851 = vshll.u32 %v1778, 16
      %v1853 = vrot.slane %v1851, 5
      %v1854 = vor.u32 %v1850, %v1853
      %v1855 = vsel %vm988, %v1846, %v1854
      %v1857 = vshrl.u32 %v1779, 16
      %v1859 = vrot.slane %v1857, 4
      %v1860 = vshll.u32 %v1779, 16
      %v1862 = vrot.slane %v1860, 5
      %v1863 = vor.u32 %v1859, %v1862
      %v1865 = vshrl.u32 %v1780, 16
      %v1867 = vrot.slane %v1865, 4
      %v1868 = vshll.u32 %v1780, 16
      %v1870 = vrot.slane %v1868, 5
      %v1871 = vor.u32 %v1867, %v1870
      %v1872 = vsel %vm988, %v1863, %v1871
      %v1874 = vshrl.u32 %v1781, 16
      %v1876 = vrot.slane %v1874, 4
      %v1877 = vshll.u32 %v1781, 16
      %v1879 = vrot.slane %v1877, 5
      %v1880 = vor.u32 %v1876, %v1879
      %v1882 = vshrl.u32 %v1782, 16
      %v1884 = vrot.slane %v1882, 4
      %v1885 = vshll.u32 %v1782, 16
      %v1887 = vrot.slane %v1885, 5
      %v1888 = vor.u32 %v1884, %v1887
      %v1889 = vsel %vm988, %v1880, %v1888
      %v1891 = vshrl.u32 %v1783, 16
      %v1893 = vrot.slane %v1891, 4
      %v1894 = vshll.u32 %v1783, 16
      %v1896 = vrot.slane %v1894, 5
      %v1897 = vor.u32 %v1893, %v1896
      %v1899 = vshrl.u32 %v1784, 16
      %v1901 = vrot.slane %v1899, 4
      %v1902 = vshll.u32 %v1784, 16
      %v1904 = vrot.slane %v1902, 5
      %v1905 = vor.u32 %v1901, %v1904
      %v1906 = vsel %vm988, %v1897, %v1905
      %v1908 = vshrl.u32 %v1785, 16
      %v1910 = vrot.slane %v1908, 4
      %v1911 = vshll.u32 %v1785, 16
      %v1913 = vrot.slane %v1911, 5
      %v1914 = vor.u32 %v1910, %v1913
      %v1916 = vshrl.u32 %v1786, 16
      %v1918 = vrot.slane %v1916, 4
      %v1919 = vshll.u32 %v1786, 16
      %v1921 = vrot.slane %v1919, 5
      %v1922 = vor.u32 %v1918, %v1921
      %v1923 = vsel %vm988, %v1914, %v1922
      %v1925 = vshrl.u32 %v1787, 16
      %v1927 = vrot.slane %v1925, 4
      %v1928 = vshll.u32 %v1787, 16
      %v1930 = vrot.slane %v1928, 5
      %v1931 = vor.u32 %v1927, %v1930
      %v1933 = vshrl.u32 %v1788, 16
      %v1935 = vrot.slane %v1933, 4
      %v1936 = vshll.u32 %v1788, 16
      %v1938 = vrot.slane %v1936, 5
      %v1939 = vor.u32 %v1935, %v1938
      %v1940 = vsel %vm988, %v1931, %v1939
      %v1942 = vshrl.u32 %v1789, 16
      %v1944 = vrot.slane %v1942, 4
      %v1945 = vshll.u32 %v1789, 16
      %v1947 = vrot.slane %v1945, 5
      %v1948 = vor.u32 %v1944, %v1947
      %v1950 = vshrl.u32 %v1790, 16
      %v1952 = vrot.slane %v1950, 4
      %v1953 = vshll.u32 %v1790, 16
      %v1955 = vrot.slane %v1953, 5
      %v1956 = vor.u32 %v1952, %v1955
      %v1957 = vsel %vm988, %v1948, %v1956
      %v1959 = vshrl.u32 %v1791, 16
      %v1961 = vrot.slane %v1959, 4
      %v1962 = vshll.u32 %v1791, 16
      %v1964 = vrot.slane %v1962, 5
      %v1965 = vor.u32 %v1961, %v1964
      %v1967 = vshrl.u32 %v1792, 16
      %v1969 = vrot.slane %v1967, 4
      %v1970 = vshll.u32 %v1792, 16
      %v1972 = vrot.slane %v1970, 5
      %v1973 = vor.u32 %v1969, %v1972
      %v1974 = vsel %vm988, %v1965, %v1973
      %v1976 = vshrl.u32 %v1793, 16
      %v1978 = vrot.slane %v1976, 4
      %v1979 = vshll.u32 %v1793, 16
      %v1981 = vrot.slane %v1979, 5
      %v1982 = vor.u32 %v1978, %v1981
      %v1984 = vshrl.u32 %v1794, 16
      %v1986 = vrot.slane %v1984, 4
      %v1987 = vshll.u32 %v1794, 16
      %v1989 = vrot.slane %v1987, 5
      %v1990 = vor.u32 %v1986, %v1989
      %v1991 = vsel %vm988, %v1982, %v1990
      %v1993 = vshrl.u32 %v1795, 16
      %v1995 = vrot.slane %v1993, 4
      %v1996 = vshll.u32 %v1795, 16
      %v1998 = vrot.slane %v1996, 5
      %v1999 = vor.u32 %v1995, %v1998
      %v2001 = vshrl.u32 %v1796, 16
      %v2003 = vrot.slane %v2001, 4
      %v2004 = vshll.u32 %v1796, 16
      %v2006 = vrot.slane %v2004, 5
      %v2007 = vor.u32 %v2003, %v2006
      %v2008 = vsel %vm988, %v1999, %v2007
      %v2010 = vshrl.u32 %v1797, 16
      %v2012 = vrot.slane %v2010, 4
      %v2013 = vshll.u32 %v1797, 16
      %v2015 = vrot.slane %v2013, 5
      %v2016 = vor.u32 %v2012, %v2015
      %v2018 = vshrl.u32 %v1798, 16
      %v2020 = vrot.slane %v2018, 4
      %v2021 = vshll.u32 %v1798, 16
      %v2023 = vrot.slane %v2021, 5
      %v2024 = vor.u32 %v2020, %v2023
      %v2025 = vsel %vm988, %v2016, %v2024
      %v2027 = vshrl.u32 %v1799, 16
      %v2029 = vrot.slane %v2027, 4
      %v2030 = vshll.u32 %v1799, 16
      %v2032 = vrot.slane %v2030, 5
      %v2033 = vor.u32 %v2029, %v2032
      %v2035 = vshrl.u32 %v1800, 16
      %v2037 = vrot.slane %v2035, 4
      %v2038 = vshll.u32 %v1800, 16
      %v2040 = vrot.slane %v2038, 5
      %v2041 = vor.u32 %v2037, %v2040
      %v2042 = vsel %vm988, %v2033, %v2041
      %v2044 = vshrl.u32 %v1801, 16
      %v2046 = vrot.slane %v2044, 4
      %v2047 = vshll.u32 %v1801, 16
      %v2049 = vrot.slane %v2047, 5
      %v2050 = vor.u32 %v2046, %v2049
      %v2052 = vshrl.u32 %v1802, 16
      %v2054 = vrot.slane %v2052, 4
      %v2055 = vshll.u32 %v1802, 16
      %v2057 = vrot.slane %v2055, 5
      %v2058 = vor.u32 %v2054, %v2057
      %v2059 = vsel %vm988, %v2050, %v2058
      %v2061 = vshrl.u32 %v1803, 16
      %v2063 = vrot.slane %v2061, 4
      %v2064 = vshll.u32 %v1803, 16
      %v2066 = vrot.slane %v2064, 5
      %v2067 = vor.u32 %v2063, %v2066
      %v2069 = vshrl.u32 %v1804, 16
      %v2071 = vrot.slane %v2069, 4
      %v2072 = vshll.u32 %v1804, 16
      %v2074 = vrot.slane %v2072, 5
      %v2075 = vor.u32 %v2071, %v2074
      %v2076 = vsel %vm988, %v2067, %v2075
      %2093 = vst [vmem:[#allocation3 + $0x28] sm:$0xff] %v1821
      %2094 = vst [vmem:[#allocation3 + $0x70] sm:$0xff] %v1838
      %2095 = vst [vmem:[#allocation3 + $0xb8] sm:$0xff] %v1855
      %2096 = vst [vmem:[#allocation3 + $0x100] sm:$0xff] %v1872
      %2097 = vst [vmem:[#allocation3 + $0x148] sm:$0xff] %v1889
      %2098 = vst [vmem:[#allocation3 + $0x190] sm:$0xff] %v1906
      %2099 = vst [vmem:[#allocation3 + $0x1d8] sm:$0xff] %v1923
      %2100 = vst [vmem:[#allocation3 + $0x220] sm:$0xff] %v1940
      %2101 = vst [vmem:[#allocation3 + $0x268] sm:$0xff] %v1957
      %2102 = vst [vmem:[#allocation3 + $0x2b0] sm:$0xff] %v1974
      %2103 = vst [vmem:[#allocation3 + $0x2f8] sm:$0xff] %v1991
      %2104 = vst [vmem:[#allocation3 + $0x340] sm:$0xff] %v2008
      %2105 = vst [vmem:[#allocation3 + $0x388] sm:$0xff] %v2025
      %2106 = vst [vmem:[#allocation3 + $0x3d0] sm:$0xff] %v2042
      %2107 = vst [vmem:[#allocation3 + $0x418] sm:$0xff] %v2059
      %2108 = vst [vmem:[#allocation3 + $0x460] sm:$0xff] %v2076
      %s2109 = scalar_lea.vmem [#allocation2], 144
      %v2110 = vld [vmem:[%s2109] sm:$0xf8]
      %v2111 = vld [vmem:[%s2109 + $0x8] sm:$0xf]
      %v2112 = vld [vmem:[%s2109 + $0x10] sm:$0xf8]
      %v2113 = vld [vmem:[%s2109 + $0x18] sm:$0xf]
      %v2114 = vld [vmem:[%s2109 + $0x20] sm:$0xf8]
      %v2115 = vld [vmem:[%s2109 + $0x28] sm:$0xf]
      %v2116 = vld [vmem:[%s2109 + $0x30] sm:$0xf8]
      %v2117 = vld [vmem:[%s2109 + $0x38] sm:$0xf]
      %v2118 = vld [vmem:[%s2109 + $0x40] sm:$0xf8]
      %v2119 = vld [vmem:[%s2109 + $0x48] sm:$0xf]
      %v2120 = vld [vmem:[%s2109 + $0x50] sm:$0xf8]
      %v2121 = vld [vmem:[%s2109 + $0x58] sm:$0xf]
      %v2122 = vld [vmem:[%s2109 + $0x60] sm:$0xf8]
      %v2123 = vld [vmem:[%s2109 + $0x68] sm:$0xf]
      %v2124 = vld [vmem:[%s2109 + $0x70] sm:$0xf8]
      %v2125 = vld [vmem:[%s2109 + $0x78] sm:$0xf]
      %v2126 = vld [vmem:[%s2109 + $0x80] sm:$0xf8]
      %v2127 = vld [vmem:[%s2109 + $0x88] sm:$0xf]
      %v2128 = vld [vmem:[%s2109 + $0x90] sm:$0xf8]
      %v2129 = vld [vmem:[%s2109 + $0x98] sm:$0xf]
      %v2130 = vld [vmem:[%s2109 + $0xa0] sm:$0xf8]
      %v2131 = vld [vmem:[%s2109 + $0xa8] sm:$0xf]
      %v2132 = vld [vmem:[%s2109 + $0xb0] sm:$0xf8]
      %v2133 = vld [vmem:[%s2109 + $0xb8] sm:$0xf]
      %v2134 = vld [vmem:[%s2109 + $0xc0] sm:$0xf8]
      %v2135 = vld [vmem:[%s2109 + $0xc8] sm:$0xf]
      %v2136 = vld [vmem:[%s2109 + $0xd0] sm:$0xf8]
      %v2137 = vld [vmem:[%s2109 + $0xd8] sm:$0xf]
      %v2138 = vld [vmem:[%s2109 + $0xe0] sm:$0xf8]
      %v2139 = vld [vmem:[%s2109 + $0xe8] sm:$0xf]
      %v2140 = vld [vmem:[%s2109 + $0xf0] sm:$0xf8]
      %v2141 = vld [vmem:[%s2109 + $0xf8] sm:$0xf]
      %v2143 = vshrl.u32 %v2110, 16
      %v2145 = vrot.slane %v2143, 3
      %v2146 = vshll.u32 %v2110, 16
      %v2148 = vrot.slane %v2146, 4
      %v2149 = vor.u32 %v2145, %v2148
      %v2151 = vshrl.u32 %v2111, 16
      %v2153 = vrot.slane %v2151, 3
      %v2154 = vshll.u32 %v2111, 16
      %v2156 = vrot.slane %v2154, 4
      %v2157 = vor.u32 %v2153, %v2156
      %v2158 = vsel %vm506, %v2149, %v2157
      %v2160 = vshrl.u32 %v2112, 16
      %v2162 = vrot.slane %v2160, 3
      %v2163 = vshll.u32 %v2112, 16
      %v2165 = vrot.slane %v2163, 4
      %v2166 = vor.u32 %v2162, %v2165
      %v2168 = vshrl.u32 %v2113, 16
      %v2170 = vrot.slane %v2168, 3
      %v2171 = vshll.u32 %v2113, 16
      %v2173 = vrot.slane %v2171, 4
      %v2174 = vor.u32 %v2170, %v2173
      %v2175 = vsel %vm506, %v2166, %v2174
      %v2177 = vshrl.u32 %v2114, 16
      %v2179 = vrot.slane %v2177, 3
      %v2180 = vshll.u32 %v2114, 16
      %v2182 = vrot.slane %v2180, 4
      %v2183 = vor.u32 %v2179, %v2182
      %v2185 = vshrl.u32 %v2115, 16
      %v2187 = vrot.slane %v2185, 3
      %v2188 = vshll.u32 %v2115, 16
      %v2190 = vrot.slane %v2188, 4
      %v2191 = vor.u32 %v2187, %v2190
      %v2192 = vsel %vm506, %v2183, %v2191
      %v2194 = vshrl.u32 %v2116, 16
      %v2196 = vrot.slane %v2194, 3
      %v2197 = vshll.u32 %v2116, 16
      %v2199 = vrot.slane %v2197, 4
      %v2200 = vor.u32 %v2196, %v2199
      %v2202 = vshrl.u32 %v2117, 16
      %v2204 = vrot.slane %v2202, 3
      %v2205 = vshll.u32 %v2117, 16
      %v2207 = vrot.slane %v2205, 4
      %v2208 = vor.u32 %v2204, %v2207
      %v2209 = vsel %vm506, %v2200, %v2208
      %v2211 = vshrl.u32 %v2118, 16
      %v2213 = vrot.slane %v2211, 3
      %v2214 = vshll.u32 %v2118, 16
      %v2216 = vrot.slane %v2214, 4
      %v2217 = vor.u32 %v2213, %v2216
      %v2219 = vshrl.u32 %v2119, 16
      %v2221 = vrot.slane %v2219, 3
      %v2222 = vshll.u32 %v2119, 16
      %v2224 = vrot.slane %v2222, 4
      %v2225 = vor.u32 %v2221, %v2224
      %v2226 = vsel %vm506, %v2217, %v2225
      %v2228 = vshrl.u32 %v2120, 16
      %v2230 = vrot.slane %v2228, 3
      %v2231 = vshll.u32 %v2120, 16
      %v2233 = vrot.slane %v2231, 4
      %v2234 = vor.u32 %v2230, %v2233
      %v2236 = vshrl.u32 %v2121, 16
      %v2238 = vrot.slane %v2236, 3
      %v2239 = vshll.u32 %v2121, 16
      %v2241 = vrot.slane %v2239, 4
      %v2242 = vor.u32 %v2238, %v2241
      %v2243 = vsel %vm506, %v2234, %v2242
      %v2245 = vshrl.u32 %v2122, 16
      %v2247 = vrot.slane %v2245, 3
      %v2248 = vshll.u32 %v2122, 16
      %v2250 = vrot.slane %v2248, 4
      %v2251 = vor.u32 %v2247, %v2250
      %v2253 = vshrl.u32 %v2123, 16
      %v2255 = vrot.slane %v2253, 3
      %v2256 = vshll.u32 %v2123, 16
      %v2258 = vrot.slane %v2256, 4
      %v2259 = vor.u32 %v2255, %v2258
      %v2260 = vsel %vm506, %v2251, %v2259
      %v2262 = vshrl.u32 %v2124, 16
      %v2264 = vrot.slane %v2262, 3
      %v2265 = vshll.u32 %v2124, 16
      %v2267 = vrot.slane %v2265, 4
      %v2268 = vor.u32 %v2264, %v2267
      %v2270 = vshrl.u32 %v2125, 16
      %v2272 = vrot.slane %v2270, 3
      %v2273 = vshll.u32 %v2125, 16
      %v2275 = vrot.slane %v2273, 4
      %v2276 = vor.u32 %v2272, %v2275
      %v2277 = vsel %vm506, %v2268, %v2276
      %v2279 = vshrl.u32 %v2126, 16
      %v2281 = vrot.slane %v2279, 3
      %v2282 = vshll.u32 %v2126, 16
      %v2284 = vrot.slane %v2282, 4
      %v2285 = vor.u32 %v2281, %v2284
      %v2287 = vshrl.u32 %v2127, 16
      %v2289 = vrot.slane %v2287, 3
      %v2290 = vshll.u32 %v2127, 16
      %v2292 = vrot.slane %v2290, 4
      %v2293 = vor.u32 %v2289, %v2292
      %v2294 = vsel %vm506, %v2285, %v2293
      %v2296 = vshrl.u32 %v2128, 16
      %v2298 = vrot.slane %v2296, 3
      %v2299 = vshll.u32 %v2128, 16
      %v2301 = vrot.slane %v2299, 4
      %v2302 = vor.u32 %v2298, %v2301
      %v2304 = vshrl.u32 %v2129, 16
      %v2306 = vrot.slane %v2304, 3
      %v2307 = vshll.u32 %v2129, 16
      %v2309 = vrot.slane %v2307, 4
      %v2310 = vor.u32 %v2306, %v2309
      %v2311 = vsel %vm506, %v2302, %v2310
      %v2313 = vshrl.u32 %v2130, 16
      %v2315 = vrot.slane %v2313, 3
      %v2316 = vshll.u32 %v2130, 16
      %v2318 = vrot.slane %v2316, 4
      %v2319 = vor.u32 %v2315, %v2318
      %v2321 = vshrl.u32 %v2131, 16
      %v2323 = vrot.slane %v2321, 3
      %v2324 = vshll.u32 %v2131, 16
      %v2326 = vrot.slane %v2324, 4
      %v2327 = vor.u32 %v2323, %v2326
      %v2328 = vsel %vm506, %v2319, %v2327
      %v2330 = vshrl.u32 %v2132, 16
      %v2332 = vrot.slane %v2330, 3
      %v2333 = vshll.u32 %v2132, 16
      %v2335 = vrot.slane %v2333, 4
      %v2336 = vor.u32 %v2332, %v2335
      %v2338 = vshrl.u32 %v2133, 16
      %v2340 = vrot.slane %v2338, 3
      %v2341 = vshll.u32 %v2133, 16
      %v2343 = vrot.slane %v2341, 4
      %v2344 = vor.u32 %v2340, %v2343
      %v2345 = vsel %vm506, %v2336, %v2344
      %v2347 = vshrl.u32 %v2134, 16
      %v2349 = vrot.slane %v2347, 3
      %v2350 = vshll.u32 %v2134, 16
      %v2352 = vrot.slane %v2350, 4
      %v2353 = vor.u32 %v2349, %v2352
      %v2355 = vshrl.u32 %v2135, 16
      %v2357 = vrot.slane %v2355, 3
      %v2358 = vshll.u32 %v2135, 16
      %v2360 = vrot.slane %v2358, 4
      %v2361 = vor.u32 %v2357, %v2360
      %v2362 = vsel %vm506, %v2353, %v2361
      %v2364 = vshrl.u32 %v2136, 16
      %v2366 = vrot.slane %v2364, 3
      %v2367 = vshll.u32 %v2136, 16
      %v2369 = vrot.slane %v2367, 4
      %v2370 = vor.u32 %v2366, %v2369
      %v2372 = vshrl.u32 %v2137, 16
      %v2374 = vrot.slane %v2372, 3
      %v2375 = vshll.u32 %v2137, 16
      %v2377 = vrot.slane %v2375, 4
      %v2378 = vor.u32 %v2374, %v2377
      %v2379 = vsel %vm506, %v2370, %v2378
      %v2381 = vshrl.u32 %v2138, 16
      %v2383 = vrot.slane %v2381, 3
      %v2384 = vshll.u32 %v2138, 16
      %v2386 = vrot.slane %v2384, 4
      %v2387 = vor.u32 %v2383, %v2386
      %v2389 = vshrl.u32 %v2139, 16
      %v2391 = vrot.slane %v2389, 3
      %v2392 = vshll.u32 %v2139, 16
      %v2394 = vrot.slane %v2392, 4
      %v2395 = vor.u32 %v2391, %v2394
      %v2396 = vsel %vm506, %v2387, %v2395
      %v2398 = vshrl.u32 %v2140, 16
      %v2400 = vrot.slane %v2398, 3
      %v2401 = vshll.u32 %v2140, 16
      %v2403 = vrot.slane %v2401, 4
      %v2404 = vor.u32 %v2400, %v2403
      %v2406 = vshrl.u32 %v2141, 16
      %v2408 = vrot.slane %v2406, 3
      %v2409 = vshll.u32 %v2141, 16
      %v2411 = vrot.slane %v2409, 4
      %v2412 = vor.u32 %v2408, %v2411
      %v2413 = vsel %vm506, %v2404, %v2412
      %2430 = vst [vmem:[#allocation3 + $0x30] sm:$0xff] %v2158
      %2431 = vst [vmem:[#allocation3 + $0x78] sm:$0xff] %v2175
      %2432 = vst [vmem:[#allocation3 + $0xc0] sm:$0xff] %v2192
      %2433 = vst [vmem:[#allocation3 + $0x108] sm:$0xff] %v2209
      %2434 = vst [vmem:[#allocation3 + $0x150] sm:$0xff] %v2226
      %2435 = vst [vmem:[#allocation3 + $0x198] sm:$0xff] %v2243
      %2436 = vst [vmem:[#allocation3 + $0x1e0] sm:$0xff] %v2260
      %2437 = vst [vmem:[#allocation3 + $0x228] sm:$0xff] %v2277
      %2438 = vst [vmem:[#allocation3 + $0x270] sm:$0xff] %v2294
      %2439 = vst [vmem:[#allocation3 + $0x2b8] sm:$0xff] %v2311
      %2440 = vst [vmem:[#allocation3 + $0x300] sm:$0xff] %v2328
      %2441 = vst [vmem:[#allocation3 + $0x348] sm:$0xff] %v2345
      %2442 = vst [vmem:[#allocation3 + $0x390] sm:$0xff] %v2362
      %2443 = vst [vmem:[#allocation3 + $0x3d8] sm:$0xff] %v2379
      %2444 = vst [vmem:[#allocation3 + $0x420] sm:$0xff] %v2396
      %2445 = vst [vmem:[#allocation3 + $0x468] sm:$0xff] %v2413
      %v2446 = vld [vmem:[%s2109] sm:$0xf0]
      %v2447 = vld [vmem:[%s2109 + $0x8] sm:$0xf]
      %v2448 = vld [vmem:[%s2109 + $0x10] sm:$0xf0]
      %v2449 = vld [vmem:[%s2109 + $0x18] sm:$0xf]
      %v2450 = vld [vmem:[%s2109 + $0x20] sm:$0xf0]
      %v2451 = vld [vmem:[%s2109 + $0x28] sm:$0xf]
      %v2452 = vld [vmem:[%s2109 + $0x30] sm:$0xf0]
      %v2453 = vld [vmem:[%s2109 + $0x38] sm:$0xf]
      %v2454 = vld [vmem:[%s2109 + $0x40] sm:$0xf0]
      %v2455 = vld [vmem:[%s2109 + $0x48] sm:$0xf]
      %v2456 = vld [vmem:[%s2109 + $0x50] sm:$0xf0]
      %v2457 = vld [vmem:[%s2109 + $0x58] sm:$0xf]
      %v2458 = vld [vmem:[%s2109 + $0x60] sm:$0xf0]
      %v2459 = vld [vmem:[%s2109 + $0x68] sm:$0xf]
      %v2460 = vld [vmem:[%s2109 + $0x70] sm:$0xf0]
      %v2461 = vld [vmem:[%s2109 + $0x78] sm:$0xf]
      %v2462 = vld [vmem:[%s2109 + $0x80] sm:$0xf0]
      %v2463 = vld [vmem:[%s2109 + $0x88] sm:$0xf]
      %v2464 = vld [vmem:[%s2109 + $0x90] sm:$0xf0]
      %v2465 = vld [vmem:[%s2109 + $0x98] sm:$0xf]
      %v2466 = vld [vmem:[%s2109 + $0xa0] sm:$0xf0]
      %v2467 = vld [vmem:[%s2109 + $0xa8] sm:$0xf]
      %v2468 = vld [vmem:[%s2109 + $0xb0] sm:$0xf0]
      %v2469 = vld [vmem:[%s2109 + $0xb8] sm:$0xf]
      %v2470 = vld [vmem:[%s2109 + $0xc0] sm:$0xf0]
      %v2471 = vld [vmem:[%s2109 + $0xc8] sm:$0xf]
      %v2472 = vld [vmem:[%s2109 + $0xd0] sm:$0xf0]
      %v2473 = vld [vmem:[%s2109 + $0xd8] sm:$0xf]
      %v2474 = vld [vmem:[%s2109 + $0xe0] sm:$0xf0]
      %v2475 = vld [vmem:[%s2109 + $0xe8] sm:$0xf]
      %v2476 = vld [vmem:[%s2109 + $0xf0] sm:$0xf0]
      %v2477 = vld [vmem:[%s2109 + $0xf8] sm:$0xf]
      %v2510 = vrot.slane %v2446, 4
      %v2511 = vrot.slane %v2447, 4
      %v2512 = vsel %vm875, %v2510, %v2511
      %v2513 = vrot.slane %v2448, 4
      %v2514 = vrot.slane %v2449, 4
      %v2515 = vsel %vm875, %v2513, %v2514
      %v2516 = vrot.slane %v2450, 4
      %v2517 = vrot.slane %v2451, 4
      %v2518 = vsel %vm875, %v2516, %v2517
      %v2519 = vrot.slane %v2452, 4
      %v2520 = vrot.slane %v2453, 4
      %v2521 = vsel %vm875, %v2519, %v2520
      %v2522 = vrot.slane %v2454, 4
      %v2523 = vrot.slane %v2455, 4
      %v2524 = vsel %vm875, %v2522, %v2523
      %v2525 = vrot.slane %v2456, 4
      %v2526 = vrot.slane %v2457, 4
      %v2527 = vsel %vm875, %v2525, %v2526
      %v2528 = vrot.slane %v2458, 4
      %v2529 = vrot.slane %v2459, 4
      %v2530 = vsel %vm875, %v2528, %v2529
      %v2531 = vrot.slane %v2460, 4
      %v2532 = vrot.slane %v2461, 4
      %v2533 = vsel %vm875, %v2531, %v2532
      %v2534 = vrot.slane %v2462, 4
      %v2535 = vrot.slane %v2463, 4
      %v2536 = vsel %vm875, %v2534, %v2535
      %v2537 = vrot.slane %v2464, 4
      %v2538 = vrot.slane %v2465, 4
      %v2539 = vsel %vm875, %v2537, %v2538
      %v2540 = vrot.slane %v2466, 4
      %v2541 = vrot.slane %v2467, 4
      %v2542 = vsel %vm875, %v2540, %v2541
      %v2543 = vrot.slane %v2468, 4
      %v2544 = vrot.slane %v2469, 4
      %v2545 = vsel %vm875, %v2543, %v2544
      %v2546 = vrot.slane %v2470, 4
      %v2547 = vrot.slane %v2471, 4
      %v2548 = vsel %vm875, %v2546, %v2547
      %v2549 = vrot.slane %v2472, 4
      %v2550 = vrot.slane %v2473, 4
      %v2551 = vsel %vm875, %v2549, %v2550
      %v2552 = vrot.slane %v2474, 4
      %v2553 = vrot.slane %v2475, 4
      %v2554 = vsel %vm875, %v2552, %v2553
      %v2555 = vrot.slane %v2476, 4
      %v2556 = vrot.slane %v2477, 4
      %v2557 = vsel %vm875, %v2555, %v2556
      %2574 = vst [vmem:[#allocation3 + $0x38] sm:$0xff] %v2512
      %2575 = vst [vmem:[#allocation3 + $0x80] sm:$0xff] %v2515
      %2576 = vst [vmem:[#allocation3 + $0xc8] sm:$0xff] %v2518
      %2577 = vst [vmem:[#allocation3 + $0x110] sm:$0xff] %v2521
      %2578 = vst [vmem:[#allocation3 + $0x158] sm:$0xff] %v2524
      %2579 = vst [vmem:[#allocation3 + $0x1a0] sm:$0xff] %v2527
      %2580 = vst [vmem:[#allocation3 + $0x1e8] sm:$0xff] %v2530
      %2581 = vst [vmem:[#allocation3 + $0x230] sm:$0xff] %v2533
      %2582 = vst [vmem:[#allocation3 + $0x278] sm:$0xff] %v2536
      %2583 = vst [vmem:[#allocation3 + $0x2c0] sm:$0xff] %v2539
      %2584 = vst [vmem:[#allocation3 + $0x308] sm:$0xff] %v2542
      %2585 = vst [vmem:[#allocation3 + $0x350] sm:$0xff] %v2545
      %2586 = vst [vmem:[#allocation3 + $0x398] sm:$0xff] %v2548
      %2587 = vst [vmem:[#allocation3 + $0x3e0] sm:$0xff] %v2551
      %2588 = vst [vmem:[#allocation3 + $0x428] sm:$0xff] %v2554
      %2589 = vst [vmem:[#allocation3 + $0x470] sm:$0xff] %v2557
      %v2590 = vld [vmem:[%s2109] sm:$0xf0]
      %v2591 = vld [vmem:[%s2109 + $0x8] sm:$0x1f]
      %v2592 = vld [vmem:[%s2109 + $0x10] sm:$0xf0]
      %v2593 = vld [vmem:[%s2109 + $0x18] sm:$0x1f]
      %v2594 = vld [vmem:[%s2109 + $0x20] sm:$0xf0]
      %v2595 = vld [vmem:[%s2109 + $0x28] sm:$0x1f]
      %v2596 = vld [vmem:[%s2109 + $0x30] sm:$0xf0]
      %v2597 = vld [vmem:[%s2109 + $0x38] sm:$0x1f]
      %v2598 = vld [vmem:[%s2109 + $0x40] sm:$0xf0]
      %v2599 = vld [vmem:[%s2109 + $0x48] sm:$0x1f]
      %v2600 = vld [vmem:[%s2109 + $0x50] sm:$0xf0]
      %v2601 = vld [vmem:[%s2109 + $0x58] sm:$0x1f]
      %v2602 = vld [vmem:[%s2109 + $0x60] sm:$0xf0]
      %v2603 = vld [vmem:[%s2109 + $0x68] sm:$0x1f]
      %v2604 = vld [vmem:[%s2109 + $0x70] sm:$0xf0]
      %v2605 = vld [vmem:[%s2109 + $0x78] sm:$0x1f]
      %v2606 = vld [vmem:[%s2109 + $0x80] sm:$0xf0]
      %v2607 = vld [vmem:[%s2109 + $0x88] sm:$0x1f]
      %v2608 = vld [vmem:[%s2109 + $0x90] sm:$0xf0]
      %v2609 = vld [vmem:[%s2109 + $0x98] sm:$0x1f]
      %v2610 = vld [vmem:[%s2109 + $0xa0] sm:$0xf0]
      %v2611 = vld [vmem:[%s2109 + $0xa8] sm:$0x1f]
      %v2612 = vld [vmem:[%s2109 + $0xb0] sm:$0xf0]
      %v2613 = vld [vmem:[%s2109 + $0xb8] sm:$0x1f]
      %v2614 = vld [vmem:[%s2109 + $0xc0] sm:$0xf0]
      %v2615 = vld [vmem:[%s2109 + $0xc8] sm:$0x1f]
      %v2616 = vld [vmem:[%s2109 + $0xd0] sm:$0xf0]
      %v2617 = vld [vmem:[%s2109 + $0xd8] sm:$0x1f]
      %v2618 = vld [vmem:[%s2109 + $0xe0] sm:$0xf0]
      %v2619 = vld [vmem:[%s2109 + $0xe8] sm:$0x1f]
      %v2620 = vld [vmem:[%s2109 + $0xf0] sm:$0xf0]
      %v2621 = vld [vmem:[%s2109 + $0xf8] sm:$0x1f]
      %v2623 = vshrl.u32 %v2590, 16
      %v2625 = vrot.slane %v2623, 4
      %v2626 = vshll.u32 %v2590, 16
      %v2628 = vrot.slane %v2626, 5
      %v2629 = vor.u32 %v2625, %v2628
      %v2631 = vshrl.u32 %v2591, 16
      %v2633 = vrot.slane %v2631, 4
      %v2634 = vshll.u32 %v2591, 16
      %v2636 = vrot.slane %v2634, 5
      %v2637 = vor.u32 %v2633, %v2636
      %v2638 = vsel %vm988, %v2629, %v2637
      %v2640 = vshrl.u32 %v2592, 16
      %v2642 = vrot.slane %v2640, 4
      %v2643 = vshll.u32 %v2592, 16
      %v2645 = vrot.slane %v2643, 5
      %v2646 = vor.u32 %v2642, %v2645
      %v2648 = vshrl.u32 %v2593, 16
      %v2650 = vrot.slane %v2648, 4
      %v2651 = vshll.u32 %v2593, 16
      %v2653 = vrot.slane %v2651, 5
      %v2654 = vor.u32 %v2650, %v2653
      %v2655 = vsel %vm988, %v2646, %v2654
      %v2657 = vshrl.u32 %v2594, 16
      %v2659 = vrot.slane %v2657, 4
      %v2660 = vshll.u32 %v2594, 16
      %v2662 = vrot.slane %v2660, 5
      %v2663 = vor.u32 %v2659, %v2662
      %v2665 = vshrl.u32 %v2595, 16
      %v2667 = vrot.slane %v2665, 4
      %v2668 = vshll.u32 %v2595, 16
      %v2670 = vrot.slane %v2668, 5
      %v2671 = vor.u32 %v2667, %v2670
      %v2672 = vsel %vm988, %v2663, %v2671
      %v2674 = vshrl.u32 %v2596, 16
      %v2676 = vrot.slane %v2674, 4
      %v2677 = vshll.u32 %v2596, 16
      %v2679 = vrot.slane %v2677, 5
      %v2680 = vor.u32 %v2676, %v2679
      %v2682 = vshrl.u32 %v2597, 16
      %v2684 = vrot.slane %v2682, 4
      %v2685 = vshll.u32 %v2597, 16
      %v2687 = vrot.slane %v2685, 5
      %v2688 = vor.u32 %v2684, %v2687
      %v2689 = vsel %vm988, %v2680, %v2688
      %v2691 = vshrl.u32 %v2598, 16
      %v2693 = vrot.slane %v2691, 4
      %v2694 = vshll.u32 %v2598, 16
      %v2696 = vrot.slane %v2694, 5
      %v2697 = vor.u32 %v2693, %v2696
      %v2699 = vshrl.u32 %v2599, 16
      %v2701 = vrot.slane %v2699, 4
      %v2702 = vshll.u32 %v2599, 16
      %v2704 = vrot.slane %v2702, 5
      %v2705 = vor.u32 %v2701, %v2704
      %v2706 = vsel %vm988, %v2697, %v2705
      %v2708 = vshrl.u32 %v2600, 16
      %v2710 = vrot.slane %v2708, 4
      %v2711 = vshll.u32 %v2600, 16
      %v2713 = vrot.slane %v2711, 5
      %v2714 = vor.u32 %v2710, %v2713
      %v2716 = vshrl.u32 %v2601, 16
      %v2718 = vrot.slane %v2716, 4
      %v2719 = vshll.u32 %v2601, 16
      %v2721 = vrot.slane %v2719, 5
      %v2722 = vor.u32 %v2718, %v2721
      %v2723 = vsel %vm988, %v2714, %v2722
      %v2725 = vshrl.u32 %v2602, 16
      %v2727 = vrot.slane %v2725, 4
      %v2728 = vshll.u32 %v2602, 16
      %v2730 = vrot.slane %v2728, 5
      %v2731 = vor.u32 %v2727, %v2730
      %v2733 = vshrl.u32 %v2603, 16
      %v2735 = vrot.slane %v2733, 4
      %v2736 = vshll.u32 %v2603, 16
      %v2738 = vrot.slane %v2736, 5
      %v2739 = vor.u32 %v2735, %v2738
      %v2740 = vsel %vm988, %v2731, %v2739
      %v2742 = vshrl.u32 %v2604, 16
      %v2744 = vrot.slane %v2742, 4
      %v2745 = vshll.u32 %v2604, 16
      %v2747 = vrot.slane %v2745, 5
      %v2748 = vor.u32 %v2744, %v2747
      %v2750 = vshrl.u32 %v2605, 16
      %v2752 = vrot.slane %v2750, 4
      %v2753 = vshll.u32 %v2605, 16
      %v2755 = vrot.slane %v2753, 5
      %v2756 = vor.u32 %v2752, %v2755
      %v2757 = vsel %vm988, %v2748, %v2756
      %v2759 = vshrl.u32 %v2606, 16
      %v2761 = vrot.slane %v2759, 4
      %v2762 = vshll.u32 %v2606, 16
      %v2764 = vrot.slane %v2762, 5
      %v2765 = vor.u32 %v2761, %v2764
      %v2767 = vshrl.u32 %v2607, 16
      %v2769 = vrot.slane %v2767, 4
      %v2770 = vshll.u32 %v2607, 16
      %v2772 = vrot.slane %v2770, 5
      %v2773 = vor.u32 %v2769, %v2772
      %v2774 = vsel %vm988, %v2765, %v2773
      %v2776 = vshrl.u32 %v2608, 16
      %v2778 = vrot.slane %v2776, 4
      %v2779 = vshll.u32 %v2608, 16
      %v2781 = vrot.slane %v2779, 5
      %v2782 = vor.u32 %v2778, %v2781
      %v2784 = vshrl.u32 %v2609, 16
      %v2786 = vrot.slane %v2784, 4
      %v2787 = vshll.u32 %v2609, 16
      %v2789 = vrot.slane %v2787, 5
      %v2790 = vor.u32 %v2786, %v2789
      %v2791 = vsel %vm988, %v2782, %v2790
      %v2793 = vshrl.u32 %v2610, 16
      %v2795 = vrot.slane %v2793, 4
      %v2796 = vshll.u32 %v2610, 16
      %v2798 = vrot.slane %v2796, 5
      %v2799 = vor.u32 %v2795, %v2798
      %v2801 = vshrl.u32 %v2611, 16
      %v2803 = vrot.slane %v2801, 4
      %v2804 = vshll.u32 %v2611, 16
      %v2806 = vrot.slane %v2804, 5
      %v2807 = vor.u32 %v2803, %v2806
      %v2808 = vsel %vm988, %v2799, %v2807
      %v2810 = vshrl.u32 %v2612, 16
      %v2812 = vrot.slane %v2810, 4
      %v2813 = vshll.u32 %v2612, 16
      %v2815 = vrot.slane %v2813, 5
      %v2816 = vor.u32 %v2812, %v2815
      %v2818 = vshrl.u32 %v2613, 16
      %v2820 = vrot.slane %v2818, 4
      %v2821 = vshll.u32 %v2613, 16
      %v2823 = vrot.slane %v2821, 5
      %v2824 = vor.u32 %v2820, %v2823
      %v2825 = vsel %vm988, %v2816, %v2824
      %v2827 = vshrl.u32 %v2614, 16
      %v2829 = vrot.slane %v2827, 4
      %v2830 = vshll.u32 %v2614, 16
      %v2832 = vrot.slane %v2830, 5
      %v2833 = vor.u32 %v2829, %v2832
      %v2835 = vshrl.u32 %v2615, 16
      %v2837 = vrot.slane %v2835, 4
      %v2838 = vshll.u32 %v2615, 16
      %v2840 = vrot.slane %v2838, 5
      %v2841 = vor.u32 %v2837, %v2840
      %v2842 = vsel %vm988, %v2833, %v2841
      %v2844 = vshrl.u32 %v2616, 16
      %v2846 = vrot.slane %v2844, 4
      %v2847 = vshll.u32 %v2616, 16
      %v2849 = vrot.slane %v2847, 5
      %v2850 = vor.u32 %v2846, %v2849
      %v2852 = vshrl.u32 %v2617, 16
      %v2854 = vrot.slane %v2852, 4
      %v2855 = vshll.u32 %v2617, 16
      %v2857 = vrot.slane %v2855, 5
      %v2858 = vor.u32 %v2854, %v2857
      %v2859 = vsel %vm988, %v2850, %v2858
      %v2861 = vshrl.u32 %v2618, 16
      %v2863 = vrot.slane %v2861, 4
      %v2864 = vshll.u32 %v2618, 16
      %v2866 = vrot.slane %v2864, 5
      %v2867 = vor.u32 %v2863, %v2866
      %v2869 = vshrl.u32 %v2619, 16
      %v2871 = vrot.slane %v2869, 4
      %v2872 = vshll.u32 %v2619, 16
      %v2874 = vrot.slane %v2872, 5
      %v2875 = vor.u32 %v2871, %v2874
      %v2876 = vsel %vm988, %v2867, %v2875
      %v2878 = vshrl.u32 %v2620, 16
      %v2880 = vrot.slane %v2878, 4
      %v2881 = vshll.u32 %v2620, 16
      %v2883 = vrot.slane %v2881, 5
      %v2884 = vor.u32 %v2880, %v2883
      %v2886 = vshrl.u32 %v2621, 16
      %v2888 = vrot.slane %v2886, 4
      %v2889 = vshll.u32 %v2621, 16
      %v2891 = vrot.slane %v2889, 5
      %v2892 = vor.u32 %v2888, %v2891
      %v2893 = vsel %vm988, %v2884, %v2892
      %2910 = vst [vmem:[#allocation3 + $0x40] sm:$0xff] %v2638
      %2911 = vst [vmem:[#allocation3 + $0x88] sm:$0xff] %v2655
      %2912 = vst [vmem:[#allocation3 + $0xd0] sm:$0xff] %v2672
      %2913 = vst [vmem:[#allocation3 + $0x118] sm:$0xff] %v2689
      %2914 = vst [vmem:[#allocation3 + $0x160] sm:$0xff] %v2706
      %2915 = vst [vmem:[#allocation3 + $0x1a8] sm:$0xff] %v2723
      %2916 = vst [vmem:[#allocation3 + $0x1f0] sm:$0xff] %v2740
      %2917 = vst [vmem:[#allocation3 + $0x238] sm:$0xff] %v2757
      %2918 = vst [vmem:[#allocation3 + $0x280] sm:$0xff] %v2774
      %2919 = vst [vmem:[#allocation3 + $0x2c8] sm:$0xff] %v2791
      %2920 = vst [vmem:[#allocation3 + $0x310] sm:$0xff] %v2808
      %2921 = vst [vmem:[#allocation3 + $0x358] sm:$0xff] %v2825
      %2922 = vst [vmem:[#allocation3 + $0x3a0] sm:$0xff] %v2842
      %2923 = vst [vmem:[#allocation3 + $0x3e8] sm:$0xff] %v2859
      %2924 = vst [vmem:[#allocation3 + $0x430] sm:$0xff] %v2876
      %2925 = vst [vmem:[#allocation3 + $0x478] sm:$0xff] %v2893
      %v2926 = vld [vmem:[#allocation3] sm:$0xff]
      %v2927 = vld [vmem:[#allocation3 + $0x8] sm:$0xff]
      %v2928 = vld [vmem:[#allocation3 + $0x10] sm:$0xff]
      %v2929 = vld [vmem:[#allocation3 + $0x18] sm:$0xff]
      %v2930 = vld [vmem:[#allocation3 + $0x20] sm:$0xff]
      %v2931 = vld [vmem:[#allocation3 + $0x28] sm:$0xff]
      %v2932 = vld [vmem:[#allocation3 + $0x30] sm:$0xff]
      %v2933 = vld [vmem:[#allocation3 + $0x38] sm:$0xff]
      %v2934 = vld [vmem:[#allocation3 + $0x40] sm:$0xff]
      %v2935 = vld [vmem:[#allocation3 + $0x48] sm:$0xff]
      %v2936 = vld [vmem:[#allocation3 + $0x50] sm:$0xff]
      %v2937 = vld [vmem:[#allocation3 + $0x58] sm:$0xff]
      %v2938 = vld [vmem:[#allocation3 + $0x60] sm:$0xff]
      %v2939 = vld [vmem:[#allocation3 + $0x68] sm:$0xff]
      %v2940 = vld [vmem:[#allocation3 + $0x70] sm:$0xff]
      %v2941 = vld [vmem:[#allocation3 + $0x78] sm:$0xff]
      %v2942 = vld [vmem:[#allocation3 + $0x80] sm:$0xff]
      %v2943 = vld [vmem:[#allocation3 + $0x88] sm:$0xff]
      %v2944 = vld [vmem:[#allocation3 + $0x90] sm:$0xff]
      %v2945 = vld [vmem:[#allocation3 + $0x98] sm:$0xff]
      %v2946 = vld [vmem:[#allocation3 + $0xa0] sm:$0xff]
      %v2947 = vld [vmem:[#allocation3 + $0xa8] sm:$0xff]
      %v2948 = vld [vmem:[#allocation3 + $0xb0] sm:$0xff]
      %v2949 = vld [vmem:[#allocation3 + $0xb8] sm:$0xff]
      %v2950 = vld [vmem:[#allocation3 + $0xc0] sm:$0xff]
      %v2951 = vld [vmem:[#allocation3 + $0xc8] sm:$0xff]
      %v2952 = vld [vmem:[#allocation3 + $0xd0] sm:$0xff]
      %v2953 = vld [vmem:[#allocation3 + $0xd8] sm:$0xff]
      %v2954 = vld [vmem:[#allocation3 + $0xe0] sm:$0xff]
      %v2955 = vld [vmem:[#allocation3 + $0xe8] sm:$0xff]
      %v2956 = vld [vmem:[#allocation3 + $0xf0] sm:$0xff]
      %v2957 = vld [vmem:[#allocation3 + $0xf8] sm:$0xff]
      %v2958 = vld [vmem:[#allocation3 + $0x100] sm:$0xff]
      %v2959 = vld [vmem:[#allocation3 + $0x108] sm:$0xff]
      %v2960 = vld [vmem:[#allocation3 + $0x110] sm:$0xff]
      %v2961 = vld [vmem:[#allocation3 + $0x118] sm:$0xff]
      %v2962 = vld [vmem:[#allocation3 + $0x120] sm:$0xff]
      %v2963 = vld [vmem:[#allocation3 + $0x128] sm:$0xff]
      %v2964 = vld [vmem:[#allocation3 + $0x130] sm:$0xff]
      %v2965 = vld [vmem:[#allocation3 + $0x138] sm:$0xff]
      %v2966 = vld [vmem:[#allocation3 + $0x140] sm:$0xff]
      %v2967 = vld [vmem:[#allocation3 + $0x148] sm:$0xff]
      %v2968 = vld [vmem:[#allocation3 + $0x150] sm:$0xff]
      %v2969 = vld [vmem:[#allocation3 + $0x158] sm:$0xff]
      %v2970 = vld [vmem:[#allocation3 + $0x160] sm:$0xff]
      %v2971 = vld [vmem:[#allocation3 + $0x168] sm:$0xff]
      %v2972 = vld [vmem:[#allocation3 + $0x170] sm:$0xff]
      %v2973 = vld [vmem:[#allocation3 + $0x178] sm:$0xff]
      %v2974 = vld [vmem:[#allocation3 + $0x180] sm:$0xff]
      %v2975 = vld [vmem:[#allocation3 + $0x188] sm:$0xff]
      %v2976 = vld [vmem:[#allocation3 + $0x190] sm:$0xff]
      %v2977 = vld [vmem:[#allocation3 + $0x198] sm:$0xff]
      %v2978 = vld [vmem:[#allocation3 + $0x1a0] sm:$0xff]
      %v2979 = vld [vmem:[#allocation3 + $0x1a8] sm:$0xff]
      %v2980 = vld [vmem:[#allocation3 + $0x1b0] sm:$0xff]
      %v2981 = vld [vmem:[#allocation3 + $0x1b8] sm:$0xff]
      %v2982 = vld [vmem:[#allocation3 + $0x1c0] sm:$0xff]
      %v2983 = vld [vmem:[#allocation3 + $0x1c8] sm:$0xff]
      %v2984 = vld [vmem:[#allocation3 + $0x1d0] sm:$0xff]
      %v2985 = vld [vmem:[#allocation3 + $0x1d8] sm:$0xff]
      %v2986 = vld [vmem:[#allocation3 + $0x1e0] sm:$0xff]
      %v2987 = vld [vmem:[#allocation3 + $0x1e8] sm:$0xff]
      %v2988 = vld [vmem:[#allocation3 + $0x1f0] sm:$0xff]
      %v2989 = vld [vmem:[#allocation3 + $0x1f8] sm:$0xff]
      %v2990 = vld [vmem:[#allocation3 + $0x200] sm:$0xff]
      %v2991 = vld [vmem:[#allocation3 + $0x208] sm:$0xff]
      %v2992 = vld [vmem:[#allocation3 + $0x210] sm:$0xff]
      %v2993 = vld [vmem:[#allocation3 + $0x218] sm:$0xff]
      %v2994 = vld [vmem:[#allocation3 + $0x220] sm:$0xff]
      %v2995 = vld [vmem:[#allocation3 + $0x228] sm:$0xff]
      %v2996 = vld [vmem:[#allocation3 + $0x230] sm:$0xff]
      %v2997 = vld [vmem:[#allocation3 + $0x238] sm:$0xff]
      %v2998 = vld [vmem:[#allocation3 + $0x240] sm:$0xff]
      %v2999 = vld [vmem:[#allocation3 + $0x248] sm:$0xff]
      %v3000 = vld [vmem:[#allocation3 + $0x250] sm:$0xff]
      %v3001 = vld [vmem:[#allocation3 + $0x258] sm:$0xff]
      %v3002 = vld [vmem:[#allocation3 + $0x260] sm:$0xff]
      %v3003 = vld [vmem:[#allocation3 + $0x268] sm:$0xff]
      %v3004 = vld [vmem:[#allocation3 + $0x270] sm:$0xff]
      %v3005 = vld [vmem:[#allocation3 + $0x278] sm:$0xff]
      %v3006 = vld [vmem:[#allocation3 + $0x280] sm:$0xff]
      %v3007 = vld [vmem:[#allocation3 + $0x288] sm:$0xff]
      %v3008 = vld [vmem:[#allocation3 + $0x290] sm:$0xff]
      %v3009 = vld [vmem:[#allocation3 + $0x298] sm:$0xff]
      %v3010 = vld [vmem:[#allocation3 + $0x2a0] sm:$0xff]
      %v3011 = vld [vmem:[#allocation3 + $0x2a8] sm:$0xff]
      %v3012 = vld [vmem:[#allocation3 + $0x2b0] sm:$0xff]
      %v3013 = vld [vmem:[#allocation3 + $0x2b8] sm:$0xff]
      %v3014 = vld [vmem:[#allocation3 + $0x2c0] sm:$0xff]
      %v3015 = vld [vmem:[#allocation3 + $0x2c8] sm:$0xff]
      %v3016 = vld [vmem:[#allocation3 + $0x2d0] sm:$0xff]
      %v3017 = vld [vmem:[#allocation3 + $0x2d8] sm:$0xff]
      %v3018 = vld [vmem:[#allocation3 + $0x2e0] sm:$0xff]
      %v3019 = vld [vmem:[#allocation3 + $0x2e8] sm:$0xff]
      %v3020 = vld [vmem:[#allocation3 + $0x2f0] sm:$0xff]
      %v3021 = vld [vmem:[#allocation3 + $0x2f8] sm:$0xff]
      %v3022 = vld [vmem:[#allocation3 + $0x300] sm:$0xff]
      %v3023 = vld [vmem:[#allocation3 + $0x308] sm:$0xff]
      %v3024 = vld [vmem:[#allocation3 + $0x310] sm:$0xff]
      %v3025 = vld [vmem:[#allocation3 + $0x318] sm:$0xff]
      %v3026 = vld [vmem:[#allocation3 + $0x320] sm:$0xff]
      %v3027 = vld [vmem:[#allocation3 + $0x328] sm:$0xff]
      %v3028 = vld [vmem:[#allocation3 + $0x330] sm:$0xff]
      %v3029 = vld [vmem:[#allocation3 + $0x338] sm:$0xff]
      %v3030 = vld [vmem:[#allocation3 + $0x340] sm:$0xff]
      %v3031 = vld [vmem:[#allocation3 + $0x348] sm:$0xff]
      %v3032 = vld [vmem:[#allocation3 + $0x350] sm:$0xff]
      %v3033 = vld [vmem:[#allocation3 + $0x358] sm:$0xff]
      %v3034 = vld [vmem:[#allocation3 + $0x360] sm:$0xff]
      %v3035 = vld [vmem:[#allocation3 + $0x368] sm:$0xff]
      %v3036 = vld [vmem:[#allocation3 + $0x370] sm:$0xff]
      %v3037 = vld [vmem:[#allocation3 + $0x378] sm:$0xff]
      %v3038 = vld [vmem:[#allocation3 + $0x380] sm:$0xff]
      %v3039 = vld [vmem:[#allocation3 + $0x388] sm:$0xff]
      %v3040 = vld [vmem:[#allocation3 + $0x390] sm:$0xff]
      %v3041 = vld [vmem:[#allocation3 + $0x398] sm:$0xff]
      %v3042 = vld [vmem:[#allocation3 + $0x3a0] sm:$0xff]
      %v3043 = vld [vmem:[#allocation3 + $0x3a8] sm:$0xff]
      %v3044 = vld [vmem:[#allocation3 + $0x3b0] sm:$0xff]
      %v3045 = vld [vmem:[#allocation3 + $0x3b8] sm:$0xff]
      %v3046 = vld [vmem:[#allocation3 + $0x3c0] sm:$0xff]
      %v3047 = vld [vmem:[#allocation3 + $0x3c8] sm:$0xff]
      %v3048 = vld [vmem:[#allocation3 + $0x3d0] sm:$0xff]
      %v3049 = vld [vmem:[#allocation3 + $0x3d8] sm:$0xff]
      %v3050 = vld [vmem:[#allocation3 + $0x3e0] sm:$0xff]
      %v3051 = vld [vmem:[#allocation3 + $0x3e8] sm:$0xff]
      %v3052 = vld [vmem:[#allocation3 + $0x3f0] sm:$0xff]
      %v3053 = vld [vmem:[#allocation3 + $0x3f8] sm:$0xff]
      %v3054 = vld [vmem:[#allocation3 + $0x400] sm:$0xff]
      %v3055 = vld [vmem:[#allocation3 + $0x408] sm:$0xff]
      %v3056 = vld [vmem:[#allocation3 + $0x410] sm:$0xff]
      %v3057 = vld [vmem:[#allocation3 + $0x418] sm:$0xff]
      %v3058 = vld [vmem:[#allocation3 + $0x420] sm:$0xff]
      %v3059 = vld [vmem:[#allocation3 + $0x428] sm:$0xff]
      %v3060 = vld [vmem:[#allocation3 + $0x430] sm:$0xff]
      %v3061 = vld [vmem:[#allocation3 + $0x438] sm:$0xff]
      %v3062 = vld [vmem:[#allocation3 + $0x440] sm:$0xff]
      %v3063 = vld [vmem:[#allocation3 + $0x448] sm:$0xff]
      %v3064 = vld [vmem:[#allocation3 + $0x450] sm:$0xff]
      %v3065 = vld [vmem:[#allocation3 + $0x458] sm:$0xff]
      %v3066 = vld [vmem:[#allocation3 + $0x460] sm:$0xff]
      %v3067 = vld [vmem:[#allocation3 + $0x468] sm:$0xff]
      %v3068 = vld [vmem:[#allocation3 + $0x470] sm:$0xff]
      %v3069 = vld [vmem:[#allocation3 + $0x478] sm:$0xff]
      %v3070 = vld [vmem:[%s1] sm:$0xf]
      %v3071 = vld [vmem:[%s1 + $0x4] sm:$0xf]
      %v3072 = vld [vmem:[%s1 + $0x8] sm:$0xf]
      %v3073 = vld [vmem:[%s1 + $0xc] sm:$0xf]
      %v3074 = vld [vmem:[%s1 + $0x10] sm:$0xf]
      %v3075 = vld [vmem:[%s1 + $0x14] sm:$0xf]
      %v3076 = vld [vmem:[%s1 + $0x18] sm:$0xf]
      %v3077 = vld [vmem:[%s1 + $0x1c] sm:$0xf]
      %v3078 = vld [vmem:[%s1 + $0x20] sm:$0xf]
      %v3079 = vld [vmem:[%s1 + $0x24] sm:$0xf]
      %v3080 = vld [vmem:[%s1 + $0x28] sm:$0xf]
      %v3081 = vld [vmem:[%s1 + $0x2c] sm:$0xf]
      %v3082 = vld [vmem:[%s1 + $0x30] sm:$0xf]
      %v3083 = vld [vmem:[%s1 + $0x34] sm:$0xf]
      %v3084 = vld [vmem:[%s1 + $0x38] sm:$0xf]
      %v3085 = vld [vmem:[%s1 + $0x3c] sm:$0xf]
      %v3086 = vld [vmem:[%s1 + $0x40] sm:$0xf]
      %v3087 = vld [vmem:[%s1 + $0x44] sm:$0xf]
      %v3088 = vld [vmem:[%s1 + $0x48] sm:$0xf]
      %v3089 = vld [vmem:[%s1 + $0x4c] sm:$0xf]
      %v3090 = vld [vmem:[%s1 + $0x50] sm:$0xf]
      %v3091 = vld [vmem:[%s1 + $0x54] sm:$0xf]
      %v3092 = vld [vmem:[%s1 + $0x58] sm:$0xf]
      %v3093 = vld [vmem:[%s1 + $0x5c] sm:$0xf]
      %v3094 = vld [vmem:[%s1 + $0x60] sm:$0xf]
      %v3095 = vld [vmem:[%s1 + $0x64] sm:$0xf]
      %v3096 = vld [vmem:[%s1 + $0x68] sm:$0xf]
      %v3097 = vld [vmem:[%s1 + $0x6c] sm:$0xf]
      %v3098 = vld [vmem:[%s1 + $0x70] sm:$0xf]
      %v3099 = vld [vmem:[%s1 + $0x74] sm:$0xf]
      %v3100 = vld [vmem:[%s1 + $0x78] sm:$0xf]
      %v3101 = vld [vmem:[%s1 + $0x7c] sm:$0xf]
      %v3102 = vld [vmem:[%s1 + $0x80] sm:$0xf]
      %v3103 = vld [vmem:[%s1 + $0x84] sm:$0xf]
      %v3104 = vld [vmem:[%s1 + $0x88] sm:$0xf]
      %v3105 = vld [vmem:[%s1 + $0x8c] sm:$0xf]
      %v3106 = vld [vmem:[%s1 + $0x90] sm:$0xf]
      %v3107 = vld [vmem:[%s1 + $0x94] sm:$0xf]
      %v3108 = vld [vmem:[%s1 + $0x98] sm:$0xf]
      %v3109 = vld [vmem:[%s1 + $0x9c] sm:$0xf]
      %v3110 = vld [vmem:[%s1 + $0xa0] sm:$0xf]
      %v3111 = vld [vmem:[%s1 + $0xa4] sm:$0xf]
      %v3112 = vld [vmem:[%s1 + $0xa8] sm:$0xf]
      %v3113 = vld [vmem:[%s1 + $0xac] sm:$0xf]
      %v3114 = vld [vmem:[%s1 + $0xb0] sm:$0xf]
      %v3115 = vld [vmem:[%s1 + $0xb4] sm:$0xf]
      %v3116 = vld [vmem:[%s1 + $0xb8] sm:$0xf]
      %v3117 = vld [vmem:[%s1 + $0xbc] sm:$0xf]
      %v3118 = vld [vmem:[%s1 + $0xc0] sm:$0xf]
      %v3119 = vld [vmem:[%s1 + $0xc4] sm:$0xf]
      %v3120 = vld [vmem:[%s1 + $0xc8] sm:$0xf]
      %v3121 = vld [vmem:[%s1 + $0xcc] sm:$0xf]
      %v3122 = vld [vmem:[%s1 + $0xd0] sm:$0xf]
      %v3123 = vld [vmem:[%s1 + $0xd4] sm:$0xf]
      %v3124 = vld [vmem:[%s1 + $0xd8] sm:$0xf]
      %v3125 = vld [vmem:[%s1 + $0xdc] sm:$0xf]
      %v3126 = vld [vmem:[%s1 + $0xe0] sm:$0xf]
      %v3127 = vld [vmem:[%s1 + $0xe4] sm:$0xf]
      %v3128 = vld [vmem:[%s1 + $0xe8] sm:$0xf]
      %v3129 = vld [vmem:[%s1 + $0xec] sm:$0xf]
      %v3130 = vld [vmem:[%s1 + $0xf0] sm:$0xf]
      %v3131 = vld [vmem:[%s1 + $0xf4] sm:$0xf]
      %v3132 = vld [vmem:[%s1 + $0xf8] sm:$0xf]
      %v3133 = vld [vmem:[%s1 + $0xfc] sm:$0xf]
      %v3134 = vld [vmem:[%s1 + $0x100] sm:$0xf]
      %v3135 = vld [vmem:[%s1 + $0x104] sm:$0xf]
      %v3136 = vld [vmem:[%s1 + $0x108] sm:$0xf]
      %v3137 = vld [vmem:[%s1 + $0x10c] sm:$0xf]
      %v3138 = vld [vmem:[%s1 + $0x110] sm:$0xf]
      %v3139 = vld [vmem:[%s1 + $0x114] sm:$0xf]
      %v3140 = vld [vmem:[%s1 + $0x118] sm:$0xf]
      %v3141 = vld [vmem:[%s1 + $0x11c] sm:$0xf]
      %v3142 = vld [vmem:[%s1 + $0x120] sm:$0xf]
      %v3143 = vld [vmem:[%s1 + $0x124] sm:$0xf]
      %v3144 = vld [vmem:[%s1 + $0x128] sm:$0xf]
      %v3145 = vld [vmem:[%s1 + $0x12c] sm:$0xf]
      %v3146 = vld [vmem:[%s1 + $0x130] sm:$0xf]
      %v3147 = vld [vmem:[%s1 + $0x134] sm:$0xf]
      %v3148 = vld [vmem:[%s1 + $0x138] sm:$0xf]
      %v3149 = vld [vmem:[%s1 + $0x13c] sm:$0xf]
      %v3150 = vld [vmem:[%s1 + $0x140] sm:$0xf]
      %v3151 = vld [vmem:[%s1 + $0x144] sm:$0xf]
      %v3152 = vld [vmem:[%s1 + $0x148] sm:$0xf]
      %v3153 = vld [vmem:[%s1 + $0x14c] sm:$0xf]
      %v3154 = vld [vmem:[%s1 + $0x150] sm:$0xf]
      %v3155 = vld [vmem:[%s1 + $0x154] sm:$0xf]
      %v3156 = vld [vmem:[%s1 + $0x158] sm:$0xf]
      %v3157 = vld [vmem:[%s1 + $0x15c] sm:$0xf]
      %v3158 = vld [vmem:[%s1 + $0x160] sm:$0xf]
      %v3159 = vld [vmem:[%s1 + $0x164] sm:$0xf]
      %v3160 = vld [vmem:[%s1 + $0x168] sm:$0xf]
      %v3161 = vld [vmem:[%s1 + $0x16c] sm:$0xf]
      %v3162 = vld [vmem:[%s1 + $0x170] sm:$0xf]
      %v3163 = vld [vmem:[%s1 + $0x174] sm:$0xf]
      %v3164 = vld [vmem:[%s1 + $0x178] sm:$0xf]
      %v3165 = vld [vmem:[%s1 + $0x17c] sm:$0xf]
      %v3166 = vld [vmem:[%s1 + $0x180] sm:$0xf]
      %v3167 = vld [vmem:[%s1 + $0x184] sm:$0xf]
      %v3168 = vld [vmem:[%s1 + $0x188] sm:$0xf]
      %v3169 = vld [vmem:[%s1 + $0x18c] sm:$0xf]
      %v3170 = vld [vmem:[%s1 + $0x190] sm:$0xf]
      %v3171 = vld [vmem:[%s1 + $0x194] sm:$0xf]
      %v3172 = vld [vmem:[%s1 + $0x198] sm:$0xf]
      %v3173 = vld [vmem:[%s1 + $0x19c] sm:$0xf]
      %v3174 = vld [vmem:[%s1 + $0x1a0] sm:$0xf]
      %v3175 = vld [vmem:[%s1 + $0x1a4] sm:$0xf]
      %v3176 = vld [vmem:[%s1 + $0x1a8] sm:$0xf]
      %v3177 = vld [vmem:[%s1 + $0x1ac] sm:$0xf]
      %v3178 = vld [vmem:[%s1 + $0x1b0] sm:$0xf]
      %v3179 = vld [vmem:[%s1 + $0x1b4] sm:$0xf]
      %v3180 = vld [vmem:[%s1 + $0x1b8] sm:$0xf]
      %v3181 = vld [vmem:[%s1 + $0x1bc] sm:$0xf]
      %v3182 = vld [vmem:[%s1 + $0x1c0] sm:$0xf]
      %v3183 = vld [vmem:[%s1 + $0x1c4] sm:$0xf]
      %v3184 = vld [vmem:[%s1 + $0x1c8] sm:$0xf]
      %v3185 = vld [vmem:[%s1 + $0x1cc] sm:$0xf]
      %v3186 = vld [vmem:[%s1 + $0x1d0] sm:$0xf]
      %v3187 = vld [vmem:[%s1 + $0x1d4] sm:$0xf]
      %v3188 = vld [vmem:[%s1 + $0x1d8] sm:$0xf]
      %v3189 = vld [vmem:[%s1 + $0x1dc] sm:$0xf]
      %v3190 = vld [vmem:[%s1 + $0x1e0] sm:$0xf]
      %v3191 = vld [vmem:[%s1 + $0x1e4] sm:$0xf]
      %v3192 = vld [vmem:[%s1 + $0x1e8] sm:$0xf]
      %v3193 = vld [vmem:[%s1 + $0x1ec] sm:$0xf]
      %v3194 = vld [vmem:[%s1 + $0x1f0] sm:$0xf]
      %v3195 = vld [vmem:[%s1 + $0x1f4] sm:$0xf]
      %v3196 = vld [vmem:[%s1 + $0x1f8] sm:$0xf]
      %v3197 = vld [vmem:[%s1 + $0x1fc] sm:$0xf]
      %v3198 = vld [vmem:[%s1 + $0x200] sm:$0xf]
      %v3199 = vld [vmem:[%s1 + $0x204] sm:$0xf]
      %v3200 = vld [vmem:[%s1 + $0x208] sm:$0xf]
      %v3201 = vld [vmem:[%s1 + $0x20c] sm:$0xf]
      %v3202 = vld [vmem:[%s1 + $0x210] sm:$0xf]
      %v3203 = vld [vmem:[%s1 + $0x214] sm:$0xf]
      %v3204 = vld [vmem:[%s1 + $0x218] sm:$0xf]
      %v3205 = vld [vmem:[%s1 + $0x21c] sm:$0xf]
      %v3206 = vld [vmem:[%s1 + $0x220] sm:$0xf]
      %v3207 = vld [vmem:[%s1 + $0x224] sm:$0xf]
      %v3208 = vld [vmem:[%s1 + $0x228] sm:$0xf]
      %v3209 = vld [vmem:[%s1 + $0x22c] sm:$0xf]
      %v3210 = vld [vmem:[%s1 + $0x230] sm:$0xf]
      %v3211 = vld [vmem:[%s1 + $0x234] sm:$0xf]
      %v3212 = vld [vmem:[%s1 + $0x238] sm:$0xf]
      %v3213 = vld [vmem:[%s1 + $0x23c] sm:$0xf]
      %v3358 = vunpack.c.l.b16 %v3070
      %v3359 = vunpack.c.l.b16 %v3071
      %v3360 = vunpack.c.l.b16 %v3072
      %v3361 = vunpack.c.l.b16 %v3073
      %v3362 = vunpack.c.l.b16 %v3074
      %v3363 = vunpack.c.l.b16 %v3075
      %v3364 = vunpack.c.l.b16 %v3076
      %v3365 = vunpack.c.l.b16 %v3077
      %v3366 = vunpack.c.l.b16 %v3078
      %v3367 = vunpack.c.l.b16 %v3079
      %v3368 = vunpack.c.l.b16 %v3080
      %v3369 = vunpack.c.l.b16 %v3081
      %v3370 = vunpack.c.l.b16 %v3082
      %v3371 = vunpack.c.l.b16 %v3083
      %v3372 = vunpack.c.l.b16 %v3084
      %v3373 = vunpack.c.l.b16 %v3085
      %v3374 = vunpack.c.l.b16 %v3086
      %v3375 = vunpack.c.l.b16 %v3087
      %v3376 = vunpack.c.l.b16 %v3088
      %v3377 = vunpack.c.l.b16 %v3089
      %v3378 = vunpack.c.l.b16 %v3090
      %v3379 = vunpack.c.l.b16 %v3091
      %v3380 = vunpack.c.l.b16 %v3092
      %v3381 = vunpack.c.l.b16 %v3093
      %v3382 = vunpack.c.l.b16 %v3094
      %v3383 = vunpack.c.l.b16 %v3095
      %v3384 = vunpack.c.l.b16 %v3096
      %v3385 = vunpack.c.l.b16 %v3097
      %v3386 = vunpack.c.l.b16 %v3098
      %v3387 = vunpack.c.l.b16 %v3099
      %v3388 = vunpack.c.l.b16 %v3100
      %v3389 = vunpack.c.l.b16 %v3101
      %v3390 = vunpack.c.l.b16 %v3102
      %v3391 = vunpack.c.l.b16 %v3103
      %v3392 = vunpack.c.l.b16 %v3104
      %v3393 = vunpack.c.l.b16 %v3105
      %v3394 = vunpack.c.l.b16 %v3106
      %v3395 = vunpack.c.l.b16 %v3107
      %v3396 = vunpack.c.l.b16 %v3108
      %v3397 = vunpack.c.l.b16 %v3109
      %v3398 = vunpack.c.l.b16 %v3110
      %v3399 = vunpack.c.l.b16 %v3111
      %v3400 = vunpack.c.l.b16 %v3112
      %v3401 = vunpack.c.l.b16 %v3113
      %v3402 = vunpack.c.l.b16 %v3114
      %v3403 = vunpack.c.l.b16 %v3115
      %v3404 = vunpack.c.l.b16 %v3116
      %v3405 = vunpack.c.l.b16 %v3117
      %v3406 = vunpack.c.l.b16 %v3118
      %v3407 = vunpack.c.l.b16 %v3119
      %v3408 = vunpack.c.l.b16 %v3120
      %v3409 = vunpack.c.l.b16 %v3121
      %v3410 = vunpack.c.l.b16 %v3122
      %v3411 = vunpack.c.l.b16 %v3123
      %v3412 = vunpack.c.l.b16 %v3124
      %v3413 = vunpack.c.l.b16 %v3125
      %v3414 = vunpack.c.l.b16 %v3126
      %v3415 = vunpack.c.l.b16 %v3127
      %v3416 = vunpack.c.l.b16 %v3128
      %v3417 = vunpack.c.l.b16 %v3129
      %v3418 = vunpack.c.l.b16 %v3130
      %v3419 = vunpack.c.l.b16 %v3131
      %v3420 = vunpack.c.l.b16 %v3132
      %v3421 = vunpack.c.l.b16 %v3133
      %v3422 = vunpack.c.l.b16 %v3134
      %v3423 = vunpack.c.l.b16 %v3135
      %v3424 = vunpack.c.l.b16 %v3136
      %v3425 = vunpack.c.l.b16 %v3137
      %v3426 = vunpack.c.l.b16 %v3138
      %v3427 = vunpack.c.l.b16 %v3139
      %v3428 = vunpack.c.l.b16 %v3140
      %v3429 = vunpack.c.l.b16 %v3141
      %v3430 = vunpack.c.l.b16 %v3142
      %v3431 = vunpack.c.l.b16 %v3143
      %v3432 = vunpack.c.l.b16 %v3144
      %v3433 = vunpack.c.l.b16 %v3145
      %v3434 = vunpack.c.l.b16 %v3146
      %v3435 = vunpack.c.l.b16 %v3147
      %v3436 = vunpack.c.l.b16 %v3148
      %v3437 = vunpack.c.l.b16 %v3149
      %v3438 = vunpack.c.l.b16 %v3150
      %v3439 = vunpack.c.l.b16 %v3151
      %v3440 = vunpack.c.l.b16 %v3152
      %v3441 = vunpack.c.l.b16 %v3153
      %v3442 = vunpack.c.l.b16 %v3154
      %v3443 = vunpack.c.l.b16 %v3155
      %v3444 = vunpack.c.l.b16 %v3156
      %v3445 = vunpack.c.l.b16 %v3157
      %v3446 = vunpack.c.l.b16 %v3158
      %v3447 = vunpack.c.l.b16 %v3159
      %v3448 = vunpack.c.l.b16 %v3160
      %v3449 = vunpack.c.l.b16 %v3161
      %v3450 = vunpack.c.l.b16 %v3162
      %v3451 = vunpack.c.l.b16 %v3163
      %v3452 = vunpack.c.l.b16 %v3164
      %v3453 = vunpack.c.l.b16 %v3165
      %v3454 = vunpack.c.l.b16 %v3166
      %v3455 = vunpack.c.l.b16 %v3167
      %v3456 = vunpack.c.l.b16 %v3168
      %v3457 = vunpack.c.l.b16 %v3169
      %v3458 = vunpack.c.l.b16 %v3170
      %v3459 = vunpack.c.l.b16 %v3171
      %v3460 = vunpack.c.l.b16 %v3172
      %v3461 = vunpack.c.l.b16 %v3173
      %v3462 = vunpack.c.l.b16 %v3174
      %v3463 = vunpack.c.l.b16 %v3175
      %v3464 = vunpack.c.l.b16 %v3176
      %v3465 = vunpack.c.l.b16 %v3177
      %v3466 = vunpack.c.l.b16 %v3178
      %v3467 = vunpack.c.l.b16 %v3179
      %v3468 = vunpack.c.l.b16 %v3180
      %v3469 = vunpack.c.l.b16 %v3181
      %v3470 = vunpack.c.l.b16 %v3182
      %v3471 = vunpack.c.l.b16 %v3183
      %v3472 = vunpack.c.l.b16 %v3184
      %v3473 = vunpack.c.l.b16 %v3185
      %v3474 = vunpack.c.l.b16 %v3186
      %v3475 = vunpack.c.l.b16 %v3187
      %v3476 = vunpack.c.l.b16 %v3188
      %v3477 = vunpack.c.l.b16 %v3189
      %v3478 = vunpack.c.l.b16 %v3190
      %v3479 = vunpack.c.l.b16 %v3191
      %v3480 = vunpack.c.l.b16 %v3192
      %v3481 = vunpack.c.l.b16 %v3193
      %v3482 = vunpack.c.l.b16 %v3194
      %v3483 = vunpack.c.l.b16 %v3195
      %v3484 = vunpack.c.l.b16 %v3196
      %v3485 = vunpack.c.l.b16 %v3197
      %v3486 = vunpack.c.l.b16 %v3198
      %v3487 = vunpack.c.l.b16 %v3199
      %v3488 = vunpack.c.l.b16 %v3200
      %v3489 = vunpack.c.l.b16 %v3201
      %v3490 = vunpack.c.l.b16 %v3202
      %v3491 = vunpack.c.l.b16 %v3203
      %v3492 = vunpack.c.l.b16 %v3204
      %v3493 = vunpack.c.l.b16 %v3205
      %v3494 = vunpack.c.l.b16 %v3206
      %v3495 = vunpack.c.l.b16 %v3207
      %v3496 = vunpack.c.l.b16 %v3208
      %v3497 = vunpack.c.l.b16 %v3209
      %v3498 = vunpack.c.l.b16 %v3210
      %v3499 = vunpack.c.l.b16 %v3211
      %v3500 = vunpack.c.l.b16 %v3212
      %v3501 = vunpack.c.l.b16 %v3213
      %v3502 = vpack.c.b16 %v3359, %v3358
      %v3503 = vpack.c.b16 %v3361, %v3360
      %v3504 = vpack.c.b16 %v3363, %v3362
      %v3505 = vpack.c.b16 %v3365, %v3364
      %v3506 = vpack.c.b16 %v3367, %v3366
      %v3507 = vpack.c.b16 %v3369, %v3368
      %v3508 = vpack.c.b16 %v3371, %v3370
      %v3509 = vpack.c.b16 %v3373, %v3372
      %v3510 = vpack.c.b16 %v3375, %v3374
      %v3511 = vpack.c.b16 %v3377, %v3376
      %v3512 = vpack.c.b16 %v3379, %v3378
      %v3513 = vpack.c.b16 %v3381, %v3380
      %v3514 = vpack.c.b16 %v3383, %v3382
      %v3515 = vpack.c.b16 %v3385, %v3384
      %v3516 = vpack.c.b16 %v3387, %v3386
      %v3517 = vpack.c.b16 %v3389, %v3388
      %v3518 = vpack.c.b16 %v3391, %v3390
      %v3519 = vpack.c.b16 %v3393, %v3392
      %v3520 = vpack.c.b16 %v3395, %v3394
      %v3521 = vpack.c.b16 %v3397, %v3396
      %v3522 = vpack.c.b16 %v3399, %v3398
      %v3523 = vpack.c.b16 %v3401, %v3400
      %v3524 = vpack.c.b16 %v3403, %v3402
      %v3525 = vpack.c.b16 %v3405, %v3404
      %v3526 = vpack.c.b16 %v3407, %v3406
      %v3527 = vpack.c.b16 %v3409, %v3408
      %v3528 = vpack.c.b16 %v3411, %v3410
      %v3529 = vpack.c.b16 %v3413, %v3412
      %v3530 = vpack.c.b16 %v3415, %v3414
      %v3531 = vpack.c.b16 %v3417, %v3416
      %v3532 = vpack.c.b16 %v3419, %v3418
      %v3533 = vpack.c.b16 %v3421, %v3420
      %v3534 = vpack.c.b16 %v3423, %v3422
      %v3535 = vpack.c.b16 %v3425, %v3424
      %v3536 = vpack.c.b16 %v3427, %v3426
      %v3537 = vpack.c.b16 %v3429, %v3428
      %v3538 = vpack.c.b16 %v3431, %v3430
      %v3539 = vpack.c.b16 %v3433, %v3432
      %v3540 = vpack.c.b16 %v3435, %v3434
      %v3541 = vpack.c.b16 %v3437, %v3436
      %v3542 = vpack.c.b16 %v3439, %v3438
      %v3543 = vpack.c.b16 %v3441, %v3440
      %v3544 = vpack.c.b16 %v3443, %v3442
      %v3545 = vpack.c.b16 %v3445, %v3444
      %v3546 = vpack.c.b16 %v3447, %v3446
      %v3547 = vpack.c.b16 %v3449, %v3448
      %v3548 = vpack.c.b16 %v3451, %v3450
      %v3549 = vpack.c.b16 %v3453, %v3452
      %v3550 = vpack.c.b16 %v3455, %v3454
      %v3551 = vpack.c.b16 %v3457, %v3456
      %v3552 = vpack.c.b16 %v3459, %v3458
      %v3553 = vpack.c.b16 %v3461, %v3460
      %v3554 = vpack.c.b16 %v3463, %v3462
      %v3555 = vpack.c.b16 %v3465, %v3464
      %v3556 = vpack.c.b16 %v3467, %v3466
      %v3557 = vpack.c.b16 %v3469, %v3468
      %v3558 = vpack.c.b16 %v3471, %v3470
      %v3559 = vpack.c.b16 %v3473, %v3472
      %v3560 = vpack.c.b16 %v3475, %v3474
      %v3561 = vpack.c.b16 %v3477, %v3476
      %v3562 = vpack.c.b16 %v3479, %v3478
      %v3563 = vpack.c.b16 %v3481, %v3480
      %v3564 = vpack.c.b16 %v3483, %v3482
      %v3565 = vpack.c.b16 %v3485, %v3484
      %v3566 = vpack.c.b16 %v3487, %v3486
      %v3567 = vpack.c.b16 %v3489, %v3488
      %v3568 = vpack.c.b16 %v3491, %v3490
      %v3569 = vpack.c.b16 %v3493, %v3492
      %v3570 = vpack.c.b16 %v3495, %v3494
      %v3571 = vpack.c.b16 %v3497, %v3496
      %v3572 = vpack.c.b16 %v3499, %v3498
      %v3573 = vpack.c.b16 %v3501, %v3500
      %3646 = vmatprep.subr.bf16.mxu0 0
      %3647 = vmatpush1.bf16.msra.mxu0 %v3502
      %3648 = vmatprep.subr.bf16.mxu0 0
      %3649 = vmatpush1.bf16.msra.mxu0 %v3503
      %3650 = vmatprep.subr.bf16.mxu0 0
      %3651 = vmatpush1.bf16.msra.mxu0 %v3504
      %3652 = vmatprep.subr.bf16.mxu0 0
      %3653 = vmatpush1.bf16.msra.mxu0 %v3505
      %3654 = vmatprep.subr.bf16.mxu0 0
      %3655 = vmatpush1.bf16.msra.mxu0 %v3506
      %3656 = vmatprep.subr.bf16.mxu0 0
      %3657 = vmatpush1.bf16.msra.mxu0 %v3507
      %3658 = vmatprep.subr.bf16.mxu0 0
      %3659 = vmatpush1.bf16.msra.mxu0 %v3508
      %3660 = vmatprep.subr.bf16.mxu0 0
      %3661 = vmatpush1.bf16.msra.mxu0 %v3509
      %3662 = vmatprep.subr.bf16.mxu0 0
      %3663 = vmatpush1.bf16.msra.mxu0 %v3510
      %3664 = vmatprep.subr.bf16.mxu0 0
      %3665 = vmatpush1.bf16.msra.mxu0 %v3511
      %3666 = vmatprep.subr.bf16.mxu0 0
      %3667 = vmatpush1.bf16.msra.mxu0 %v3512
      %3668 = vmatprep.subr.bf16.mxu0 0
      %3669 = vmatpush1.bf16.msra.mxu0 %v3513
      %3670 = vmatprep.subr.bf16.mxu0 0
      %3671 = vmatpush1.bf16.msra.mxu0 %v3514
      %3672 = vmatprep.subr.bf16.mxu0 0
      %3673 = vmatpush1.bf16.msra.mxu0 %v3515
      %3674 = vmatprep.subr.bf16.mxu0 0
      %3675 = vmatpush1.bf16.msra.mxu0 %v3516
      %3676 = vmatprep.subr.bf16.mxu0 0
      %3677 = vmatpush1.bf16.msra.mxu0 %v3517
      %3678 = vmatprep.mubr.bf16.mxu0 %v2927
      %3679 = vmatmul.mubr.bf16.gmra.mrb[0].mxu0 %v2926
      %v3680 = vpop.f32.mrb[0].mxu0
      %v3681 = vadd.f32 0.0, %v3680
      %v3682 = vpop.f32.mrb[0].mxu0
      %v3683 = vpop.f32.mrb[0].mxu0
      %v3684 = vadd.f32 0.0, %v3683
      %v3685 = vpop.f32.mrb[0].mxu0
      %3686 = vmatprep.mubr.bf16.mxu0 %v2936
      %3687 = vmatmul.mubr.bf16.gmra.mrb[0].mxu0 %v2935
      %v3688 = vpop.f32.mrb[0].mxu0
      %v3689 = vadd.f32 0.0, %v3688
      %v3690 = vpop.f32.mrb[0].mxu0
      %v3691 = vpop.f32.mrb[0].mxu0
      %v3692 = vadd.f32 0.0, %v3691
      %v3693 = vpop.f32.mrb[0].mxu0
      %3694 = vmatprep.mubr.bf16.mxu0 %v2945
      %3695 = vmatmul.mubr.bf16.gmra.mrb[0].mxu0 %v2944
      %v3696 = vpop.f32.mrb[0].mxu0
      %v3697 = vadd.f32 0.0, %v3696
      %v3698 = vpop.f32.mrb[0].mxu0
      %v3699 = vpop.f32.mrb[0].mxu0
      %v3700 = vadd.f32 0.0, %v3699
      %v3701 = vpop.f32.mrb[0].mxu0
      %3702 = vmatprep.mubr.bf16.mxu0 %v2954
      %3703 = vmatmul.mubr.bf16.gmra.mrb[0].mxu0 %v2953
      %v3704 = vpop.f32.mrb[0].mxu0
      %v3705 = vadd.f32 0.0, %v3704
      %v3706 = vpop.f32.mrb[0].mxu0
      %v3707 = vpop.f32.mrb[0].mxu0
      %v3708 = vadd.f32 0.0, %v3707
      %v3709 = vpop.f32.mrb[0].mxu0
      %3710 = vmatprep.mubr.bf16.mxu0 %v2963
      %3711 = vmatmul.mubr.bf16.gmra.mrb[0].mxu0 %v2962
      %v3712 = vpop.f32.mrb[0].mxu0
      %v3713 = vadd.f32 0.0, %v3712
      %v3714 = vpop.f32.mrb[0].mxu0
      %v3715 = vpop.f32.mrb[0].mxu0
      %v3716 = vadd.f32 0.0, %v3715
      %v3717 = vpop.f32.mrb[0].mxu0
      %3718 = vmatprep.mubr.bf16.mxu0 %v2972
      %3719 = vmatmul.mubr.bf16.gmra.mrb[0].mxu0 %v2971
      %v3720 = vpop.f32.mrb[0].mxu0
      %v3721 = vadd.f32 0.0, %v3720
      %v3722 = vpop.f32.mrb[0].mxu0
      %v3723 = vpop.f32.mrb[0].mxu0
      %v3724 = vadd.f32 0.0, %v3723
      %v3725 = vpop.f32.mrb[0].mxu0
      %3726 = vmatprep.mubr.bf16.mxu0 %v2981
      %3727 = vmatmul.mubr.bf16.gmra.mrb[0].mxu0 %v2980
      %v3728 = vpop.f32.mrb[0].mxu0
      %v3729 = vadd.f32 0.0, %v3728
      %v3730 = vpop.f32.mrb[0].mxu0
      %v3731 = vpop.f32.mrb[0].mxu0
      %v3732 = vadd.f32 0.0, %v3731
      %v3733 = vpop.f32.mrb[0].mxu0
      %3734 = vmatprep.mubr.bf16.mxu0 %v2990
      %3735 = vmatmul.mubr.bf16.gmra.mrb[0].mxu0 %v2989
      %v3736 = vpop.f32.mrb[0].mxu0
      %v3737 = vadd.f32 0.0, %v3736
      %v3738 = vpop.f32.mrb[0].mxu0
      %v3739 = vpop.f32.mrb[0].mxu0
      %v3740 = vadd.f32 0.0, %v3739
      %v3741 = vpop.f32.mrb[0].mxu0
      %3742 = vmatprep.mubr.bf16.mxu0 %v2999
      %3743 = vmatmul.mubr.bf16.gmra.mrb[0].mxu0 %v2998
      %v3744 = vpop.f32.mrb[0].mxu0
      %v3745 = vadd.f32 0.0, %v3744
      %v3746 = vpop.f32.mrb[0].mxu0
      %v3747 = vpop.f32.mrb[0].mxu0
      %v3748 = vadd.f32 0.0, %v3747
      %v3749 = vpop.f32.mrb[0].mxu0
      %3750 = vmatprep.mubr.bf16.mxu0 %v3008
      %3751 = vmatmul.mubr.bf16.gmra.mrb[0].mxu0 %v3007
      %v3752 = vpop.f32.mrb[0].mxu0
      %v3753 = vadd.f32 0.0, %v3752
      %v3754 = vpop.f32.mrb[0].mxu0
      %v3755 = vpop.f32.mrb[0].mxu0
      %v3756 = vadd.f32 0.0, %v3755
      %v3757 = vpop.f32.mrb[0].mxu0
      %3758 = vmatprep.mubr.bf16.mxu0 %v3017
      %3759 = vmatmul.mubr.bf16.gmra.mrb[0].mxu0 %v3016
      %v3760 = vpop.f32.mrb[0].mxu0
      %v3761 = vadd.f32 0.0, %v3760
      %v3762 = vpop.f32.mrb[0].mxu0
      %v3763 = vpop.f32.mrb[0].mxu0
      %v3764 = vadd.f32 0.0, %v3763
      %v3765 = vpop.f32.mrb[0].mxu0
      %3766 = vmatprep.mubr.bf16.mxu0 %v3026
      %3767 = vmatmul.mubr.bf16.gmra.mrb[0].mxu0 %v3025
      %v3768 = vpop.f32.mrb[0].mxu0
      %v3769 = vadd.f32 0.0, %v3768
      %v3770 = vpop.f32.mrb[0].mxu0
      %v3771 = vpop.f32.mrb[0].mxu0
      %v3772 = vadd.f32 0.0, %v3771
      %v3773 = vpop.f32.mrb[0].mxu0
      %3774 = vmatprep.mubr.bf16.mxu0 %v3035
      %3775 = vmatmul.mubr.bf16.gmra.mrb[0].mxu0 %v3034
      %v3776 = vpop.f32.mrb[0].mxu0
      %v3777 = vadd.f32 0.0, %v3776
      %v3778 = vpop.f32.mrb[0].mxu0
      %v3779 = vpop.f32.mrb[0].mxu0
      %v3780 = vadd.f32 0.0, %v3779
      %v3781 = vpop.f32.mrb[0].mxu0
      %3782 = vmatprep.mubr.bf16.mxu0 %v3044
      %3783 = vmatmul.mubr.bf16.gmra.mrb[0].mxu0 %v3043
      %v3784 = vpop.f32.mrb[0].mxu0
      %v3785 = vadd.f32 0.0, %v3784
      %v3786 = vpop.f32.mrb[0].mxu0
      %v3787 = vpop.f32.mrb[0].mxu0
      %v3788 = vadd.f32 0.0, %v3787
      %v3789 = vpop.f32.mrb[0].mxu0
      %3790 = vmatprep.mubr.bf16.mxu0 %v3053
      %3791 = vmatmul.mubr.bf16.gmra.mrb[0].mxu0 %v3052
      %v3792 = vpop.f32.mrb[0].mxu0
      %v3793 = vadd.f32 0.0, %v3792
      %v3794 = vpop.f32.mrb[0].mxu0
      %v3795 = vpop.f32.mrb[0].mxu0
      %v3796 = vadd.f32 0.0, %v3795
      %v3797 = vpop.f32.mrb[0].mxu0
      %3798 = vmatprep.mubr.bf16.mxu0 %v3062
      %3799 = vmatmul.mubr.bf16.gmra.mrb[0].mxu0 %v3061
      %v3800 = vpop.f32.mrb[0].mxu0
      %v3801 = vadd.f32 0.0, %v3800
      %v3802 = vpop.f32.mrb[0].mxu0
      %v3803 = vpop.f32.mrb[0].mxu0
      %v3804 = vadd.f32 0.0, %v3803
      %v3805 = vpop.f32.mrb[0].mxu0
      %3806 = vdwg.mxu0
      %3807 = vmatprep.subr.bf16.mxu0 0
      %3808 = vmatpush1.bf16.msra.mxu0 %v3518
      %3809 = vmatprep.subr.bf16.mxu0 0
      %3810 = vmatpush1.bf16.msra.mxu0 %v3519
      %3811 = vmatprep.subr.bf16.mxu0 0
      %3812 = vmatpush1.bf16.msra.mxu0 %v3520
      %3813 = vmatprep.subr.bf16.mxu0 0
      %3814 = vmatpush1.bf16.msra.mxu0 %v3521
      %3815 = vmatprep.subr.bf16.mxu0 0
      %3816 = vmatpush1.bf16.msra.mxu0 %v3522
      %3817 = vmatprep.subr.bf16.mxu0 0
      %3818 = vmatpush1.bf16.msra.mxu0 %v3523
      %3819 = vmatprep.subr.bf16.mxu0 0
      %3820 = vmatpush1.bf16.msra.mxu0 %v3524
      %3821 = vmatprep.subr.bf16.mxu0 0
      %3822 = vmatpush1.bf16.msra.mxu0 %v3525
      %3823 = vmatprep.subr.bf16.mxu0 0
      %3824 = vmatpush1.bf16.msra.mxu0 %v3526
      %3825 = vmatprep.subr.bf16.mxu0 0
      %3826 = vmatpush1.bf16.msra.mxu0 %v3527
      %3827 = vmatprep.subr.bf16.mxu0 0
      %3828 = vmatpush1.bf16.msra.mxu0 %v3528
      %3829 = vmatprep.subr.bf16.mxu0 0
      %3830 = vmatpush1.bf16.msra.mxu0 %v3529
      %3831 = vmatprep.subr.bf16.mxu0 0
      %3832 = vmatpush1.bf16.msra.mxu0 %v3530
      %3833 = vmatprep.subr.bf16.mxu0 0
      %3834 = vmatpush1.bf16.msra.mxu0 %v3531
      %3835 = vmatprep.subr.bf16.mxu0 0
      %3836 = vmatpush1.bf16.msra.mxu0 %v3532
      %3837 = vmatprep.subr.bf16.mxu0 0
      %3838 = vmatpush1.bf16.msra.mxu0 %v3533
      %3839 = vmatprep.mubr.bf16.mxu0 %v2929
      %3840 = vmatmul.mubr.bf16.gmra.mrb[0].mxu0 %v2928
      %v3841 = vpop.f32.mrb[0].mxu0
      %v3842 = vadd.f32 %v3681, %v3841
      %v3843 = vpop.f32.mrb[0].mxu0
      %v3844 = vpop.f32.mrb[0].mxu0
      %v3845 = vadd.f32 %v3684, %v3844
      %v3846 = vpop.f32.mrb[0].mxu0
      %3847 = vmatprep.mubr.bf16.mxu0 %v2938
      %3848 = vmatmul.mubr.bf16.gmra.mrb[0].mxu0 %v2937
      %v3849 = vpop.f32.mrb[0].mxu0
      %v3850 = vadd.f32 %v3689, %v3849
      %v3851 = vpop.f32.mrb[0].mxu0
      %v3852 = vpop.f32.mrb[0].mxu0
      %v3853 = vadd.f32 %v3692, %v3852
      %v3854 = vpop.f32.mrb[0].mxu0
      %3855 = vmatprep.mubr.bf16.mxu0 %v2947
      %3856 = vmatmul.mubr.bf16.gmra.mrb[0].mxu0 %v2946
      %v3857 = vpop.f32.mrb[0].mxu0
      %v3858 = vadd.f32 %v3697, %v3857
      %v3859 = vpop.f32.mrb[0].mxu0
      %v3860 = vpop.f32.mrb[0].mxu0
      %v3861 = vadd.f32 %v3700, %v3860
      %v3862 = vpop.f32.mrb[0].mxu0
      %3863 = vmatprep.mubr.bf16.mxu0 %v2956
      %3864 = vmatmul.mubr.bf16.gmra.mrb[0].mxu0 %v2955
      %v3865 = vpop.f32.mrb[0].mxu0
      %v3866 = vadd.f32 %v3705, %v3865
      %v3867 = vpop.f32.mrb[0].mxu0
      %v3868 = vpop.f32.mrb[0].mxu0
      %v3869 = vadd.f32 %v3708, %v3868
      %v3870 = vpop.f32.mrb[0].mxu0
      %3871 = vmatprep.mubr.bf16.mxu0 %v2965
      %3872 = vmatmul.mubr.bf16.gmra.mrb[0].mxu0 %v2964
      %v3873 = vpop.f32.mrb[0].mxu0
      %v3874 = vadd.f32 %v3713, %v3873
      %v3875 = vpop.f32.mrb[0].mxu0
      %v3876 = vpop.f32.mrb[0].mxu0
      %v3877 = vadd.f32 %v3716, %v3876
      %v3878 = vpop.f32.mrb[0].mxu0
      %3879 = vmatprep.mubr.bf16.mxu0 %v2974
      %3880 = vmatmul.mubr.bf16.gmra.mrb[0].mxu0 %v2973
      %v3881 = vpop.f32.mrb[0].mxu0
      %v3882 = vadd.f32 %v3721, %v3881
      %v3883 = vpop.f32.mrb[0].mxu0
      %v3884 = vpop.f32.mrb[0].mxu0
      %v3885 = vadd.f32 %v3724, %v3884
      %v3886 = vpop.f32.mrb[0].mxu0
      %3887 = vmatprep.mubr.bf16.mxu0 %v2983
      %3888 = vmatmul.mubr.bf16.gmra.mrb[0].mxu0 %v2982
      %v3889 = vpop.f32.mrb[0].mxu0
      %v3890 = vadd.f32 %v3729, %v3889
      %v3891 = vpop.f32.mrb[0].mxu0
      %v3892 = vpop.f32.mrb[0].mxu0
      %v3893 = vadd.f32 %v3732, %v3892
      %v3894 = vpop.f32.mrb[0].mxu0
      %3895 = vmatprep.mubr.bf16.mxu0 %v2992
      %3896 = vmatmul.mubr.bf16.gmra.mrb[0].mxu0 %v2991
      %v3897 = vpop.f32.mrb[0].mxu0
      %v3898 = vadd.f32 %v3737, %v3897
      %v3899 = vpop.f32.mrb[0].mxu0
      %v3900 = vpop.f32.mrb[0].mxu0
      %v3901 = vadd.f32 %v3740, %v3900
      %v3902 = vpop.f32.mrb[0].mxu0
      %3903 = vmatprep.mubr.bf16.mxu0 %v3001
      %3904 = vmatmul.mubr.bf16.gmra.mrb[0].mxu0 %v3000
      %v3905 = vpop.f32.mrb[0].mxu0
      %v3906 = vadd.f32 %v3745, %v3905
      %v3907 = vpop.f32.mrb[0].mxu0
      %v3908 = vpop.f32.mrb[0].mxu0
      %v3909 = vadd.f32 %v3748, %v3908
      %v3910 = vpop.f32.mrb[0].mxu0
      %3911 = vmatprep.mubr.bf16.mxu0 %v3010
      %3912 = vmatmul.mubr.bf16.gmra.mrb[0].mxu0 %v3009
      %v3913 = vpop.f32.mrb[0].mxu0
      %v3914 = vadd.f32 %v3753, %v3913
      %v3915 = vpop.f32.mrb[0].mxu0
      %v3916 = vpop.f32.mrb[0].mxu0
      %v3917 = vadd.f32 %v3756, %v3916
      %v3918 = vpop.f32.mrb[0].mxu0
      %3919 = vmatprep.mubr.bf16.mxu0 %v3019
      %3920 = vmatmul.mubr.bf16.gmra.mrb[0].mxu0 %v3018
      %v3921 = vpop.f32.mrb[0].mxu0
      %v3922 = vadd.f32 %v3761, %v3921
      %v3923 = vpop.f32.mrb[0].mxu0
      %v3924 = vpop.f32.mrb[0].mxu0
      %v3925 = vadd.f32 %v3764, %v3924
      %v3926 = vpop.f32.mrb[0].mxu0
      %3927 = vmatprep.mubr.bf16.mxu0 %v3028
      %3928 = vmatmul.mubr.bf16.gmra.mrb[0].mxu0 %v3027
      %v3929 = vpop.f32.mrb[0].mxu0
      %v3930 = vadd.f32 %v3769, %v3929
      %v3931 = vpop.f32.mrb[0].mxu0
      %v3932 = vpop.f32.mrb[0].mxu0
      %v3933 = vadd.f32 %v3772, %v3932
      %v3934 = vpop.f32.mrb[0].mxu0
      %3935 = vmatprep.mubr.bf16.mxu0 %v3037
      %3936 = vmatmul.mubr.bf16.gmra.mrb[0].mxu0 %v3036
      %v3937 = vpop.f32.mrb[0].mxu0
      %v3938 = vadd.f32 %v3777, %v3937
      %v3939 = vpop.f32.mrb[0].mxu0
      %v3940 = vpop.f32.mrb[0].mxu0
      %v3941 = vadd.f32 %v3780, %v3940
      %v3942 = vpop.f32.mrb[0].mxu0
      %3943 = vmatprep.mubr.bf16.mxu0 %v3046
      %3944 = vmatmul.mubr.bf16.gmra.mrb[0].mxu0 %v3045
      %v3945 = vpop.f32.mrb[0].mxu0
      %v3946 = vadd.f32 %v3785, %v3945
      %v3947 = vpop.f32.mrb[0].mxu0
      %v3948 = vpop.f32.mrb[0].mxu0
      %v3949 = vadd.f32 %v3788, %v3948
      %v3950 = vpop.f32.mrb[0].mxu0
      %3951 = vmatprep.mubr.bf16.mxu0 %v3055
      %3952 = vmatmul.mubr.bf16.gmra.mrb[0].mxu0 %v3054
      %v3953 = vpop.f32.mrb[0].mxu0
      %v3954 = vadd.f32 %v3793, %v3953
      %v3955 = vpop.f32.mrb[0].mxu0
      %v3956 = vpop.f32.mrb[0].mxu0
      %v3957 = vadd.f32 %v3796, %v3956
      %v3958 = vpop.f32.mrb[0].mxu0
      %3959 = vmatprep.mubr.bf16.mxu0 %v3064
      %3960 = vmatmul.mubr.bf16.gmra.mrb[0].mxu0 %v3063
      %v3961 = vpop.f32.mrb[0].mxu0
      %v3962 = vadd.f32 %v3801, %v3961
      %v3963 = vpop.f32.mrb[0].mxu0
      %v3964 = vpop.f32.mrb[0].mxu0
      %v3965 = vadd.f32 %v3804, %v3964
      %v3966 = vpop.f32.mrb[0].mxu0
      %3967 = vdwg.mxu0
      %3968 = vmatprep.subr.bf16.mxu0 0
      %3969 = vmatpush1.bf16.msra.mxu0 %v3534
      %3970 = vmatprep.subr.bf16.mxu0 0
      %3971 = vmatpush1.bf16.msra.mxu0 %v3535
      %3972 = vmatprep.subr.bf16.mxu0 0
      %3973 = vmatpush1.bf16.msra.mxu0 %v3536
      %3974 = vmatprep.subr.bf16.mxu0 0
      %3975 = vmatpush1.bf16.msra.mxu0 %v3537
      %3976 = vmatprep.subr.bf16.mxu0 0
      %3977 = vmatpush1.bf16.msra.mxu0 %v3538
      %3978 = vmatprep.subr.bf16.mxu0 0
      %3979 = vmatpush1.bf16.msra.mxu0 %v3539
      %3980 = vmatprep.subr.bf16.mxu0 0
      %3981 = vmatpush1.bf16.msra.mxu0 %v3540
      %3982 = vmatprep.subr.bf16.mxu0 0
      %3983 = vmatpush1.bf16.msra.mxu0 %v3541
      %3984 = vmatprep.subr.bf16.mxu0 0
      %3985 = vmatpush1.bf16.msra.mxu0 %v3542
      %3986 = vmatprep.subr.bf16.mxu0 0
      %3987 = vmatpush1.bf16.msra.mxu0 %v3543
      %3988 = vmatprep.subr.bf16.mxu0 0
      %3989 = vmatpush1.bf16.msra.mxu0 %v3544
      %3990 = vmatprep.subr.bf16.mxu0 0
      %3991 = vmatpush1.bf16.msra.mxu0 %v3545
      %3992 = vmatprep.subr.bf16.mxu0 0
      %3993 = vmatpush1.bf16.msra.mxu0 %v3546
      %3994 = vmatprep.subr.bf16.mxu0 0
      %3995 = vmatpush1.bf16.msra.mxu0 %v3547
      %3996 = vmatprep.subr.bf16.mxu0 0
      %3997 = vmatpush1.bf16.msra.mxu0 %v3548
      %3998 = vmatprep.subr.bf16.mxu0 0
      %3999 = vmatpush1.bf16.msra.mxu0 %v3549
      %4000 = vmatprep.mubr.bf16.mxu0 %v2931
      %4001 = vmatmul.mubr.bf16.gmra.mrb[0].mxu0 %v2930
      %v4002 = vpop.f32.mrb[0].mxu0
      %v4003 = vadd.f32 %v3842, %v4002
      %v4004 = vpop.f32.mrb[0].mxu0
      %v4005 = vpop.f32.mrb[0].mxu0
      %v4006 = vadd.f32 %v3845, %v4005
      %v4007 = vpop.f32.mrb[0].mxu0
      %4008 = vmatprep.mubr.bf16.mxu0 %v2940
      %4009 = vmatmul.mubr.bf16.gmra.mrb[0].mxu0 %v2939
      %v4010 = vpop.f32.mrb[0].mxu0
      %v4011 = vadd.f32 %v3850, %v4010
      %v4012 = vpop.f32.mrb[0].mxu0
      %v4013 = vpop.f32.mrb[0].mxu0
      %v4014 = vadd.f32 %v3853, %v4013
      %v4015 = vpop.f32.mrb[0].mxu0
      %4016 = vmatprep.mubr.bf16.mxu0 %v2949
      %4017 = vmatmul.mubr.bf16.gmra.mrb[0].mxu0 %v2948
      %v4018 = vpop.f32.mrb[0].mxu0
      %v4019 = vadd.f32 %v3858, %v4018
      %v4020 = vpop.f32.mrb[0].mxu0
      %v4021 = vpop.f32.mrb[0].mxu0
      %v4022 = vadd.f32 %v3861, %v4021
      %v4023 = vpop.f32.mrb[0].mxu0
      %4024 = vmatprep.mubr.bf16.mxu0 %v2958
      %4025 = vmatmul.mubr.bf16.gmra.mrb[0].mxu0 %v2957
      %v4026 = vpop.f32.mrb[0].mxu0
      %v4027 = vadd.f32 %v3866, %v4026
      %v4028 = vpop.f32.mrb[0].mxu0
      %v4029 = vpop.f32.mrb[0].mxu0
      %v4030 = vadd.f32 %v3869, %v4029
      %v4031 = vpop.f32.mrb[0].mxu0
      %4032 = vmatprep.mubr.bf16.mxu0 %v2967
      %4033 = vmatmul.mubr.bf16.gmra.mrb[0].mxu0 %v2966
      %v4034 = vpop.f32.mrb[0].mxu0
      %v4035 = vadd.f32 %v3874, %v4034
      %v4036 = vpop.f32.mrb[0].mxu0
      %v4037 = vpop.f32.mrb[0].mxu0
      %v4038 = vadd.f32 %v3877, %v4037
      %v4039 = vpop.f32.mrb[0].mxu0
      %4040 = vmatprep.mubr.bf16.mxu0 %v2976
      %4041 = vmatmul.mubr.bf16.gmra.mrb[0].mxu0 %v2975
      %v4042 = vpop.f32.mrb[0].mxu0
      %v4043 = vadd.f32 %v3882, %v4042
      %v4044 = vpop.f32.mrb[0].mxu0
      %v4045 = vpop.f32.mrb[0].mxu0
      %v4046 = vadd.f32 %v3885, %v4045
      %v4047 = vpop.f32.mrb[0].mxu0
      %4048 = vmatprep.mubr.bf16.mxu0 %v2985
      %4049 = vmatmul.mubr.bf16.gmra.mrb[0].mxu0 %v2984
      %v4050 = vpop.f32.mrb[0].mxu0
      %v4051 = vadd.f32 %v3890, %v4050
      %v4052 = vpop.f32.mrb[0].mxu0
      %v4053 = vpop.f32.mrb[0].mxu0
      %v4054 = vadd.f32 %v3893, %v4053
      %v4055 = vpop.f32.mrb[0].mxu0
      %4056 = vmatprep.mubr.bf16.mxu0 %v2994
      %4057 = vmatmul.mubr.bf16.gmra.mrb[0].mxu0 %v2993
      %v4058 = vpop.f32.mrb[0].mxu0
      %v4059 = vadd.f32 %v3898, %v4058
      %v4060 = vpop.f32.mrb[0].mxu0
      %v4061 = vpop.f32.mrb[0].mxu0
      %v4062 = vadd.f32 %v3901, %v4061
      %v4063 = vpop.f32.mrb[0].mxu0
      %4064 = vmatprep.mubr.bf16.mxu0 %v3003
      %4065 = vmatmul.mubr.bf16.gmra.mrb[0].mxu0 %v3002
      %v4066 = vpop.f32.mrb[0].mxu0
      %v4067 = vadd.f32 %v3906, %v4066
      %v4068 = vpop.f32.mrb[0].mxu0
      %v4069 = vpop.f32.mrb[0].mxu0
      %v4070 = vadd.f32 %v3909, %v4069
      %v4071 = vpop.f32.mrb[0].mxu0
      %4072 = vmatprep.mubr.bf16.mxu0 %v3012
      %4073 = vmatmul.mubr.bf16.gmra.mrb[0].mxu0 %v3011
      %v4074 = vpop.f32.mrb[0].mxu0
      %v4075 = vadd.f32 %v3914, %v4074
      %v4076 = vpop.f32.mrb[0].mxu0
      %v4077 = vpop.f32.mrb[0].mxu0
      %v4078 = vadd.f32 %v3917, %v4077
      %v4079 = vpop.f32.mrb[0].mxu0
      %4080 = vmatprep.mubr.bf16.mxu0 %v3021
      %4081 = vmatmul.mubr.bf16.gmra.mrb[0].mxu0 %v3020
      %v4082 = vpop.f32.mrb[0].mxu0
      %v4083 = vadd.f32 %v3922, %v4082
      %v4084 = vpop.f32.mrb[0].mxu0
      %v4085 = vpop.f32.mrb[0].mxu0
      %v4086 = vadd.f32 %v3925, %v4085
      %v4087 = vpop.f32.mrb[0].mxu0
      %4088 = vmatprep.mubr.bf16.mxu0 %v3030
      %4089 = vmatmul.mubr.bf16.gmra.mrb[0].mxu0 %v3029
      %v4090 = vpop.f32.mrb[0].mxu0
      %v4091 = vadd.f32 %v3930, %v4090
      %v4092 = vpop.f32.mrb[0].mxu0
      %v4093 = vpop.f32.mrb[0].mxu0
      %v4094 = vadd.f32 %v3933, %v4093
      %v4095 = vpop.f32.mrb[0].mxu0
      %4096 = vmatprep.mubr.bf16.mxu0 %v3039
      %4097 = vmatmul.mubr.bf16.gmra.mrb[0].mxu0 %v3038
      %v4098 = vpop.f32.mrb[0].mxu0
      %v4099 = vadd.f32 %v3938, %v4098
      %v4100 = vpop.f32.mrb[0].mxu0
      %v4101 = vpop.f32.mrb[0].mxu0
      %v4102 = vadd.f32 %v3941, %v4101
      %v4103 = vpop.f32.mrb[0].mxu0
      %4104 = vmatprep.mubr.bf16.mxu0 %v3048
      %4105 = vmatmul.mubr.bf16.gmra.mrb[0].mxu0 %v3047
      %v4106 = vpop.f32.mrb[0].mxu0
      %v4107 = vadd.f32 %v3946, %v4106
      %v4108 = vpop.f32.mrb[0].mxu0
      %v4109 = vpop.f32.mrb[0].mxu0
      %v4110 = vadd.f32 %v3949, %v4109
      %v4111 = vpop.f32.mrb[0].mxu0
      %4112 = vmatprep.mubr.bf16.mxu0 %v3057
      %4113 = vmatmul.mubr.bf16.gmra.mrb[0].mxu0 %v3056
      %v4114 = vpop.f32.mrb[0].mxu0
      %v4115 = vadd.f32 %v3954, %v4114
      %v4116 = vpop.f32.mrb[0].mxu0
      %v4117 = vpop.f32.mrb[0].mxu0
      %v4118 = vadd.f32 %v3957, %v4117
      %v4119 = vpop.f32.mrb[0].mxu0
      %4120 = vmatprep.mubr.bf16.mxu0 %v3066
      %4121 = vmatmul.mubr.bf16.gmra.mrb[0].mxu0 %v3065
      %v4122 = vpop.f32.mrb[0].mxu0
      %v4123 = vadd.f32 %v3962, %v4122
      %v4124 = vpop.f32.mrb[0].mxu0
      %v4125 = vpop.f32.mrb[0].mxu0
      %v4126 = vadd.f32 %v3965, %v4125
      %v4127 = vpop.f32.mrb[0].mxu0
      %4128 = vdwg.mxu0
      %4129 = vmatprep.subr.bf16.mxu0 0
      %4130 = vmatpush1.bf16.msra.mxu0 %v3550
      %4131 = vmatprep.subr.bf16.mxu0 0
      %4132 = vmatpush1.bf16.msra.mxu0 %v3551
      %4133 = vmatprep.subr.bf16.mxu0 0
      %4134 = vmatpush1.bf16.msra.mxu0 %v3552
      %4135 = vmatprep.subr.bf16.mxu0 0
      %4136 = vmatpush1.bf16.msra.mxu0 %v3553
      %4137 = vmatprep.subr.bf16.mxu0 0
      %4138 = vmatpush1.bf16.msra.mxu0 %v3554
      %4139 = vmatprep.subr.bf16.mxu0 0
      %4140 = vmatpush1.bf16.msra.mxu0 %v3555
      %4141 = vmatprep.subr.bf16.mxu0 0
      %4142 = vmatpush1.bf16.msra.mxu0 %v3556
      %4143 = vmatprep.subr.bf16.mxu0 0
      %4144 = vmatpush1.bf16.msra.mxu0 %v3557
      %4145 = vmatprep.subr.bf16.mxu0 0
      %4146 = vmatpush1.bf16.msra.mxu0 %v3558
      %4147 = vmatprep.subr.bf16.mxu0 0
      %4148 = vmatpush1.bf16.msra.mxu0 %v3559
      %4149 = vmatprep.subr.bf16.mxu0 0
      %4150 = vmatpush1.bf16.msra.mxu0 %v3560
      %4151 = vmatprep.subr.bf16.mxu0 0
      %4152 = vmatpush1.bf16.msra.mxu0 %v3561
      %4153 = vmatprep.subr.bf16.mxu0 0
      %4154 = vmatpush1.bf16.msra.mxu0 %v3562
      %4155 = vmatprep.subr.bf16.mxu0 0
      %4156 = vmatpush1.bf16.msra.mxu0 %v3563
      %4157 = vmatprep.subr.bf16.mxu0 0
      %4158 = vmatpush1.bf16.msra.mxu0 %v3564
      %4159 = vmatprep.subr.bf16.mxu0 0
      %4160 = vmatpush1.bf16.msra.mxu0 %v3565
      %4161 = vmatprep.mubr.bf16.mxu0 %v2933
      %4162 = vmatmul.mubr.bf16.gmra.mrb[0].mxu0 %v2932
      %v4163 = vpop.f32.mrb[0].mxu0
      %v4164 = vadd.f32 %v4003, %v4163
      %v4165 = vpop.f32.mrb[0].mxu0
      %v4166 = vpop.f32.mrb[0].mxu0
      %v4167 = vadd.f32 %v4006, %v4166
      %v4168 = vpop.f32.mrb[0].mxu0
      %4169 = vmatprep.mubr.bf16.mxu0 %v2942
      %4170 = vmatmul.mubr.bf16.gmra.mrb[0].mxu0 %v2941
      %v4171 = vpop.f32.mrb[0].mxu0
      %v4172 = vadd.f32 %v4011, %v4171
      %v4173 = vpop.f32.mrb[0].mxu0
      %v4174 = vpop.f32.mrb[0].mxu0
      %v4175 = vadd.f32 %v4014, %v4174
      %v4176 = vpop.f32.mrb[0].mxu0
      %4177 = vmatprep.mubr.bf16.mxu0 %v2951
      %4178 = vmatmul.mubr.bf16.gmra.mrb[0].mxu0 %v2950
      %v4179 = vpop.f32.mrb[0].mxu0
      %v4180 = vadd.f32 %v4019, %v4179
      %v4181 = vpop.f32.mrb[0].mxu0
      %v4182 = vpop.f32.mrb[0].mxu0
      %v4183 = vadd.f32 %v4022, %v4182
      %v4184 = vpop.f32.mrb[0].mxu0
      %4185 = vmatprep.mubr.bf16.mxu0 %v2960
      %4186 = vmatmul.mubr.bf16.gmra.mrb[0].mxu0 %v2959
      %v4187 = vpop.f32.mrb[0].mxu0
      %v4188 = vadd.f32 %v4027, %v4187
      %v4189 = vpop.f32.mrb[0].mxu0
      %v4190 = vpop.f32.mrb[0].mxu0
      %v4191 = vadd.f32 %v4030, %v4190
      %v4192 = vpop.f32.mrb[0].mxu0
      %4193 = vmatprep.mubr.bf16.mxu0 %v2969
      %4194 = vmatmul.mubr.bf16.gmra.mrb[0].mxu0 %v2968
      %v4195 = vpop.f32.mrb[0].mxu0
      %v4196 = vadd.f32 %v4035, %v4195
      %v4197 = vpop.f32.mrb[0].mxu0
      %v4198 = vpop.f32.mrb[0].mxu0
      %v4199 = vadd.f32 %v4038, %v4198
      %v4200 = vpop.f32.mrb[0].mxu0
      %4201 = vmatprep.mubr.bf16.mxu0 %v2978
      %4202 = vmatmul.mubr.bf16.gmra.mrb[0].mxu0 %v2977
      %v4203 = vpop.f32.mrb[0].mxu0
      %v4204 = vadd.f32 %v4043, %v4203
      %v4205 = vpop.f32.mrb[0].mxu0
      %v4206 = vpop.f32.mrb[0].mxu0
      %v4207 = vadd.f32 %v4046, %v4206
      %v4208 = vpop.f32.mrb[0].mxu0
      %4209 = vmatprep.mubr.bf16.mxu0 %v2987
      %4210 = vmatmul.mubr.bf16.gmra.mrb[0].mxu0 %v2986
      %v4211 = vpop.f32.mrb[0].mxu0
      %v4212 = vadd.f32 %v4051, %v4211
      %v4213 = vpop.f32.mrb[0].mxu0
      %v4214 = vpop.f32.mrb[0].mxu0
      %v4215 = vadd.f32 %v4054, %v4214
      %v4216 = vpop.f32.mrb[0].mxu0
      %4217 = vmatprep.mubr.bf16.mxu0 %v2996
      %4218 = vmatmul.mubr.bf16.gmra.mrb[0].mxu0 %v2995
      %v4219 = vpop.f32.mrb[0].mxu0
      %v4220 = vadd.f32 %v4059, %v4219
      %v4221 = vpop.f32.mrb[0].mxu0
      %v4222 = vpop.f32.mrb[0].mxu0
      %v4223 = vadd.f32 %v4062, %v4222
      %v4224 = vpop.f32.mrb[0].mxu0
      %4225 = vmatprep.mubr.bf16.mxu0 %v3005
      %4226 = vmatmul.mubr.bf16.gmra.mrb[0].mxu0 %v3004
      %v4227 = vpop.f32.mrb[0].mxu0
      %v4228 = vadd.f32 %v4067, %v4227
      %v4229 = vpop.f32.mrb[0].mxu0
      %v4230 = vpop.f32.mrb[0].mxu0
      %v4231 = vadd.f32 %v4070, %v4230
      %v4232 = vpop.f32.mrb[0].mxu0
      %4233 = vmatprep.mubr.bf16.mxu0 %v3014
      %4234 = vmatmul.mubr.bf16.gmra.mrb[0].mxu0 %v3013
      %v4235 = vpop.f32.mrb[0].mxu0
      %v4236 = vadd.f32 %v4075, %v4235
      %v4237 = vpop.f32.mrb[0].mxu0
      %v4238 = vpop.f32.mrb[0].mxu0
      %v4239 = vadd.f32 %v4078, %v4238
      %v4240 = vpop.f32.mrb[0].mxu0
      %4241 = vmatprep.mubr.bf16.mxu0 %v3023
      %4242 = vmatmul.mubr.bf16.gmra.mrb[0].mxu0 %v3022
      %v4243 = vpop.f32.mrb[0].mxu0
      %v4244 = vadd.f32 %v4083, %v4243
      %v4245 = vpop.f32.mrb[0].mxu0
      %v4246 = vpop.f32.mrb[0].mxu0
      %v4247 = vadd.f32 %v4086, %v4246
      %v4248 = vpop.f32.mrb[0].mxu0
      %4249 = vmatprep.mubr.bf16.mxu0 %v3032
      %4250 = vmatmul.mubr.bf16.gmra.mrb[0].mxu0 %v3031
      %v4251 = vpop.f32.mrb[0].mxu0
      %v4252 = vadd.f32 %v4091, %v4251
      %v4253 = vpop.f32.mrb[0].mxu0
      %v4254 = vpop.f32.mrb[0].mxu0
      %v4255 = vadd.f32 %v4094, %v4254
      %v4256 = vpop.f32.mrb[0].mxu0
      %4257 = vmatprep.mubr.bf16.mxu0 %v3041
      %4258 = vmatmul.mubr.bf16.gmra.mrb[0].mxu0 %v3040
      %v4259 = vpop.f32.mrb[0].mxu0
      %v4260 = vadd.f32 %v4099, %v4259
      %v4261 = vpop.f32.mrb[0].mxu0
      %v4262 = vpop.f32.mrb[0].mxu0
      %v4263 = vadd.f32 %v4102, %v4262
      %v4264 = vpop.f32.mrb[0].mxu0
      %4265 = vmatprep.mubr.bf16.mxu0 %v3050
      %4266 = vmatmul.mubr.bf16.gmra.mrb[0].mxu0 %v3049
      %v4267 = vpop.f32.mrb[0].mxu0
      %v4268 = vadd.f32 %v4107, %v4267
      %v4269 = vpop.f32.mrb[0].mxu0
      %v4270 = vpop.f32.mrb[0].mxu0
      %v4271 = vadd.f32 %v4110, %v4270
      %v4272 = vpop.f32.mrb[0].mxu0
      %4273 = vmatprep.mubr.bf16.mxu0 %v3059
      %4274 = vmatmul.mubr.bf16.gmra.mrb[0].mxu0 %v3058
      %v4275 = vpop.f32.mrb[0].mxu0
      %v4276 = vadd.f32 %v4115, %v4275
      %v4277 = vpop.f32.mrb[0].mxu0
      %v4278 = vpop.f32.mrb[0].mxu0
      %v4279 = vadd.f32 %v4118, %v4278
      %v4280 = vpop.f32.mrb[0].mxu0
      %4281 = vmatprep.mubr.bf16.mxu0 %v3068
      %4282 = vmatmul.mubr.bf16.gmra.mrb[0].mxu0 %v3067
      %v4283 = vpop.f32.mrb[0].mxu0
      %v4284 = vadd.f32 %v4123, %v4283
      %v4285 = vpop.f32.mrb[0].mxu0
      %v4286 = vpop.f32.mrb[0].mxu0
      %v4287 = vadd.f32 %v4126, %v4286
      %v4288 = vpop.f32.mrb[0].mxu0
      %4289 = vdwg.mxu0
      %4290 = vmatprep.subr.bf16.mxu0 0
      %4291 = vmatpush1.bf16.msra.mxu0 %v3566
      %4292 = vmatprep.subr.bf16.mxu0 0
      %4293 = vmatpush1.bf16.msra.mxu0 %v3567
      %4294 = vmatprep.subr.bf16.mxu0 0
      %4295 = vmatpush1.bf16.msra.mxu0 %v3568
      %4296 = vmatprep.subr.bf16.mxu0 0
      %4297 = vmatpush1.bf16.msra.mxu0 %v3569
      %4298 = vmatprep.subr.bf16.mxu0 0
      %4299 = vmatpush1.bf16.msra.mxu0 %v3570
      %4300 = vmatprep.subr.bf16.mxu0 0
      %4301 = vmatpush1.bf16.msra.mxu0 %v3571
      %4302 = vmatprep.subr.bf16.mxu0 0
      %4303 = vmatpush1.bf16.msra.mxu0 %v3572
      %4304 = vmatprep.subr.bf16.mxu0 0
      %4305 = vmatpush1.bf16.msra.mxu0 %v3573
      %4306 = vmatprep.subr.bf16.mxu0 0
      %4307 = vmatpush1.bf16.msra.mxu0 0
      %4308 = vmatprep.subr.bf16.mxu0 0
      %4309 = vmatpush1.bf16.msra.mxu0 0
      %4310 = vmatprep.subr.bf16.mxu0 0
      %4311 = vmatpush1.bf16.msra.mxu0 0
      %4312 = vmatprep.subr.bf16.mxu0 0
      %4313 = vmatpush1.bf16.msra.mxu0 0
      %4314 = vmatprep.subr.bf16.mxu0 0
      %4315 = vmatpush1.bf16.msra.mxu0 0
      %4316 = vmatprep.subr.bf16.mxu0 0
      %4317 = vmatpush1.bf16.msra.mxu0 0
      %4318 = vmatprep.subr.bf16.mxu0 0
      %4319 = vmatpush1.bf16.msra.mxu0 0
      %4320 = vmatprep.subr.bf16.mxu0 0
      %4321 = vmatpush1.bf16.msra.mxu0 0
      %4322 = vmatprep.mubr.bf16.mxu0 0
      %4323 = vmatmul.mubr.bf16.gmra.mrb[0].mxu0 %v2934
      %v4324 = vpop.f32.mrb[0].mxu0
      %v4325 = vadd.f32 %v4164, %v4324
      %v4326 = vpop.f32.mrb[0].mxu0
      %v4327 = vpop.f32.mrb[0].mxu0
      %v4328 = vadd.f32 %v4167, %v4327
      %v4329 = vpop.f32.mrb[0].mxu0
      %4330 = vmatprep.mubr.bf16.mxu0 0
      %4331 = vmatmul.mubr.bf16.gmra.mrb[0].mxu0 %v2943
      %v4332 = vpop.f32.mrb[0].mxu0
      %v4333 = vadd.f32 %v4172, %v4332
      %v4334 = vpop.f32.mrb[0].mxu0
      %v4335 = vpop.f32.mrb[0].mxu0
      %v4336 = vadd.f32 %v4175, %v4335
      %v4337 = vpop.f32.mrb[0].mxu0
      %4338 = vmatprep.mubr.bf16.mxu0 0
      %4339 = vmatmul.mubr.bf16.gmra.mrb[0].mxu0 %v2952
      %v4340 = vpop.f32.mrb[0].mxu0
      %v4341 = vadd.f32 %v4180, %v4340
      %v4342 = vpop.f32.mrb[0].mxu0
      %v4343 = vpop.f32.mrb[0].mxu0
      %v4344 = vadd.f32 %v4183, %v4343
      %v4345 = vpop.f32.mrb[0].mxu0
      %4346 = vmatprep.mubr.bf16.mxu0 0
      %4347 = vmatmul.mubr.bf16.gmra.mrb[0].mxu0 %v2961
      %v4348 = vpop.f32.mrb[0].mxu0
      %v4349 = vadd.f32 %v4188, %v4348
      %v4350 = vpop.f32.mrb[0].mxu0
      %v4351 = vpop.f32.mrb[0].mxu0
      %v4352 = vadd.f32 %v4191, %v4351
      %v4353 = vpop.f32.mrb[0].mxu0
      %4354 = vmatprep.mubr.bf16.mxu0 0
      %4355 = vmatmul.mubr.bf16.gmra.mrb[0].mxu0 %v2970
      %v4356 = vpop.f32.mrb[0].mxu0
      %v4357 = vadd.f32 %v4196, %v4356
      %v4358 = vpop.f32.mrb[0].mxu0
      %v4359 = vpop.f32.mrb[0].mxu0
      %v4360 = vadd.f32 %v4199, %v4359
      %v4361 = vpop.f32.mrb[0].mxu0
      %4362 = vmatprep.mubr.bf16.mxu0 0
      %4363 = vmatmul.mubr.bf16.gmra.mrb[0].mxu0 %v2979
      %v4364 = vpop.f32.mrb[0].mxu0
      %v4365 = vadd.f32 %v4204, %v4364
      %v4366 = vpop.f32.mrb[0].mxu0
      %v4367 = vpop.f32.mrb[0].mxu0
      %v4368 = vadd.f32 %v4207, %v4367
      %v4369 = vpop.f32.mrb[0].mxu0
      %4370 = vmatprep.mubr.bf16.mxu0 0
      %4371 = vmatmul.mubr.bf16.gmra.mrb[0].mxu0 %v2988
      %v4372 = vpop.f32.mrb[0].mxu0
      %v4373 = vadd.f32 %v4212, %v4372
      %v4374 = vpop.f32.mrb[0].mxu0
      %v4375 = vpop.f32.mrb[0].mxu0
      %v4376 = vadd.f32 %v4215, %v4375
      %v4377 = vpop.f32.mrb[0].mxu0
      %4378 = vmatprep.mubr.bf16.mxu0 0
      %4379 = vmatmul.mubr.bf16.gmra.mrb[0].mxu0 %v2997
      %v4380 = vpop.f32.mrb[0].mxu0
      %v4381 = vadd.f32 %v4220, %v4380
      %v4382 = vpop.f32.mrb[0].mxu0
      %v4383 = vpop.f32.mrb[0].mxu0
      %v4384 = vadd.f32 %v4223, %v4383
      %v4385 = vpop.f32.mrb[0].mxu0
      %4386 = vmatprep.mubr.bf16.mxu0 0
      %4387 = vmatmul.mubr.bf16.gmra.mrb[0].mxu0 %v3006
      %v4388 = vpop.f32.mrb[0].mxu0
      %v4389 = vadd.f32 %v4228, %v4388
      %v4390 = vpop.f32.mrb[0].mxu0
      %v4391 = vpop.f32.mrb[0].mxu0
      %v4392 = vadd.f32 %v4231, %v4391
      %v4393 = vpop.f32.mrb[0].mxu0
      %4394 = vmatprep.mubr.bf16.mxu0 0
      %4395 = vmatmul.mubr.bf16.gmra.mrb[0].mxu0 %v3015
      %v4396 = vpop.f32.mrb[0].mxu0
      %v4397 = vadd.f32 %v4236, %v4396
      %v4398 = vpop.f32.mrb[0].mxu0
      %v4399 = vpop.f32.mrb[0].mxu0
      %v4400 = vadd.f32 %v4239, %v4399
      %v4401 = vpop.f32.mrb[0].mxu0
      %4402 = vmatprep.mubr.bf16.mxu0 0
      %4403 = vmatmul.mubr.bf16.gmra.mrb[0].mxu0 %v3024
      %v4404 = vpop.f32.mrb[0].mxu0
      %v4405 = vadd.f32 %v4244, %v4404
      %v4406 = vpop.f32.mrb[0].mxu0
      %v4407 = vpop.f32.mrb[0].mxu0
      %v4408 = vadd.f32 %v4247, %v4407
      %v4409 = vpop.f32.mrb[0].mxu0
      %4410 = vmatprep.mubr.bf16.mxu0 0
      %4411 = vmatmul.mubr.bf16.gmra.mrb[0].mxu0 %v3033
      %v4412 = vpop.f32.mrb[0].mxu0
      %v4413 = vadd.f32 %v4252, %v4412
      %v4414 = vpop.f32.mrb[0].mxu0
      %v4415 = vpop.f32.mrb[0].mxu0
      %v4416 = vadd.f32 %v4255, %v4415
      %v4417 = vpop.f32.mrb[0].mxu0
      %4418 = vmatprep.mubr.bf16.mxu0 0
      %4419 = vmatmul.mubr.bf16.gmra.mrb[0].mxu0 %v3042
      %v4420 = vpop.f32.mrb[0].mxu0
      %v4421 = vadd.f32 %v4260, %v4420
      %v4422 = vpop.f32.mrb[0].mxu0
      %v4423 = vpop.f32.mrb[0].mxu0
      %v4424 = vadd.f32 %v4263, %v4423
      %v4425 = vpop.f32.mrb[0].mxu0
      %4426 = vmatprep.mubr.bf16.mxu0 0
      %4427 = vmatmul.mubr.bf16.gmra.mrb[0].mxu0 %v3051
      %v4428 = vpop.f32.mrb[0].mxu0
      %v4429 = vadd.f32 %v4268, %v4428
      %v4430 = vpop.f32.mrb[0].mxu0
      %v4431 = vpop.f32.mrb[0].mxu0
      %v4432 = vadd.f32 %v4271, %v4431
      %v4433 = vpop.f32.mrb[0].mxu0
      %4434 = vmatprep.mubr.bf16.mxu0 0
      %4435 = vmatmul.mubr.bf16.gmra.mrb[0].mxu0 %v3060
      %v4436 = vpop.f32.mrb[0].mxu0
      %v4437 = vadd.f32 %v4276, %v4436
      %v4438 = vpop.f32.mrb[0].mxu0
      %v4439 = vpop.f32.mrb[0].mxu0
      %v4440 = vadd.f32 %v4279, %v4439
      %v4441 = vpop.f32.mrb[0].mxu0
      %4442 = vmatprep.mubr.bf16.mxu0 0
      %4443 = vmatmul.mubr.bf16.gmra.mrb[0].mxu0 %v3069
      %v4444 = vpop.f32.mrb[0].mxu0
      %v4445 = vadd.f32 %v4284, %v4444
      %v4446 = vpop.f32.mrb[0].mxu0
      %v4447 = vpop.f32.mrb[0].mxu0
      %v4448 = vadd.f32 %v4287, %v4447
      %v4449 = vpop.f32.mrb[0].mxu0
      %4450 = vdwg.mxu0
      %4451 = vst [vmem:[%s208] sm:$0xff] %v4325
      %4452 = vst [vmem:[%s208 + $0x8] sm:$0xff] %v4328
      %4453 = vst [vmem:[%s208 + $0x10] sm:$0xff] %v4333
      %4454 = vst [vmem:[%s208 + $0x18] sm:$0xff] %v4336
      %4455 = vst [vmem:[%s208 + $0x20] sm:$0xff] %v4341
      %4456 = vst [vmem:[%s208 + $0x28] sm:$0xff] %v4344
      %4457 = vst [vmem:[%s208 + $0x30] sm:$0xff] %v4349
      %4458 = vst [vmem:[%s208 + $0x38] sm:$0xff] %v4352
      %4459 = vst [vmem:[%s208 + $0x40] sm:$0xff] %v4357
      %4460 = vst [vmem:[%s208 + $0x48] sm:$0xff] %v4360
      %4461 = vst [vmem:[%s208 + $0x50] sm:$0xff] %v4365
      %4462 = vst [vmem:[%s208 + $0x58] sm:$0xff] %v4368
      %4463 = vst [vmem:[%s208 + $0x60] sm:$0xff] %v4373
      %4464 = vst [vmem:[%s208 + $0x68] sm:$0xff] %v4376
      %4465 = vst [vmem:[%s208 + $0x70] sm:$0xff] %v4381
      %4466 = vst [vmem:[%s208 + $0x78] sm:$0xff] %v4384
      %4467 = vst [vmem:[%s208 + $0x80] sm:$0xff] %v4389
      %4468 = vst [vmem:[%s208 + $0x88] sm:$0xff] %v4392
      %4469 = vst [vmem:[%s208 + $0x90] sm:$0xff] %v4397
      %4470 = vst [vmem:[%s208 + $0x98] sm:$0xff] %v4400
      %4471 = vst [vmem:[%s208 + $0xa0] sm:$0xff] %v4405
      %4472 = vst [vmem:[%s208 + $0xa8] sm:$0xff] %v4408
      %4473 = vst [vmem:[%s208 + $0xb0] sm:$0xff] %v4413
      %4474 = vst [vmem:[%s208 + $0xb8] sm:$0xff] %v4416
      %4475 = vst [vmem:[%s208 + $0xc0] sm:$0xff] %v4421
      %4476 = vst [vmem:[%s208 + $0xc8] sm:$0xff] %v4424
      %4477 = vst [vmem:[%s208 + $0xd0] sm:$0xff] %v4429
      %4478 = vst [vmem:[%s208 + $0xd8] sm:$0xff] %v4432
      %4479 = vst [vmem:[%s208 + $0xe0] sm:$0xff] %v4437
      %4480 = vst [vmem:[%s208 + $0xe8] sm:$0xff] %v4440
      %4481 = vst [vmem:[%s208 + $0xf0] sm:$0xff] %v4445
      %4482 = vst [vmem:[%s208 + $0xf8] sm:$0xff] %v4448
      %v4483 = vadd.f32 %v4325, %v4328
      %v4484 = vadd.f32 %v4483, %v4333
      %v4485 = vadd.f32 %v4484, %v4336
      %v4486 = vadd.f32 %v4485, %v4341
      %v4487 = vadd.f32 %v4486, %v4344
      %v4488 = vadd.f32 %v4487, %v4349
      %v4489 = vadd.f32 %v4488, %v4352
      %v4490 = vadd.f32 %v4489, %v4357
      %v4491 = vadd.f32 %v4490, %v4360
      %v4492 = vadd.f32 %v4491, %v4365
      %v4493 = vadd.f32 %v4492, %v4368
      %v4494 = vadd.f32 %v4493, %v4373
      %v4495 = vadd.f32 %v4494, %v4376
      %v4496 = vadd.f32 %v4495, %v4381
      %v4497 = vadd.f32 %v4496, %v4384
      %v4498 = vadd.f32 %v4497, %v4389
      %v4499 = vadd.f32 %v4498, %v4392
      %v4500 = vadd.f32 %v4499, %v4397
      %v4501 = vadd.f32 %v4500, %v4400
      %v4502 = vadd.f32 %v4501, %v4405
      %v4503 = vadd.f32 %v4502, %v4408
      %v4504 = vadd.f32 %v4503, %v4413
      %v4505 = vadd.f32 %v4504, %v4416
      %v4506 = vadd.f32 %v4505, %v4421
      %v4507 = vadd.f32 %v4506, %v4424
      %v4508 = vadd.f32 %v4507, %v4429
      %v4509 = vadd.f32 %v4508, %v4432
      %v4510 = vadd.f32 %v4509, %v4437
      %v4511 = vadd.f32 %v4510, %v4440
      %v4512 = vadd.f32 %v4511, %v4445
      %v4513 = vadd.f32 %v4512, %v4448
      %v4514 = vrot.slane %v4513, 4
      %v4515 = vadd.f32 %v4513, %v4514
      %v4516 = vrot.slane %v4515, 2
      %v4517 = vadd.f32 %v4515, %v4516
      %v4518 = vrot.slane %v4517, 1
      %v4519 = vadd.f32 %v4517, %v4518
      %4520 = vst [vmem:[%s211] sm:$0x1] %v4519
      %v4521 = vmul.f32 %v4325, %v4325
      %v4522 = vmul.f32 %v4328, %v4328
      %v4523 = vmul.f32 %v4333, %v4333
      %v4524 = vmul.f32 %v4336, %v4336
      %v4525 = vmul.f32 %v4341, %v4341
      %v4526 = vmul.f32 %v4344, %v4344
      %v4527 = vmul.f32 %v4349, %v4349
      %v4528 = vmul.f32 %v4352, %v4352
      %v4529 = vmul.f32 %v4357, %v4357
      %v4530 = vmul.f32 %v4360, %v4360
      %v4531 = vmul.f32 %v4365, %v4365
      %v4532 = vmul.f32 %v4368, %v4368
      %v4533 = vmul.f32 %v4373, %v4373
      %v4534 = vmul.f32 %v4376, %v4376
      %v4535 = vmul.f32 %v4381, %v4381
      %v4536 = vmul.f32 %v4384, %v4384
      %v4537 = vmul.f32 %v4389, %v4389
      %v4538 = vmul.f32 %v4392, %v4392
      %v4539 = vmul.f32 %v4397, %v4397
      %v4540 = vmul.f32 %v4400, %v4400
      %v4541 = vmul.f32 %v4405, %v4405
      %v4542 = vmul.f32 %v4408, %v4408
      %v4543 = vmul.f32 %v4413, %v4413
      %v4544 = vmul.f32 %v4416, %v4416
      %v4545 = vmul.f32 %v4421, %v4421
      %v4546 = vmul.f32 %v4424, %v4424
      %v4547 = vmul.f32 %v4429, %v4429
      %v4548 = vmul.f32 %v4432, %v4432
      %v4549 = vmul.f32 %v4437, %v4437
      %v4550 = vmul.f32 %v4440, %v4440
      %v4551 = vmul.f32 %v4445, %v4445
      %v4552 = vmul.f32 %v4448, %v4448
      %v4553 = vadd.f32 %v4521, %v4522
      %v4554 = vadd.f32 %v4553, %v4523
      %v4555 = vadd.f32 %v4554, %v4524
      %v4556 = vadd.f32 %v4555, %v4525
      %v4557 = vadd.f32 %v4556, %v4526
      %v4558 = vadd.f32 %v4557, %v4527
      %v4559 = vadd.f32 %v4558, %v4528
      %v4560 = vadd.f32 %v4559, %v4529
      %v4561 = vadd.f32 %v4560, %v4530
      %v4562 = vadd.f32 %v4561, %v4531
      %v4563 = vadd.f32 %v4562, %v4532
      %v4564 = vadd.f32 %v4563, %v4533
      %v4565 = vadd.f32 %v4564, %v4534
      %v4566 = vadd.f32 %v4565, %v4535
      %v4567 = vadd.f32 %v4566, %v4536
      %v4568 = vadd.f32 %v4567, %v4537
      %v4569 = vadd.f32 %v4568, %v4538
      %v4570 = vadd.f32 %v4569, %v4539
      %v4571 = vadd.f32 %v4570, %v4540
      %v4572 = vadd.f32 %v4571, %v4541
      %v4573 = vadd.f32 %v4572, %v4542
      %v4574 = vadd.f32 %v4573, %v4543
      %v4575 = vadd.f32 %v4574, %v4544
      %v4576 = vadd.f32 %v4575, %v4545
      %v4577 = vadd.f32 %v4576, %v4546
      %v4578 = vadd.f32 %v4577, %v4547
      %v4579 = vadd.f32 %v4578, %v4548
      %v4580 = vadd.f32 %v4579, %v4549
      %v4581 = vadd.f32 %v4580, %v4550
      %v4582 = vadd.f32 %v4581, %v4551
      %v4583 = vadd.f32 %v4582, %v4552
      %v4584 = vrot.slane %v4583, 4
      %v4585 = vadd.f32 %v4583, %v4584
      %v4586 = vrot.slane %v4585, 2
      %v4587 = vadd.f32 %v4585, %v4586
      %v4588 = vrot.slane %v4587, 1
      %v4589 = vadd.f32 %v4587, %v4588
      %4590 = vst [vmem:[%s214] sm:$0x1] %v4589
      %p4591 = scmp.lt.s32.totalorder %s16, 1
      %s4592 = scalar_select %p4591, %s16, 1
      %s4593 = smul.addr %s4592, 32
      %s4594 = smul.addr %s4593, 8
      %s4595 = scalar_lea.vmem %s2, %s4594
      %p4596 = scmp.lt.s32.totalorder %s16, 1
      %s4597 = scalar_select %p4596, %s16, 1
      %s4598 = scalar_lea.vmem %s3, %s4597
      %p4599 = scmp.lt.s32.totalorder %s16, 1
      %s4600 = scalar_select %p4599, %s16, 1
      %s4601 = scalar_lea.vmem %s4, %s4600
      // Predicated region
      $region29: #{block_builder_forward.4} parent=27 // pred_check
        %p4602 = pneg %p81
      $region30: #{block_builder_forward.4} parent=27 // pred_check_branch
        %4604 = sbr.rel (%p4602) target = $region32
      $region31: #{block_builder_forward.4} parent=27 // pred_region
        _
      $region32: #{block_builder_forward.4} parent=27 // pred_fallthru
        _
      // Predicated region
      $region33: #{block_builder_forward.4} parent=27 // pred_check
        %p4605 = pneg %p107
      $region34: #{block_builder_forward.4} parent=27 // pred_check_branch
        %4607 = sbr.rel (%p4605) target = $region36
      $region35: #{block_builder_forward.4} parent=27 // pred_region
        _
      $region36: #{block_builder_forward.4} parent=27 // pred_fallthru
        _
      // Predicated region
      $region37: #{block_builder_forward.4} parent=27 // pred_check
        %p4608 = pneg %p133
      $region38: #{block_builder_forward.4} parent=27 // pred_check_branch
        %4610 = sbr.rel (%p4608) target = $region40
      $region39: #{block_builder_forward.4} parent=27 // pred_region
        _
      $region40: #{block_builder_forward.4} parent=27 // pred_fallthru
        _
    $region28: #{block_builder_forward.4} parent=5 // pred_fallthru
      _
    %p4611 = scmp.le.s32.totalorder 2, %s11
    // Predicated region
    $region41: #{block_builder_forward.4} parent=5 // pred_check
      %p4612 = pneg %p4611
    $region42: #{block_builder_forward.4} parent=5 // pred_check_branch
      %4614 = sbr.rel (%p4612) target = $region44
    $region43: #{block_builder_forward.4} parent=5 // pred_region
      %s4615 = ssub.s32 %s11, 2
      // Predicated region
      $region45: #{block_builder_forward.4} parent=43 // pred_check
        %p4616 = pneg %p87
      $region46: #{block_builder_forward.4} parent=43 // pred_check_branch
        %4618 = sbr.rel (%p4616) target = $region48
      $region47: #{block_builder_forward.4} parent=43 // pred_region
        %p4619 = scmp.lt.s32.totalorder %s17, 1
        %s4620 = scalar_select %p4619, %s17, 1
        %s4621 = smul.addr %s4620, 32
        %s4622 = smul.addr %s4621, 8
        %s4623 = scalar_lea.vmem %s2, %s4622
      $region48: #{block_builder_forward.4} parent=43 // pred_fallthru
        _
      // Predicated region
      $region49: #{block_builder_forward.4} parent=43 // pred_check
        %p4624 = pneg %p113
      $region50: #{block_builder_forward.4} parent=43 // pred_check_branch
        %4626 = sbr.rel (%p4624) target = $region52
      $region51: #{block_builder_forward.4} parent=43 // pred_region
        %p4627 = scmp.lt.s32.totalorder %s17, 1
        %s4628 = scalar_select %p4627, %s17, 1
        %s4629 = scalar_lea.vmem %s3, %s4628
      $region52: #{block_builder_forward.4} parent=43 // pred_fallthru
        _
      // Predicated region
      $region53: #{block_builder_forward.4} parent=43 // pred_check
        %p4630 = pneg %p139
      $region54: #{block_builder_forward.4} parent=43 // pred_check_branch
        %4632 = sbr.rel (%p4630) target = $region56
      $region55: #{block_builder_forward.4} parent=43 // pred_region
        %p4633 = scmp.lt.s32.totalorder %s17, 1
        %s4634 = scalar_select %p4633, %s17, 1
        %s4635 = scalar_lea.vmem %s4, %s4634
      $region56: #{block_builder_forward.4} parent=43 // pred_fallthru
        _
    $region44: #{block_builder_forward.4} parent=5 // pred_fallthru
      _
  $region6: #{block_builder_forward.4} parent=0 // loop_footer
    %s15 = sadd.s32 1, %s11
  $region7: #{block_builder_forward.4} parent=0 // loop_footer_branch
    %10 = sbr.rel target = $region3
  $region8: #{block_builder_forward.4} parent=0 // loop_exit
    _

</llo_original>
